<compile_context>
chip_gen: v7x
topology: tpu7x:2x2x1
jax: 0.10.0
libtpu: 0.0.40
codegen_flags: <defaults>
</compile_context>

<pallas_src>
import jax
import jax.numpy as jnp
from jax import lax
from jax.experimental import pallas as pl
from jax.experimental.pallas import tpu as pltpu


def lstm_fc_kernel(x_ref,        # (T*Bb, I)   bf16, time-major per-block input
                   wih0_ref,     # (I, 4H)     bf16, layer-0 input weights (transposed)
                   whh0_ref,     # (H, 4H)     bf16, layer-0 recurrent weights (transposed)
                   b0_ref,       # (1, 4H)     f32,  layer-0 combined bias (b_ih + b_hh)
                   wih1_ref,     # (H, 4H)     bf16, layer-1 input weights (transposed)
                   whh1_ref,     # (H, 4H)     bf16, layer-1 recurrent weights (transposed)
                   b1_ref,       # (1, 4H)     f32,  layer-1 combined bias
                   fcw_ref,      # (H, Cpad)   bf16, fc weight (transposed, lane-padded)
                   fcb_ref,      # (1, Cpad)   f32,  fc bias (lane-padded)
                   out_ref,      # (Bb, Cpad)  f32,  padded logits
                   gates0_ref):  # scratch (T*Bb, 4H) f32, hoisted layer-0 input gates
    H = whh0_ref.shape[0]
    Bb = out_ref.shape[0]
    T = x_ref.shape[0] // Bb

    # ---- hoisted layer-0 input projection (off the serial path), bias folded in ----
    gates0_ref[...] = (jnp.dot(x_ref[...], wih0_ref[...],
                               preferred_element_type=jnp.float32)
                       + b0_ref[...])

    # hoist the (1,4H) -> (Bb,4H) bias broadcast out of the unrolled loop
    b1b = jnp.broadcast_to(b1_ref[...], (Bb, 4 * H))

    def activations(g):
        # lane-aligned 128-wide slices (H is a multiple of 128): zero-cost views
        i = jax.nn.sigmoid(g[:, 0 * H:1 * H])
        f = jax.nn.sigmoid(g[:, 1 * H:2 * H])
        gg = jnp.tanh(g[:, 2 * H:3 * H])
        o = jax.nn.sigmoid(g[:, 3 * H:4 * H])
        return i, f, gg, o

    def step(t, carry):
        h0, c0, h1, c1 = carry
        # ----- layer 0: only the recurrent matmul is on the serial path -----
        row = pl.multiple_of(t * Bb, Bb)                  # sublane-aligned start
        g0 = (gates0_ref[pl.ds(row, Bb), :]
              + jnp.dot(h0.astype(jnp.bfloat16), whh0_ref[...],
                        preferred_element_type=jnp.float32))
        i0, f0, gg0, o0 = activations(g0)
        c0 = f0 * c0 + i0 * gg0
        h0 = o0 * jnp.tanh(c0)
        # eval-mode inter-layer dropout == identity
        # ----- layer 1: two dots (no concat); MRB accumulates in place on v7x -----
        g1 = (jnp.dot(h0.astype(jnp.bfloat16), wih1_ref[...],
                      preferred_element_type=jnp.float32)
              + jnp.dot(h1.astype(jnp.bfloat16), whh1_ref[...],
                        preferred_element_type=jnp.float32)
              + b1b)
        i1, f1, gg1, o1 = activations(g1)
        c1 = f1 * c1 + i1 * gg1
        h1 = o1 * jnp.tanh(c1)
        return (h0, c0, h1, c1)

    zeros = jnp.zeros((Bb, H), jnp.float32)
    h0, c0, h1, c1 = lax.fori_loop(0, T, step, (zeros, zeros, zeros, zeros),
                                   unroll=True)

    # hidden[-1] (final hidden state of layer 1) -> fc; lane-dense padded store
    out_ref[...] = (jnp.dot(h1.astype(jnp.bfloat16), fcw_ref[...],
                            preferred_element_type=jnp.float32)
                    + fcb_ref[...])


def default_num_batch_blocks():
    """2 only on v7x (2 TensorCores/chip). On single-TC v5e/v6e the 1-D grid is a
    sequential loop, so splitting the batch just runs the recurrence twice."""
    try:
        kind = jax.devices()[0].device_kind.lower()
    except Exception:
        return 1
    return 2 if ("v7" in kind or "tpu7" in kind) else 1


def pose_classifier_forward(x_btI, kp, *, num_batch_blocks=None):
    """x_btI: (B, T, I) batch-first like the PyTorch module. Returns (B, C) f32 logits."""
    B, T, I = x_btI.shape
    H = kp["whh0"].shape[0]
    Cpad = kp["fc_w"].shape[1]
    C = kp["num_classes"]
    assert H % 128 == 0, "gate slices must be lane-aligned (hidden_size % 128 == 0)"

    if num_batch_blocks is None:
        num_batch_blocks = default_num_batch_blocks()
    if B % num_batch_blocks != 0 or (B // num_batch_blocks) % 8 != 0:
        num_batch_blocks = 1
    nb = num_batch_blocks
    Bb = B // nb

    # layout plumbing in XLA (cheap): time-major, batch split into contiguous
    # (T*Bb, I) slabs per grid block so the kernel needs no in-kernel reshapes.
    # Cast to bf16 once here so every MXU operand is single-pass.
    x_blk = (jnp.transpose(x_btI, (1, 0, 2))          # (T, B, I)
             .reshape(T, nb, Bb, I)
             .transpose(1, 0, 2, 3)
             .reshape(nb * T * Bb, I)
             .astype(jnp.bfloat16))

    out = pl.pallas_call(
        lstm_fc_kernel,
        out_shape=jax.ShapeDtypeStruct((B, Cpad), jnp.float32),
        grid=(nb,),
        in_specs=[
            pl.BlockSpec((T * Bb, I), lambda i: (i, 0)),
            pl.BlockSpec(kp["wih0"].shape, lambda i: (0, 0)),
            pl.BlockSpec(kp["whh0"].shape, lambda i: (0, 0)),
            pl.BlockSpec(kp["b0"].shape, lambda i: (0, 0)),
            pl.BlockSpec(kp["wih1"].shape, lambda i: (0, 0)),
            pl.BlockSpec(kp["whh1"].shape, lambda i: (0, 0)),
            pl.BlockSpec(kp["b1"].shape, lambda i: (0, 0)),
            pl.BlockSpec(kp["fc_w"].shape, lambda i: (0, 0)),
            pl.BlockSpec(kp["fc_b"].shape, lambda i: (0, 0)),
        ],
        out_specs=pl.BlockSpec((Bb, Cpad), lambda i: (i, 0)),
        scratch_shapes=[pltpu.VMEM((T * Bb, 4 * H), jnp.float32)],
        compiler_params=pltpu.CompilerParams(
            dimension_semantics=("parallel",)),
    )(x_blk, kp["wih0"], kp["whh0"], kp["b0"],
      kp["wih1"], kp["whh1"], kp["b1"], kp["fc_w"], kp["fc_b"])

    return out[:, :C]


def init_torch_params(key, input_size, hidden_size, num_classes):
    """PyTorch-shaped params, uniform(-1/sqrt(H), 1/sqrt(H)) like nn.LSTM/nn.Linear."""
    H = hidden_size
    bound = 1.0 / float(jnp.sqrt(jnp.float32(H)))
    ks = jax.random.split(key, 14)

    def u(k, shape):
        return jax.random.uniform(k, shape, jnp.float32, -bound, bound)

    return dict(
        weight_ih_l0=u(ks[0], (4 * H, input_size)),
        weight_hh_l0=u(ks[1], (4 * H, H)),
        bias_ih_l0=u(ks[2], (4 * H,)),
        bias_hh_l0=u(ks[3], (4 * H,)),
        weight_ih_l1=u(ks[4], (4 * H, H)),
        weight_hh_l1=u(ks[5], (4 * H, H)),
        bias_ih_l1=u(ks[6], (4 * H,)),
        bias_hh_l1=u(ks[7], (4 * H,)),
        fc_weight=u(ks[8], (num_classes, H)),
        fc_bias=u(ks[9], (num_classes,)),
    )


def prepare_kernel_params(tp, pad_classes_to=128):
    """One-time weight prep: transpose, combine biases, bf16-cast matmul operands,
    pad fc output lanes to a multiple of 128."""
    H = tp["weight_hh_l0"].shape[1]
    C = tp["fc_weight"].shape[0]
    Cpad = max(pad_classes_to, ((C + 127) // 128) * 128)
    bf = jnp.bfloat16

    fc_w = (jnp.zeros((H, Cpad), jnp.float32).at[:, :C].set(tp["fc_weight"].T)
            .astype(bf))
    fc_b = jnp.zeros((1, Cpad), jnp.float32).at[0, :C].set(tp["fc_bias"])
    return dict(
        wih0=tp["weight_ih_l0"].T.astype(bf),                         # (I, 4H)
        whh0=tp["weight_hh_l0"].T.astype(bf),                         # (H, 4H)
        b0=(tp["bias_ih_l0"] + tp["bias_hh_l0"]).reshape(1, 4 * H),   # f32
        wih1=tp["weight_ih_l1"].T.astype(bf),                         # (H, 4H)
        whh1=tp["weight_hh_l1"].T.astype(bf),                         # (H, 4H)
        b1=(tp["bias_ih_l1"] + tp["bias_hh_l1"]).reshape(1, 4 * H),   # f32
        fc_w=fc_w,                                                    # (H, Cpad) bf16
        fc_b=fc_b,                                                    # (1, Cpad) f32
        num_classes=C,
    )


def _gates_act(g, c, H):
    i = jax.nn.sigmoid(g[:, 0:H])
    f = jax.nn.sigmoid(g[:, H:2 * H])
    gg = jnp.tanh(g[:, 2 * H:3 * H])
    o = jax.nn.sigmoid(g[:, 3 * H:4 * H])
    c = f * c + i * gg
    return o * jnp.tanh(c), c


def reference_forward(x_btI, tp):
    """Pure-JAX full-f32 reference of the PyTorch module forward (eval mode)."""
    B, T, I = x_btI.shape
    H = tp["weight_hh_l0"].shape[1]
    hp = lax.Precision.HIGHEST

    def cell(x_t, h, c, w_ih, w_hh, b_ih, b_hh):
        g = (jnp.dot(x_t, w_ih.T, precision=hp)
             + jnp.dot(h, w_hh.T, precision=hp) + b_ih + b_hh)
        return _gates_act(g, c, H)

    h0 = c0 = h1 = c1 = jnp.zeros((B, H), jnp.float32)
    for t in range(T):
        x_t = x_btI[:, t, :]
        h0, c0 = cell(x_t, h0, c0, tp["weight_ih_l0"], tp["weight_hh_l0"],
                      tp["bias_ih_l0"], tp["bias_hh_l0"])
        h1, c1 = cell(h0, h1, c1, tp["weight_ih_l1"], tp["weight_hh_l1"],
                      tp["bias_ih_l1"], tp["bias_hh_l1"])
    return jnp.dot(h1, tp["fc_weight"].T, precision=hp) + tp["fc_bias"]


def reference_forward_mixed(x_btI, tp):
    """Mirrors the kernel's precision: bf16 matmul operands, f32 accumulation."""
    B, T, I = x_btI.shape
    H = tp["weight_hh_l0"].shape[1]
    hp = lax.Precision.HIGHEST
    bf = lambda a: a.astype(jnp.bfloat16).astype(jnp.float32)

    h0 = c0 = h1 = c1 = jnp.zeros((B, H), jnp.float32)
    for t in range(T):
        x_t = x_btI[:, t, :]
        g0 = (jnp.dot(bf(x_t), bf(tp["weight_ih_l0"].T), precision=hp)
              + jnp.dot(bf(h0), bf(tp["weight_hh_l0"].T), precision=hp)
              + tp["bias_ih_l0"] + tp["bias_hh_l0"])
        h0, c0 = _gates_act(g0, c0, H)
        g1 = (jnp.dot(bf(h0), bf(tp["weight_ih_l1"].T), precision=hp)
              + jnp.dot(bf(h1), bf(tp["weight_hh_l1"].T), precision=hp)
              + tp["bias_ih_l1"] + tp["bias_hh_l1"])
        h1, c1 = _gates_act(g1, c1, H)
    return jnp.dot(bf(h1), bf(tp["fc_weight"].T), precision=hp) + tp["fc_bias"]


if __name__ == "__main__":
    B, T, I = 16, 8, 32        # batch, seq_len, input_size (pose features)
    H, C = 128, 2              # hidden_size (module default), num_classes

    key = jax.random.PRNGKey(0)
    k_x, k_p = jax.random.split(key)
    x = jax.random.normal(k_x, (B, T, I), jnp.float32)   # batch_first like PyTorch
    torch_params = init_torch_params(k_p, I, H, C)
    kparams = prepare_kernel_params(torch_params)

    logits = pose_classifier_forward(x, kparams)          # chip-dependent batch split
    logits = jax.block_until_ready(logits)
    assert logits.shape == (B, C)

    # Tight check vs. a reference that mirrors the kernel's bf16/f32 mixed precision.
    ref_mixed = reference_forward_mixed(x, torch_params)
    assert jnp.allclose(logits, ref_mixed, atol=2e-3, rtol=2e-3), \
        "mismatch vs mixed-precision reference"

    # Loose check vs. the full-f32 PyTorch-semantics reference (bf16 weight budget).
    ref_full = reference_forward(x, torch_params)
    assert jnp.allclose(logits, ref_full, atol=5e-2, rtol=5e-2), \
        "drift vs full-precision reference exceeds bf16 budget"

    print("KERNEL_OK")
</pallas_src>

<mosaic_0001>
module attributes {stable_mosaic.version = 11 : i64} {
  func.func @lstm_fc_kernel(%arg0: i32, %arg1: memref<128x32xbf16, #tpu.memory_space<vmem>>, %arg2: memref<32x512xbf16, #tpu.memory_space<vmem>>, %arg3: memref<128x512xbf16, #tpu.memory_space<vmem>>, %arg4: memref<1x512xf32, #tpu.memory_space<vmem>>, %arg5: memref<128x512xbf16, #tpu.memory_space<vmem>>, %arg6: memref<128x512xbf16, #tpu.memory_space<vmem>>, %arg7: memref<1x512xf32, #tpu.memory_space<vmem>>, %arg8: memref<128x128xbf16, #tpu.memory_space<vmem>>, %arg9: memref<1x128xf32, #tpu.memory_space<vmem>>, %arg10: memref<16x128xf32, #tpu.memory_space<vmem>>, %arg11: memref<128x512xf32, #tpu.memory_space<vmem>>) attributes {dimension_semantics = [#tpu.dimension_semantics<parallel>], iteration_bounds = array<i64: 1>, scalar_prefetch = 0 : i64, scratch_operands = 1 : i64, tpu.core_type = #tpu.core_type<tc>, window_params = [{transform_indices = @transform_0, window_bounds = array<i64: 128, 32>}, {pipeline_mode = #tpu.pipeline_mode<synchronous>, transform_indices = @transform_1, window_bounds = array<i64: 32, 512>}, {pipeline_mode = #tpu.pipeline_mode<synchronous>, transform_indices = @transform_2, window_bounds = array<i64: 128, 512>}, {pipeline_mode = #tpu.pipeline_mode<synchronous>, transform_indices = @transform_3, window_bounds = array<i64: 1, 512>}, {pipeline_mode = #tpu.pipeline_mode<synchronous>, transform_indices = @transform_4, window_bounds = array<i64: 128, 512>}, {pipeline_mode = #tpu.pipeline_mode<synchronous>, transform_indices = @transform_5, window_bounds = array<i64: 128, 512>}, {pipeline_mode = #tpu.pipeline_mode<synchronous>, transform_indices = @transform_6, window_bounds = array<i64: 1, 512>}, {pipeline_mode = #tpu.pipeline_mode<synchronous>, transform_indices = @transform_7, window_bounds = array<i64: 128, 128>}, {pipeline_mode = #tpu.pipeline_mode<synchronous>, transform_indices = @transform_8, window_bounds = array<i64: 1, 128>}, {transform_indices = @transform_9, window_bounds = array<i64: 16, 128>}]} {
    %c0 = arith.constant 0 : index
    %c0_0 = arith.constant 0 : index
    %0 = vector.load %arg1[%c0, %c0_0] : memref<128x32xbf16, #tpu.memory_space<vmem>>, vector<128x32xbf16>
    %c0_1 = arith.constant 0 : index
    %c0_2 = arith.constant 0 : index
    %1 = vector.load %arg2[%c0_1, %c0_2] : memref<32x512xbf16, #tpu.memory_space<vmem>>, vector<32x512xbf16>
    %cst = arith.constant dense<0.000000e+00> : vector<128x512xf32>
    %2 = tpu.matmul %0, %1, %cst {dimension_numbers = #tpu.dot_dimension_numbers<[1], [0], [0], [1], [0, 0, 1, 1], [], []>} : vector<128x32xbf16>, vector<32x512xbf16>, vector<128x512xf32> -> vector<128x512xf32>
    %c0_3 = arith.constant 0 : index
    %c0_4 = arith.constant 0 : index
    %3 = vector.load %arg4[%c0_3, %c0_4] : memref<1x512xf32, #tpu.memory_space<vmem>>, vector<1x512xf32>
    %4 = vector.broadcast %3 : vector<1x512xf32> to vector<128x512xf32>
    %5 = arith.addf %2, %4 : vector<128x512xf32>
    %c0_5 = arith.constant 0 : index
    %c0_6 = arith.constant 0 : index
    %6 = vector.load %arg11[%c0_5, %c0_6] : memref<128x512xf32, #tpu.memory_space<vmem>>, vector<128x512xf32>
    tpu.vector_store %arg11[%c0_5, %c0_6], %5 {strides = array<i32>} : memref<128x512xf32, #tpu.memory_space<vmem>>, vector<128x512xf32>,
    %c0_7 = arith.constant 0 : index
    %c0_8 = arith.constant 0 : index
    %7 = vector.load %arg7[%c0_7, %c0_8] : memref<1x512xf32, #tpu.memory_space<vmem>>, vector<1x512xf32>
    %8 = vector.shape_cast %7 : vector<1x512xf32> to vector<1x512xf32>
    %9 = vector.broadcast %8 : vector<1x512xf32> to vector<16x512xf32>
    %cst_9 = arith.constant 0.000000e+00 : f32
    %10 = vector.broadcast %cst_9 : f32 to vector<16x128xf32>
    %c0_i32 = arith.constant 0 : i32
    %c16_i32 = arith.constant 16 : i32
    %11 = arith.muli %c0_i32, %c16_i32 : i32
    %12 = tpu.assume_multiple %11, 16 : i32
    %13 = arith.index_cast %12 : i32 to index
    %c0_10 = arith.constant 0 : index
    %14 = vector.load %arg11[%13, %c0_10] : memref<128x512xf32, #tpu.memory_space<vmem>>, vector<16x512xf32>
    %15 = arith.truncf %10 : vector<16x128xf32> to vector<16x128xbf16>
    %c0_11 = arith.constant 0 : index
    %c0_12 = arith.constant 0 : index
    %16 = vector.load %arg3[%c0_11, %c0_12] : memref<128x512xbf16, #tpu.memory_space<vmem>>, vector<128x512xbf16>
    %cst_13 = arith.constant dense<0.000000e+00> : vector<16x512xf32>
    %17 = tpu.matmul %15, %16, %cst_13 {dimension_numbers = #tpu.dot_dimension_numbers<[1], [0], [0], [1], [0, 0, 1, 1], [], []>} : vector<16x128xbf16>, vector<128x512xbf16>, vector<16x512xf32> -> vector<16x512xf32>
    %18 = arith.addf %14, %17 : vector<16x512xf32>
    %19 = vector.extract_strided_slice %18 {offsets = [0, 0], sizes = [16, 128], strides = [1, 1]} : vector<16x512xf32> to vector<16x128xf32>
    %20 = arith.negf %19 : vector<16x128xf32>
    %21 = math.exp %20 : vector<16x128xf32>
    %cst_14 = arith.constant 1.000000e+00 : f32
    %22 = vector.broadcast %cst_14 : f32 to vector<16x128xf32>
    %23 = arith.addf %22, %21 : vector<16x128xf32>
    %24 = arith.divf %22, %23 : vector<16x128xf32>
    %25 = vector.extract_strided_slice %18 {offsets = [0, 128], sizes = [16, 128], strides = [1, 1]} : vector<16x512xf32> to vector<16x128xf32>
    %26 = arith.negf %25 : vector<16x128xf32>
    %27 = math.exp %26 : vector<16x128xf32>
    %cst_15 = arith.constant 1.000000e+00 : f32
    %28 = vector.broadcast %cst_15 : f32 to vector<16x128xf32>
    %29 = arith.addf %28, %27 : vector<16x128xf32>
    %30 = arith.divf %28, %29 : vector<16x128xf32>
    %31 = vector.extract_strided_slice %18 {offsets = [0, 256], sizes = [16, 128], strides = [1, 1]} : vector<16x512xf32> to vector<16x128xf32>
    %32 = math.tanh %31 : vector<16x128xf32>
    %33 = vector.extract_strided_slice %18 {offsets = [0, 384], sizes = [16, 128], strides = [1, 1]} : vector<16x512xf32> to vector<16x128xf32>
    %34 = arith.negf %33 : vector<16x128xf32>
    %35 = math.exp %34 : vector<16x128xf32>
    %cst_16 = arith.constant 1.000000e+00 : f32
    %36 = vector.broadcast %cst_16 : f32 to vector<16x128xf32>
    %37 = arith.addf %36, %35 : vector<16x128xf32>
    %38 = arith.divf %36, %37 : vector<16x128xf32>
    %39 = arith.mulf %30, %10 : vector<16x128xf32>
    %40 = arith.mulf %24, %32 : vector<16x128xf32>
    %41 = arith.addf %39, %40 : vector<16x128xf32>
    %42 = math.tanh %41 : vector<16x128xf32>
    %43 = arith.mulf %38, %42 : vector<16x128xf32>
    %44 = arith.truncf %43 : vector<16x128xf32> to vector<16x128xbf16>
    %c0_17 = arith.constant 0 : index
    %c0_18 = arith.constant 0 : index
    %45 = vector.load %arg5[%c0_17, %c0_18] : memref<128x512xbf16, #tpu.memory_space<vmem>>, vector<128x512xbf16>
    %cst_19 = arith.constant dense<0.000000e+00> : vector<16x512xf32>
    %46 = tpu.matmul %44, %45, %cst_19 {dimension_numbers = #tpu.dot_dimension_numbers<[1], [0], [0], [1], [0, 0, 1, 1], [], []>} : vector<16x128xbf16>, vector<128x512xbf16>, vector<16x512xf32> -> vector<16x512xf32>
    %47 = arith.truncf %10 : vector<16x128xf32> to vector<16x128xbf16>
    %c0_20 = arith.constant 0 : index
    %c0_21 = arith.constant 0 : index
    %48 = vector.load %arg6[%c0_20, %c0_21] : memref<128x512xbf16, #tpu.memory_space<vmem>>, vector<128x512xbf16>
    %cst_22 = arith.constant dense<0.000000e+00> : vector<16x512xf32>
    %49 = tpu.matmul %47, %48, %cst_22 {dimension_numbers = #tpu.dot_dimension_numbers<[1], [0], [0], [1], [0, 0, 1, 1], [], []>} : vector<16x128xbf16>, vector<128x512xbf16>, vector<16x512xf32> -> vector<16x512xf32>
    %50 = arith.addf %46, %49 : vector<16x512xf32>
    %51 = arith.addf %50, %9 : vector<16x512xf32>
    %52 = vector.extract_strided_slice %51 {offsets = [0, 0], sizes = [16, 128], strides = [1, 1]} : vector<16x512xf32> to vector<16x128xf32>
    %53 = arith.negf %52 : vector<16x128xf32>
    %54 = math.exp %53 : vector<16x128xf32>
    %cst_23 = arith.constant 1.000000e+00 : f32
    %55 = vector.broadcast %cst_23 : f32 to vector<16x128xf32>
    %56 = arith.addf %55, %54 : vector<16x128xf32>
    %57 = arith.divf %55, %56 : vector<16x128xf32>
    %58 = vector.extract_strided_slice %51 {offsets = [0, 128], sizes = [16, 128], strides = [1, 1]} : vector<16x512xf32> to vector<16x128xf32>
    %59 = arith.negf %58 : vector<16x128xf32>
    %60 = math.exp %59 : vector<16x128xf32>
    %cst_24 = arith.constant 1.000000e+00 : f32
    %61 = vector.broadcast %cst_24 : f32 to vector<16x128xf32>
    %62 = arith.addf %61, %60 : vector<16x128xf32>
    %63 = arith.divf %61, %62 : vector<16x128xf32>
    %64 = vector.extract_strided_slice %51 {offsets = [0, 256], sizes = [16, 128], strides = [1, 1]} : vector<16x512xf32> to vector<16x128xf32>
    %65 = math.tanh %64 : vector<16x128xf32>
    %66 = vector.extract_strided_slice %51 {offsets = [0, 384], sizes = [16, 128], strides = [1, 1]} : vector<16x512xf32> to vector<16x128xf32>
    %67 = arith.negf %66 : vector<16x128xf32>
    %68 = math.exp %67 : vector<16x128xf32>
    %cst_25 = arith.constant 1.000000e+00 : f32
    %69 = vector.broadcast %cst_25 : f32 to vector<16x128xf32>
    %70 = arith.addf %69, %68 : vector<16x128xf32>
    %71 = arith.divf %69, %70 : vector<16x128xf32>
    %72 = arith.mulf %63, %10 : vector<16x128xf32>
    %73 = arith.mulf %57, %65 : vector<16x128xf32>
    %74 = arith.addf %72, %73 : vector<16x128xf32>
    %75 = math.tanh %74 : vector<16x128xf32>
    %76 = arith.mulf %71, %75 : vector<16x128xf32>
    %c1_i32 = arith.constant 1 : i32
    %c16_i32_26 = arith.constant 16 : i32
    %77 = arith.muli %c1_i32, %c16_i32_26 : i32
    %78 = tpu.assume_multiple %77, 16 : i32
    %79 = arith.index_cast %78 : i32 to index
    %c0_27 = arith.constant 0 : index
    %80 = vector.load %arg11[%79, %c0_27] : memref<128x512xf32, #tpu.memory_space<vmem>>, vector<16x512xf32>
    %81 = arith.truncf %43 : vector<16x128xf32> to vector<16x128xbf16>
    %c0_28 = arith.constant 0 : index
    %c0_29 = arith.constant 0 : index
    %82 = vector.load %arg3[%c0_28, %c0_29] : memref<128x512xbf16, #tpu.memory_space<vmem>>, vector<128x512xbf16>
    %cst_30 = arith.constant dense<0.000000e+00> : vector<16x512xf32>
    %83 = tpu.matmul %81, %82, %cst_30 {dimension_numbers = #tpu.dot_dimension_numbers<[1], [0], [0], [1], [0, 0, 1, 1], [], []>} : vector<16x128xbf16>, vector<128x512xbf16>, vector<16x512xf32> -> vector<16x512xf32>
    %84 = arith.addf %80, %83 : vector<16x512xf32>
    %85 = vector.extract_strided_slice %84 {offsets = [0, 0], sizes = [16, 128], strides = [1, 1]} : vector<16x512xf32> to vector<16x128xf32>
    %86 = arith.negf %85 : vector<16x128xf32>
    %87 = math.exp %86 : vector<16x128xf32>
    %cst_31 = arith.constant 1.000000e+00 : f32
    %88 = vector.broadcast %cst_31 : f32 to vector<16x128xf32>
    %89 = arith.addf %88, %87 : vector<16x128xf32>
    %90 = arith.divf %88, %89 : vector<16x128xf32>
    %91 = vector.extract_strided_slice %84 {offsets = [0, 128], sizes = [16, 128], strides = [1, 1]} : vector<16x512xf32> to vector<16x128xf32>
    %92 = arith.negf %91 : vector<16x128xf32>
    %93 = math.exp %92 : vector<16x128xf32>
    %cst_32 = arith.constant 1.000000e+00 : f32
    %94 = vector.broadcast %cst_32 : f32 to vector<16x128xf32>
    %95 = arith.addf %94, %93 : vector<16x128xf32>
    %96 = arith.divf %94, %95 : vector<16x128xf32>
    %97 = vector.extract_strided_slice %84 {offsets = [0, 256], sizes = [16, 128], strides = [1, 1]} : vector<16x512xf32> to vector<16x128xf32>
    %98 = math.tanh %97 : vector<16x128xf32>
    %99 = vector.extract_strided_slice %84 {offsets = [0, 384], sizes = [16, 128], strides = [1, 1]} : vector<16x512xf32> to vector<16x128xf32>
    %100 = arith.negf %99 : vector<16x128xf32>
    %101 = math.exp %100 : vector<16x128xf32>
    %cst_33 = arith.constant 1.000000e+00 : f32
    %102 = vector.broadcast %cst_33 : f32 to vector<16x128xf32>
    %103 = arith.addf %102, %101 : vector<16x128xf32>
    %104 = arith.divf %102, %103 : vector<16x128xf32>
    %105 = arith.mulf %96, %41 : vector<16x128xf32>
    %106 = arith.mulf %90, %98 : vector<16x128xf32>
    %107 = arith.addf %105, %106 : vector<16x128xf32>
    %108 = math.tanh %107 : vector<16x128xf32>
    %109 = arith.mulf %104, %108 : vector<16x128xf32>
    %110 = arith.truncf %109 : vector<16x128xf32> to vector<16x128xbf16>
    %c0_34 = arith.constant 0 : index
    %c0_35 = arith.constant 0 : index
    %111 = vector.load %arg5[%c0_34, %c0_35] : memref<128x512xbf16, #tpu.memory_space<vmem>>, vector<128x512xbf16>
    %cst_36 = arith.constant dense<0.000000e+00> : vector<16x512xf32>
    %112 = tpu.matmul %110, %111, %cst_36 {dimension_numbers = #tpu.dot_dimension_numbers<[1], [0], [0], [1], [0, 0, 1, 1], [], []>} : vector<16x128xbf16>, vector<128x512xbf16>, vector<16x512xf32> -> vector<16x512xf32>
    %113 = arith.truncf %76 : vector<16x128xf32> to vector<16x128xbf16>
    %c0_37 = arith.constant 0 : index
    %c0_38 = arith.constant 0 : index
    %114 = vector.load %arg6[%c0_37, %c0_38] : memref<128x512xbf16, #tpu.memory_space<vmem>>, vector<128x512xbf16>
    %cst_39 = arith.constant dense<0.000000e+00> : vector<16x512xf32>
    %115 = tpu.matmul %113, %114, %cst_39 {dimension_numbers = #tpu.dot_dimension_numbers<[1], [0], [0], [1], [0, 0, 1, 1], [], []>} : vector<16x128xbf16>, vector<128x512xbf16>, vector<16x512xf32> -> vector<16x512xf32>
    %116 = arith.addf %112, %115 : vector<16x512xf32>
    %117 = arith.addf %116, %9 : vector<16x512xf32>
    %118 = vector.extract_strided_slice %117 {offsets = [0, 0], sizes = [16, 128], strides = [1, 1]} : vector<16x512xf32> to vector<16x128xf32>
    %119 = arith.negf %118 : vector<16x128xf32>
    %120 = math.exp %119 : vector<16x128xf32>
    %cst_40 = arith.constant 1.000000e+00 : f32
    %121 = vector.broadcast %cst_40 : f32 to vector<16x128xf32>
    %122 = arith.addf %121, %120 : vector<16x128xf32>
    %123 = arith.divf %121, %122 : vector<16x128xf32>
    %124 = vector.extract_strided_slice %117 {offsets = [0, 128], sizes = [16, 128], strides = [1, 1]} : vector<16x512xf32> to vector<16x128xf32>
    %125 = arith.negf %124 : vector<16x128xf32>
    %126 = math.exp %125 : vector<16x128xf32>
    %cst_41 = arith.constant 1.000000e+00 : f32
    %127 = vector.broadcast %cst_41 : f32 to vector<16x128xf32>
    %128 = arith.addf %127, %126 : vector<16x128xf32>
    %129 = arith.divf %127, %128 : vector<16x128xf32>
    %130 = vector.extract_strided_slice %117 {offsets = [0, 256], sizes = [16, 128], strides = [1, 1]} : vector<16x512xf32> to vector<16x128xf32>
    %131 = math.tanh %130 : vector<16x128xf32>
    %132 = vector.extract_strided_slice %117 {offsets = [0, 384], sizes = [16, 128], strides = [1, 1]} : vector<16x512xf32> to vector<16x128xf32>
    %133 = arith.negf %132 : vector<16x128xf32>
    %134 = math.exp %133 : vector<16x128xf32>
    %cst_42 = arith.constant 1.000000e+00 : f32
    %135 = vector.broadcast %cst_42 : f32 to vector<16x128xf32>
    %136 = arith.addf %135, %134 : vector<16x128xf32>
    %137 = arith.divf %135, %136 : vector<16x128xf32>
    %138 = arith.mulf %129, %74 : vector<16x128xf32>
    %139 = arith.mulf %123, %131 : vector<16x128xf32>
    %140 = arith.addf %138, %139 : vector<16x128xf32>
    %141 = math.tanh %140 : vector<16x128xf32>
    %142 = arith.mulf %137, %141 : vector<16x128xf32>
    %c2_i32 = arith.constant 2 : i32
    %c16_i32_43 = arith.constant 16 : i32
    %143 = arith.muli %c2_i32, %c16_i32_43 : i32
    %144 = tpu.assume_multiple %143, 16 : i32
    %145 = arith.index_cast %144 : i32 to index
    %c0_44 = arith.constant 0 : index
    %146 = vector.load %arg11[%145, %c0_44] : memref<128x512xf32, #tpu.memory_space<vmem>>, vector<16x512xf32>
    %147 = arith.truncf %109 : vector<16x128xf32> to vector<16x128xbf16>
    %c0_45 = arith.constant 0 : index
    %c0_46 = arith.constant 0 : index
    %148 = vector.load %arg3[%c0_45, %c0_46] : memref<128x512xbf16, #tpu.memory_space<vmem>>, vector<128x512xbf16>
    %cst_47 = arith.constant dense<0.000000e+00> : vector<16x512xf32>
    %149 = tpu.matmul %147, %148, %cst_47 {dimension_numbers = #tpu.dot_dimension_numbers<[1], [0], [0], [1], [0, 0, 1, 1], [], []>} : vector<16x128xbf16>, vector<128x512xbf16>, vector<16x512xf32> -> vector<16x512xf32>
    %150 = arith.addf %146, %149 : vector<16x512xf32>
    %151 = vector.extract_strided_slice %150 {offsets = [0, 0], sizes = [16, 128], strides = [1, 1]} : vector<16x512xf32> to vector<16x128xf32>
    %152 = arith.negf %151 : vector<16x128xf32>
    %153 = math.exp %152 : vector<16x128xf32>
    %cst_48 = arith.constant 1.000000e+00 : f32
    %154 = vector.broadcast %cst_48 : f32 to vector<16x128xf32>
    %155 = arith.addf %154, %153 : vector<16x128xf32>
    %156 = arith.divf %154, %155 : vector<16x128xf32>
    %157 = vector.extract_strided_slice %150 {offsets = [0, 128], sizes = [16, 128], strides = [1, 1]} : vector<16x512xf32> to vector<16x128xf32>
    %158 = arith.negf %157 : vector<16x128xf32>
    %159 = math.exp %158 : vector<16x128xf32>
    %cst_49 = arith.constant 1.000000e+00 : f32
    %160 = vector.broadcast %cst_49 : f32 to vector<16x128xf32>
    %161 = arith.addf %160, %159 : vector<16x128xf32>
    %162 = arith.divf %160, %161 : vector<16x128xf32>
    %163 = vector.extract_strided_slice %150 {offsets = [0, 256], sizes = [16, 128], strides = [1, 1]} : vector<16x512xf32> to vector<16x128xf32>
    %164 = math.tanh %163 : vector<16x128xf32>
    %165 = vector.extract_strided_slice %150 {offsets = [0, 384], sizes = [16, 128], strides = [1, 1]} : vector<16x512xf32> to vector<16x128xf32>
    %166 = arith.negf %165 : vector<16x128xf32>
    %167 = math.exp %166 : vector<16x128xf32>
    %cst_50 = arith.constant 1.000000e+00 : f32
    %168 = vector.broadcast %cst_50 : f32 to vector<16x128xf32>
    %169 = arith.addf %168, %167 : vector<16x128xf32>
    %170 = arith.divf %168, %169 : vector<16x128xf32>
    %171 = arith.mulf %162, %107 : vector<16x128xf32>
    %172 = arith.mulf %156, %164 : vector<16x128xf32>
    %173 = arith.addf %171, %172 : vector<16x128xf32>
    %174 = math.tanh %173 : vector<16x128xf32>
    %175 = arith.mulf %170, %174 : vector<16x128xf32>
    %176 = arith.truncf %175 : vector<16x128xf32> to vector<16x128xbf16>
    %c0_51 = arith.constant 0 : index
    %c0_52 = arith.constant 0 : index
    %177 = vector.load %arg5[%c0_51, %c0_52] : memref<128x512xbf16, #tpu.memory_space<vmem>>, vector<128x512xbf16>
    %cst_53 = arith.constant dense<0.000000e+00> : vector<16x512xf32>
    %178 = tpu.matmul %176, %177, %cst_53 {dimension_numbers = #tpu.dot_dimension_numbers<[1], [0], [0], [1], [0, 0, 1, 1], [], []>} : vector<16x128xbf16>, vector<128x512xbf16>, vector<16x512xf32> -> vector<16x512xf32>
    %179 = arith.truncf %142 : vector<16x128xf32> to vector<16x128xbf16>
    %c0_54 = arith.constant 0 : index
    %c0_55 = arith.constant 0 : index
    %180 = vector.load %arg6[%c0_54, %c0_55] : memref<128x512xbf16, #tpu.memory_space<vmem>>, vector<128x512xbf16>
    %cst_56 = arith.constant dense<0.000000e+00> : vector<16x512xf32>
    %181 = tpu.matmul %179, %180, %cst_56 {dimension_numbers = #tpu.dot_dimension_numbers<[1], [0], [0], [1], [0, 0, 1, 1], [], []>} : vector<16x128xbf16>, vector<128x512xbf16>, vector<16x512xf32> -> vector<16x512xf32>
    %182 = arith.addf %178, %181 : vector<16x512xf32>
    %183 = arith.addf %182, %9 : vector<16x512xf32>
    %184 = vector.extract_strided_slice %183 {offsets = [0, 0], sizes = [16, 128], strides = [1, 1]} : vector<16x512xf32> to vector<16x128xf32>
    %185 = arith.negf %184 : vector<16x128xf32>
    %186 = math.exp %185 : vector<16x128xf32>
    %cst_57 = arith.constant 1.000000e+00 : f32
    %187 = vector.broadcast %cst_57 : f32 to vector<16x128xf32>
    %188 = arith.addf %187, %186 : vector<16x128xf32>
    %189 = arith.divf %187, %188 : vector<16x128xf32>
    %190 = vector.extract_strided_slice %183 {offsets = [0, 128], sizes = [16, 128], strides = [1, 1]} : vector<16x512xf32> to vector<16x128xf32>
    %191 = arith.negf %190 : vector<16x128xf32>
    %192 = math.exp %191 : vector<16x128xf32>
    %cst_58 = arith.constant 1.000000e+00 : f32
    %193 = vector.broadcast %cst_58 : f32 to vector<16x128xf32>
    %194 = arith.addf %193, %192 : vector<16x128xf32>
    %195 = arith.divf %193, %194 : vector<16x128xf32>
    %196 = vector.extract_strided_slice %183 {offsets = [0, 256], sizes = [16, 128], strides = [1, 1]} : vector<16x512xf32> to vector<16x128xf32>
    %197 = math.tanh %196 : vector<16x128xf32>
    %198 = vector.extract_strided_slice %183 {offsets = [0, 384], sizes = [16, 128], strides = [1, 1]} : vector<16x512xf32> to vector<16x128xf32>
    %199 = arith.negf %198 : vector<16x128xf32>
    %200 = math.exp %199 : vector<16x128xf32>
    %cst_59 = arith.constant 1.000000e+00 : f32
    %201 = vector.broadcast %cst_59 : f32 to vector<16x128xf32>
    %202 = arith.addf %201, %200 : vector<16x128xf32>
    %203 = arith.divf %201, %202 : vector<16x128xf32>
    %204 = arith.mulf %195, %140 : vector<16x128xf32>
    %205 = arith.mulf %189, %197 : vector<16x128xf32>
    %206 = arith.addf %204, %205 : vector<16x128xf32>
    %207 = math.tanh %206 : vector<16x128xf32>
    %208 = arith.mulf %203, %207 : vector<16x128xf32>
    %c3_i32 = arith.constant 3 : i32
    %c16_i32_60 = arith.constant 16 : i32
    %209 = arith.muli %c3_i32, %c16_i32_60 : i32
    %210 = tpu.assume_multiple %209, 16 : i32
    %211 = arith.index_cast %210 : i32 to index
    %c0_61 = arith.constant 0 : index
    %212 = vector.load %arg11[%211, %c0_61] : memref<128x512xf32, #tpu.memory_space<vmem>>, vector<16x512xf32>
    %213 = arith.truncf %175 : vector<16x128xf32> to vector<16x128xbf16>
    %c0_62 = arith.constant 0 : index
    %c0_63 = arith.constant 0 : index
    %214 = vector.load %arg3[%c0_62, %c0_63] : memref<128x512xbf16, #tpu.memory_space<vmem>>, vector<128x512xbf16>
    %cst_64 = arith.constant dense<0.000000e+00> : vector<16x512xf32>
    %215 = tpu.matmul %213, %214, %cst_64 {dimension_numbers = #tpu.dot_dimension_numbers<[1], [0], [0], [1], [0, 0, 1, 1], [], []>} : vector<16x128xbf16>, vector<128x512xbf16>, vector<16x512xf32> -> vector<16x512xf32>
    %216 = arith.addf %212, %215 : vector<16x512xf32>
    %217 = vector.extract_strided_slice %216 {offsets = [0, 0], sizes = [16, 128], strides = [1, 1]} : vector<16x512xf32> to vector<16x128xf32>
    %218 = arith.negf %217 : vector<16x128xf32>
    %219 = math.exp %218 : vector<16x128xf32>
    %cst_65 = arith.constant 1.000000e+00 : f32
    %220 = vector.broadcast %cst_65 : f32 to vector<16x128xf32>
    %221 = arith.addf %220, %219 : vector<16x128xf32>
    %222 = arith.divf %220, %221 : vector<16x128xf32>
    %223 = vector.extract_strided_slice %216 {offsets = [0, 128], sizes = [16, 128], strides = [1, 1]} : vector<16x512xf32> to vector<16x128xf32>
    %224 = arith.negf %223 : vector<16x128xf32>
    %225 = math.exp %224 : vector<16x128xf32>
    %cst_66 = arith.constant 1.000000e+00 : f32
    %226 = vector.broadcast %cst_66 : f32 to vector<16x128xf32>
    %227 = arith.addf %226, %225 : vector<16x128xf32>
    %228 = arith.divf %226, %227 : vector<16x128xf32>
    %229 = vector.extract_strided_slice %216 {offsets = [0, 256], sizes = [16, 128], strides = [1, 1]} : vector<16x512xf32> to vector<16x128xf32>
    %230 = math.tanh %229 : vector<16x128xf32>
    %231 = vector.extract_strided_slice %216 {offsets = [0, 384], sizes = [16, 128], strides = [1, 1]} : vector<16x512xf32> to vector<16x128xf32>
    %232 = arith.negf %231 : vector<16x128xf32>
    %233 = math.exp %232 : vector<16x128xf32>
    %cst_67 = arith.constant 1.000000e+00 : f32
    %234 = vector.broadcast %cst_67 : f32 to vector<16x128xf32>
    %235 = arith.addf %234, %233 : vector<16x128xf32>
    %236 = arith.divf %234, %235 : vector<16x128xf32>
    %237 = arith.mulf %228, %173 : vector<16x128xf32>
    %238 = arith.mulf %222, %230 : vector<16x128xf32>
    %239 = arith.addf %237, %238 : vector<16x128xf32>
    %240 = math.tanh %239 : vector<16x128xf32>
    %241 = arith.mulf %236, %240 : vector<16x128xf32>
    %242 = arith.truncf %241 : vector<16x128xf32> to vector<16x128xbf16>
    %c0_68 = arith.constant 0 : index
    %c0_69 = arith.constant 0 : index
    %243 = vector.load %arg5[%c0_68, %c0_69] : memref<128x512xbf16, #tpu.memory_space<vmem>>, vector<128x512xbf16>
    %cst_70 = arith.constant dense<0.000000e+00> : vector<16x512xf32>
    %244 = tpu.matmul %242, %243, %cst_70 {dimension_numbers = #tpu.dot_dimension_numbers<[1], [0], [0], [1], [0, 0, 1, 1], [], []>} : vector<16x128xbf16>, vector<128x512xbf16>, vector<16x512xf32> -> vector<16x512xf32>
    %245 = arith.truncf %208 : vector<16x128xf32> to vector<16x128xbf16>
    %c0_71 = arith.constant 0 : index
    %c0_72 = arith.constant 0 : index
    %246 = vector.load %arg6[%c0_71, %c0_72] : memref<128x512xbf16, #tpu.memory_space<vmem>>, vector<128x512xbf16>
    %cst_73 = arith.constant dense<0.000000e+00> : vector<16x512xf32>
    %247 = tpu.matmul %245, %246, %cst_73 {dimension_numbers = #tpu.dot_dimension_numbers<[1], [0], [0], [1], [0, 0, 1, 1], [], []>} : vector<16x128xbf16>, vector<128x512xbf16>, vector<16x512xf32> -> vector<16x512xf32>
    %248 = arith.addf %244, %247 : vector<16x512xf32>
    %249 = arith.addf %248, %9 : vector<16x512xf32>
    %250 = vector.extract_strided_slice %249 {offsets = [0, 0], sizes = [16, 128], strides = [1, 1]} : vector<16x512xf32> to vector<16x128xf32>
    %251 = arith.negf %250 : vector<16x128xf32>
    %252 = math.exp %251 : vector<16x128xf32>
    %cst_74 = arith.constant 1.000000e+00 : f32
    %253 = vector.broadcast %cst_74 : f32 to vector<16x128xf32>
    %254 = arith.addf %253, %252 : vector<16x128xf32>
    %255 = arith.divf %253, %254 : vector<16x128xf32>
    %256 = vector.extract_strided_slice %249 {offsets = [0, 128], sizes = [16, 128], strides = [1, 1]} : vector<16x512xf32> to vector<16x128xf32>
    %257 = arith.negf %256 : vector<16x128xf32>
    %258 = math.exp %257 : vector<16x128xf32>
    %cst_75 = arith.constant 1.000000e+00 : f32
    %259 = vector.broadcast %cst_75 : f32 to vector<16x128xf32>
    %260 = arith.addf %259, %258 : vector<16x128xf32>
    %261 = arith.divf %259, %260 : vector<16x128xf32>
    %262 = vector.extract_strided_slice %249 {offsets = [0, 256], sizes = [16, 128], strides = [1, 1]} : vector<16x512xf32> to vector<16x128xf32>
    %263 = math.tanh %262 : vector<16x128xf32>
    %264 = vector.extract_strided_slice %249 {offsets = [0, 384], sizes = [16, 128], strides = [1, 1]} : vector<16x512xf32> to vector<16x128xf32>
    %265 = arith.negf %264 : vector<16x128xf32>
    %266 = math.exp %265 : vector<16x128xf32>
    %cst_76 = arith.constant 1.000000e+00 : f32
    %267 = vector.broadcast %cst_76 : f32 to vector<16x128xf32>
    %268 = arith.addf %267, %266 : vector<16x128xf32>
    %269 = arith.divf %267, %268 : vector<16x128xf32>
    %270 = arith.mulf %261, %206 : vector<16x128xf32>
    %271 = arith.mulf %255, %263 : vector<16x128xf32>
    %272 = arith.addf %270, %271 : vector<16x128xf32>
    %273 = math.tanh %272 : vector<16x128xf32>
    %274 = arith.mulf %269, %273 : vector<16x128xf32>
    %c4_i32 = arith.constant 4 : i32
    %c16_i32_77 = arith.constant 16 : i32
    %275 = arith.muli %c4_i32, %c16_i32_77 : i32
    %276 = tpu.assume_multiple %275, 16 : i32
    %277 = arith.index_cast %276 : i32 to index
    %c0_78 = arith.constant 0 : index
    %278 = vector.load %arg11[%277, %c0_78] : memref<128x512xf32, #tpu.memory_space<vmem>>, vector<16x512xf32>
    %279 = arith.truncf %241 : vector<16x128xf32> to vector<16x128xbf16>
    %c0_79 = arith.constant 0 : index
    %c0_80 = arith.constant 0 : index
    %280 = vector.load %arg3[%c0_79, %c0_80] : memref<128x512xbf16, #tpu.memory_space<vmem>>, vector<128x512xbf16>
    %cst_81 = arith.constant dense<0.000000e+00> : vector<16x512xf32>
    %281 = tpu.matmul %279, %280, %cst_81 {dimension_numbers = #tpu.dot_dimension_numbers<[1], [0], [0], [1], [0, 0, 1, 1], [], []>} : vector<16x128xbf16>, vector<128x512xbf16>, vector<16x512xf32> -> vector<16x512xf32>
    %282 = arith.addf %278, %281 : vector<16x512xf32>
    %283 = vector.extract_strided_slice %282 {offsets = [0, 0], sizes = [16, 128], strides = [1, 1]} : vector<16x512xf32> to vector<16x128xf32>
    %284 = arith.negf %283 : vector<16x128xf32>
    %285 = math.exp %284 : vector<16x128xf32>
    %cst_82 = arith.constant 1.000000e+00 : f32
    %286 = vector.broadcast %cst_82 : f32 to vector<16x128xf32>
    %287 = arith.addf %286, %285 : vector<16x128xf32>
    %288 = arith.divf %286, %287 : vector<16x128xf32>
    %289 = vector.extract_strided_slice %282 {offsets = [0, 128], sizes = [16, 128], strides = [1, 1]} : vector<16x512xf32> to vector<16x128xf32>
    %290 = arith.negf %289 : vector<16x128xf32>
    %291 = math.exp %290 : vector<16x128xf32>
    %cst_83 = arith.constant 1.000000e+00 : f32
    %292 = vector.broadcast %cst_83 : f32 to vector<16x128xf32>
    %293 = arith.addf %292, %291 : vector<16x128xf32>
    %294 = arith.divf %292, %293 : vector<16x128xf32>
    %295 = vector.extract_strided_slice %282 {offsets = [0, 256], sizes = [16, 128], strides = [1, 1]} : vector<16x512xf32> to vector<16x128xf32>
    %296 = math.tanh %295 : vector<16x128xf32>
    %297 = vector.extract_strided_slice %282 {offsets = [0, 384], sizes = [16, 128], strides = [1, 1]} : vector<16x512xf32> to vector<16x128xf32>
    %298 = arith.negf %297 : vector<16x128xf32>
    %299 = math.exp %298 : vector<16x128xf32>
    %cst_84 = arith.constant 1.000000e+00 : f32
    %300 = vector.broadcast %cst_84 : f32 to vector<16x128xf32>
    %301 = arith.addf %300, %299 : vector<16x128xf32>
    %302 = arith.divf %300, %301 : vector<16x128xf32>
    %303 = arith.mulf %294, %239 : vector<16x128xf32>
    %304 = arith.mulf %288, %296 : vector<16x128xf32>
    %305 = arith.addf %303, %304 : vector<16x128xf32>
    %306 = math.tanh %305 : vector<16x128xf32>
    %307 = arith.mulf %302, %306 : vector<16x128xf32>
    %308 = arith.truncf %307 : vector<16x128xf32> to vector<16x128xbf16>
    %c0_85 = arith.constant 0 : index
    %c0_86 = arith.constant 0 : index
    %309 = vector.load %arg5[%c0_85, %c0_86] : memref<128x512xbf16, #tpu.memory_space<vmem>>, vector<128x512xbf16>
    %cst_87 = arith.constant dense<0.000000e+00> : vector<16x512xf32>
    %310 = tpu.matmul %308, %309, %cst_87 {dimension_numbers = #tpu.dot_dimension_numbers<[1], [0], [0], [1], [0, 0, 1, 1], [], []>} : vector<16x128xbf16>, vector<128x512xbf16>, vector<16x512xf32> -> vector<16x512xf32>
    %311 = arith.truncf %274 : vector<16x128xf32> to vector<16x128xbf16>
    %c0_88 = arith.constant 0 : index
    %c0_89 = arith.constant 0 : index
    %312 = vector.load %arg6[%c0_88, %c0_89] : memref<128x512xbf16, #tpu.memory_space<vmem>>, vector<128x512xbf16>
    %cst_90 = arith.constant dense<0.000000e+00> : vector<16x512xf32>
    %313 = tpu.matmul %311, %312, %cst_90 {dimension_numbers = #tpu.dot_dimension_numbers<[1], [0], [0], [1], [0, 0, 1, 1], [], []>} : vector<16x128xbf16>, vector<128x512xbf16>, vector<16x512xf32> -> vector<16x512xf32>
    %314 = arith.addf %310, %313 : vector<16x512xf32>
    %315 = arith.addf %314, %9 : vector<16x512xf32>
    %316 = vector.extract_strided_slice %315 {offsets = [0, 0], sizes = [16, 128], strides = [1, 1]} : vector<16x512xf32> to vector<16x128xf32>
    %317 = arith.negf %316 : vector<16x128xf32>
    %318 = math.exp %317 : vector<16x128xf32>
    %cst_91 = arith.constant 1.000000e+00 : f32
    %319 = vector.broadcast %cst_91 : f32 to vector<16x128xf32>
    %320 = arith.addf %319, %318 : vector<16x128xf32>
    %321 = arith.divf %319, %320 : vector<16x128xf32>
    %322 = vector.extract_strided_slice %315 {offsets = [0, 128], sizes = [16, 128], strides = [1, 1]} : vector<16x512xf32> to vector<16x128xf32>
    %323 = arith.negf %322 : vector<16x128xf32>
    %324 = math.exp %323 : vector<16x128xf32>
    %cst_92 = arith.constant 1.000000e+00 : f32
    %325 = vector.broadcast %cst_92 : f32 to vector<16x128xf32>
    %326 = arith.addf %325, %324 : vector<16x128xf32>
    %327 = arith.divf %325, %326 : vector<16x128xf32>
    %328 = vector.extract_strided_slice %315 {offsets = [0, 256], sizes = [16, 128], strides = [1, 1]} : vector<16x512xf32> to vector<16x128xf32>
    %329 = math.tanh %328 : vector<16x128xf32>
    %330 = vector.extract_strided_slice %315 {offsets = [0, 384], sizes = [16, 128], strides = [1, 1]} : vector<16x512xf32> to vector<16x128xf32>
    %331 = arith.negf %330 : vector<16x128xf32>
    %332 = math.exp %331 : vector<16x128xf32>
    %cst_93 = arith.constant 1.000000e+00 : f32
    %333 = vector.broadcast %cst_93 : f32 to vector<16x128xf32>
    %334 = arith.addf %333, %332 : vector<16x128xf32>
    %335 = arith.divf %333, %334 : vector<16x128xf32>
    %336 = arith.mulf %327, %272 : vector<16x128xf32>
    %337 = arith.mulf %321, %329 : vector<16x128xf32>
    %338 = arith.addf %336, %337 : vector<16x128xf32>
    %339 = math.tanh %338 : vector<16x128xf32>
    %340 = arith.mulf %335, %339 : vector<16x128xf32>
    %c5_i32 = arith.constant 5 : i32
    %c16_i32_94 = arith.constant 16 : i32
    %341 = arith.muli %c5_i32, %c16_i32_94 : i32
    %342 = tpu.assume_multiple %341, 16 : i32
    %343 = arith.index_cast %342 : i32 to index
    %c0_95 = arith.constant 0 : index
    %344 = vector.load %arg11[%343, %c0_95] : memref<128x512xf32, #tpu.memory_space<vmem>>, vector<16x512xf32>
    %345 = arith.truncf %307 : vector<16x128xf32> to vector<16x128xbf16>
    %c0_96 = arith.constant 0 : index
    %c0_97 = arith.constant 0 : index
    %346 = vector.load %arg3[%c0_96, %c0_97] : memref<128x512xbf16, #tpu.memory_space<vmem>>, vector<128x512xbf16>
    %cst_98 = arith.constant dense<0.000000e+00> : vector<16x512xf32>
    %347 = tpu.matmul %345, %346, %cst_98 {dimension_numbers = #tpu.dot_dimension_numbers<[1], [0], [0], [1], [0, 0, 1, 1], [], []>} : vector<16x128xbf16>, vector<128x512xbf16>, vector<16x512xf32> -> vector<16x512xf32>
    %348 = arith.addf %344, %347 : vector<16x512xf32>
    %349 = vector.extract_strided_slice %348 {offsets = [0, 0], sizes = [16, 128], strides = [1, 1]} : vector<16x512xf32> to vector<16x128xf32>
    %350 = arith.negf %349 : vector<16x128xf32>
    %351 = math.exp %350 : vector<16x128xf32>
    %cst_99 = arith.constant 1.000000e+00 : f32
    %352 = vector.broadcast %cst_99 : f32 to vector<16x128xf32>
    %353 = arith.addf %352, %351 : vector<16x128xf32>
    %354 = arith.divf %352, %353 : vector<16x128xf32>
    %355 = vector.extract_strided_slice %348 {offsets = [0, 128], sizes = [16, 128], strides = [1, 1]} : vector<16x512xf32> to vector<16x128xf32>
    %356 = arith.negf %355 : vector<16x128xf32>
    %357 = math.exp %356 : vector<16x128xf32>
    %cst_100 = arith.constant 1.000000e+00 : f32
    %358 = vector.broadcast %cst_100 : f32 to vector<16x128xf32>
    %359 = arith.addf %358, %357 : vector<16x128xf32>
    %360 = arith.divf %358, %359 : vector<16x128xf32>
    %361 = vector.extract_strided_slice %348 {offsets = [0, 256], sizes = [16, 128], strides = [1, 1]} : vector<16x512xf32> to vector<16x128xf32>
    %362 = math.tanh %361 : vector<16x128xf32>
    %363 = vector.extract_strided_slice %348 {offsets = [0, 384], sizes = [16, 128], strides = [1, 1]} : vector<16x512xf32> to vector<16x128xf32>
    %364 = arith.negf %363 : vector<16x128xf32>
    %365 = math.exp %364 : vector<16x128xf32>
    %cst_101 = arith.constant 1.000000e+00 : f32
    %366 = vector.broadcast %cst_101 : f32 to vector<16x128xf32>
    %367 = arith.addf %366, %365 : vector<16x128xf32>
    %368 = arith.divf %366, %367 : vector<16x128xf32>
    %369 = arith.mulf %360, %305 : vector<16x128xf32>
    %370 = arith.mulf %354, %362 : vector<16x128xf32>
    %371 = arith.addf %369, %370 : vector<16x128xf32>
    %372 = math.tanh %371 : vector<16x128xf32>
    %373 = arith.mulf %368, %372 : vector<16x128xf32>
    %374 = arith.truncf %373 : vector<16x128xf32> to vector<16x128xbf16>
    %c0_102 = arith.constant 0 : index
    %c0_103 = arith.constant 0 : index
    %375 = vector.load %arg5[%c0_102, %c0_103] : memref<128x512xbf16, #tpu.memory_space<vmem>>, vector<128x512xbf16>
    %cst_104 = arith.constant dense<0.000000e+00> : vector<16x512xf32>
    %376 = tpu.matmul %374, %375, %cst_104 {dimension_numbers = #tpu.dot_dimension_numbers<[1], [0], [0], [1], [0, 0, 1, 1], [], []>} : vector<16x128xbf16>, vector<128x512xbf16>, vector<16x512xf32> -> vector<16x512xf32>
    %377 = arith.truncf %340 : vector<16x128xf32> to vector<16x128xbf16>
    %c0_105 = arith.constant 0 : index
    %c0_106 = arith.constant 0 : index
    %378 = vector.load %arg6[%c0_105, %c0_106] : memref<128x512xbf16, #tpu.memory_space<vmem>>, vector<128x512xbf16>
    %cst_107 = arith.constant dense<0.000000e+00> : vector<16x512xf32>
    %379 = tpu.matmul %377, %378, %cst_107 {dimension_numbers = #tpu.dot_dimension_numbers<[1], [0], [0], [1], [0, 0, 1, 1], [], []>} : vector<16x128xbf16>, vector<128x512xbf16>, vector<16x512xf32> -> vector<16x512xf32>
    %380 = arith.addf %376, %379 : vector<16x512xf32>
    %381 = arith.addf %380, %9 : vector<16x512xf32>
    %382 = vector.extract_strided_slice %381 {offsets = [0, 0], sizes = [16, 128], strides = [1, 1]} : vector<16x512xf32> to vector<16x128xf32>
    %383 = arith.negf %382 : vector<16x128xf32>
    %384 = math.exp %383 : vector<16x128xf32>
    %cst_108 = arith.constant 1.000000e+00 : f32
    %385 = vector.broadcast %cst_108 : f32 to vector<16x128xf32>
    %386 = arith.addf %385, %384 : vector<16x128xf32>
    %387 = arith.divf %385, %386 : vector<16x128xf32>
    %388 = vector.extract_strided_slice %381 {offsets = [0, 128], sizes = [16, 128], strides = [1, 1]} : vector<16x512xf32> to vector<16x128xf32>
    %389 = arith.negf %388 : vector<16x128xf32>
    %390 = math.exp %389 : vector<16x128xf32>
    %cst_109 = arith.constant 1.000000e+00 : f32
    %391 = vector.broadcast %cst_109 : f32 to vector<16x128xf32>
    %392 = arith.addf %391, %390 : vector<16x128xf32>
    %393 = arith.divf %391, %392 : vector<16x128xf32>
    %394 = vector.extract_strided_slice %381 {offsets = [0, 256], sizes = [16, 128], strides = [1, 1]} : vector<16x512xf32> to vector<16x128xf32>
    %395 = math.tanh %394 : vector<16x128xf32>
    %396 = vector.extract_strided_slice %381 {offsets = [0, 384], sizes = [16, 128], strides = [1, 1]} : vector<16x512xf32> to vector<16x128xf32>
    %397 = arith.negf %396 : vector<16x128xf32>
    %398 = math.exp %397 : vector<16x128xf32>
    %cst_110 = arith.constant 1.000000e+00 : f32
    %399 = vector.broadcast %cst_110 : f32 to vector<16x128xf32>
    %400 = arith.addf %399, %398 : vector<16x128xf32>
    %401 = arith.divf %399, %400 : vector<16x128xf32>
    %402 = arith.mulf %393, %338 : vector<16x128xf32>
    %403 = arith.mulf %387, %395 : vector<16x128xf32>
    %404 = arith.addf %402, %403 : vector<16x128xf32>
    %405 = math.tanh %404 : vector<16x128xf32>
    %406 = arith.mulf %401, %405 : vector<16x128xf32>
    %c6_i32 = arith.constant 6 : i32
    %c16_i32_111 = arith.constant 16 : i32
    %407 = arith.muli %c6_i32, %c16_i32_111 : i32
    %408 = tpu.assume_multiple %407, 16 : i32
    %409 = arith.index_cast %408 : i32 to index
    %c0_112 = arith.constant 0 : index
    %410 = vector.load %arg11[%409, %c0_112] : memref<128x512xf32, #tpu.memory_space<vmem>>, vector<16x512xf32>
    %411 = arith.truncf %373 : vector<16x128xf32> to vector<16x128xbf16>
    %c0_113 = arith.constant 0 : index
    %c0_114 = arith.constant 0 : index
    %412 = vector.load %arg3[%c0_113, %c0_114] : memref<128x512xbf16, #tpu.memory_space<vmem>>, vector<128x512xbf16>
    %cst_115 = arith.constant dense<0.000000e+00> : vector<16x512xf32>
    %413 = tpu.matmul %411, %412, %cst_115 {dimension_numbers = #tpu.dot_dimension_numbers<[1], [0], [0], [1], [0, 0, 1, 1], [], []>} : vector<16x128xbf16>, vector<128x512xbf16>, vector<16x512xf32> -> vector<16x512xf32>
    %414 = arith.addf %410, %413 : vector<16x512xf32>
    %415 = vector.extract_strided_slice %414 {offsets = [0, 0], sizes = [16, 128], strides = [1, 1]} : vector<16x512xf32> to vector<16x128xf32>
    %416 = arith.negf %415 : vector<16x128xf32>
    %417 = math.exp %416 : vector<16x128xf32>
    %cst_116 = arith.constant 1.000000e+00 : f32
    %418 = vector.broadcast %cst_116 : f32 to vector<16x128xf32>
    %419 = arith.addf %418, %417 : vector<16x128xf32>
    %420 = arith.divf %418, %419 : vector<16x128xf32>
    %421 = vector.extract_strided_slice %414 {offsets = [0, 128], sizes = [16, 128], strides = [1, 1]} : vector<16x512xf32> to vector<16x128xf32>
    %422 = arith.negf %421 : vector<16x128xf32>
    %423 = math.exp %422 : vector<16x128xf32>
    %cst_117 = arith.constant 1.000000e+00 : f32
    %424 = vector.broadcast %cst_117 : f32 to vector<16x128xf32>
    %425 = arith.addf %424, %423 : vector<16x128xf32>
    %426 = arith.divf %424, %425 : vector<16x128xf32>
    %427 = vector.extract_strided_slice %414 {offsets = [0, 256], sizes = [16, 128], strides = [1, 1]} : vector<16x512xf32> to vector<16x128xf32>
    %428 = math.tanh %427 : vector<16x128xf32>
    %429 = vector.extract_strided_slice %414 {offsets = [0, 384], sizes = [16, 128], strides = [1, 1]} : vector<16x512xf32> to vector<16x128xf32>
    %430 = arith.negf %429 : vector<16x128xf32>
    %431 = math.exp %430 : vector<16x128xf32>
    %cst_118 = arith.constant 1.000000e+00 : f32
    %432 = vector.broadcast %cst_118 : f32 to vector<16x128xf32>
    %433 = arith.addf %432, %431 : vector<16x128xf32>
    %434 = arith.divf %432, %433 : vector<16x128xf32>
    %435 = arith.mulf %426, %371 : vector<16x128xf32>
    %436 = arith.mulf %420, %428 : vector<16x128xf32>
    %437 = arith.addf %435, %436 : vector<16x128xf32>
    %438 = math.tanh %437 : vector<16x128xf32>
    %439 = arith.mulf %434, %438 : vector<16x128xf32>
    %440 = arith.truncf %439 : vector<16x128xf32> to vector<16x128xbf16>
    %c0_119 = arith.constant 0 : index
    %c0_120 = arith.constant 0 : index
    %441 = vector.load %arg5[%c0_119, %c0_120] : memref<128x512xbf16, #tpu.memory_space<vmem>>, vector<128x512xbf16>
    %cst_121 = arith.constant dense<0.000000e+00> : vector<16x512xf32>
    %442 = tpu.matmul %440, %441, %cst_121 {dimension_numbers = #tpu.dot_dimension_numbers<[1], [0], [0], [1], [0, 0, 1, 1], [], []>} : vector<16x128xbf16>, vector<128x512xbf16>, vector<16x512xf32> -> vector<16x512xf32>
    %443 = arith.truncf %406 : vector<16x128xf32> to vector<16x128xbf16>
    %c0_122 = arith.constant 0 : index
    %c0_123 = arith.constant 0 : index
    %444 = vector.load %arg6[%c0_122, %c0_123] : memref<128x512xbf16, #tpu.memory_space<vmem>>, vector<128x512xbf16>
    %cst_124 = arith.constant dense<0.000000e+00> : vector<16x512xf32>
    %445 = tpu.matmul %443, %444, %cst_124 {dimension_numbers = #tpu.dot_dimension_numbers<[1], [0], [0], [1], [0, 0, 1, 1], [], []>} : vector<16x128xbf16>, vector<128x512xbf16>, vector<16x512xf32> -> vector<16x512xf32>
    %446 = arith.addf %442, %445 : vector<16x512xf32>
    %447 = arith.addf %446, %9 : vector<16x512xf32>
    %448 = vector.extract_strided_slice %447 {offsets = [0, 0], sizes = [16, 128], strides = [1, 1]} : vector<16x512xf32> to vector<16x128xf32>
    %449 = arith.negf %448 : vector<16x128xf32>
    %450 = math.exp %449 : vector<16x128xf32>
    %cst_125 = arith.constant 1.000000e+00 : f32
    %451 = vector.broadcast %cst_125 : f32 to vector<16x128xf32>
    %452 = arith.addf %451, %450 : vector<16x128xf32>
    %453 = arith.divf %451, %452 : vector<16x128xf32>
    %454 = vector.extract_strided_slice %447 {offsets = [0, 128], sizes = [16, 128], strides = [1, 1]} : vector<16x512xf32> to vector<16x128xf32>
    %455 = arith.negf %454 : vector<16x128xf32>
    %456 = math.exp %455 : vector<16x128xf32>
    %cst_126 = arith.constant 1.000000e+00 : f32
    %457 = vector.broadcast %cst_126 : f32 to vector<16x128xf32>
    %458 = arith.addf %457, %456 : vector<16x128xf32>
    %459 = arith.divf %457, %458 : vector<16x128xf32>
    %460 = vector.extract_strided_slice %447 {offsets = [0, 256], sizes = [16, 128], strides = [1, 1]} : vector<16x512xf32> to vector<16x128xf32>
    %461 = math.tanh %460 : vector<16x128xf32>
    %462 = vector.extract_strided_slice %447 {offsets = [0, 384], sizes = [16, 128], strides = [1, 1]} : vector<16x512xf32> to vector<16x128xf32>
    %463 = arith.negf %462 : vector<16x128xf32>
    %464 = math.exp %463 : vector<16x128xf32>
    %cst_127 = arith.constant 1.000000e+00 : f32
    %465 = vector.broadcast %cst_127 : f32 to vector<16x128xf32>
    %466 = arith.addf %465, %464 : vector<16x128xf32>
    %467 = arith.divf %465, %466 : vector<16x128xf32>
    %468 = arith.mulf %459, %404 : vector<16x128xf32>
    %469 = arith.mulf %453, %461 : vector<16x128xf32>
    %470 = arith.addf %468, %469 : vector<16x128xf32>
    %471 = math.tanh %470 : vector<16x128xf32>
    %472 = arith.mulf %467, %471 : vector<16x128xf32>
    %c7_i32 = arith.constant 7 : i32
    %c16_i32_128 = arith.constant 16 : i32
    %473 = arith.muli %c7_i32, %c16_i32_128 : i32
    %474 = tpu.assume_multiple %473, 16 : i32
    %475 = arith.index_cast %474 : i32 to index
    %c0_129 = arith.constant 0 : index
    %476 = vector.load %arg11[%475, %c0_129] : memref<128x512xf32, #tpu.memory_space<vmem>>, vector<16x512xf32>
    %477 = arith.truncf %439 : vector<16x128xf32> to vector<16x128xbf16>
    %c0_130 = arith.constant 0 : index
    %c0_131 = arith.constant 0 : index
    %478 = vector.load %arg3[%c0_130, %c0_131] : memref<128x512xbf16, #tpu.memory_space<vmem>>, vector<128x512xbf16>
    %cst_132 = arith.constant dense<0.000000e+00> : vector<16x512xf32>
    %479 = tpu.matmul %477, %478, %cst_132 {dimension_numbers = #tpu.dot_dimension_numbers<[1], [0], [0], [1], [0, 0, 1, 1], [], []>} : vector<16x128xbf16>, vector<128x512xbf16>, vector<16x512xf32> -> vector<16x512xf32>
    %480 = arith.addf %476, %479 : vector<16x512xf32>
    %481 = vector.extract_strided_slice %480 {offsets = [0, 0], sizes = [16, 128], strides = [1, 1]} : vector<16x512xf32> to vector<16x128xf32>
    %482 = arith.negf %481 : vector<16x128xf32>
    %483 = math.exp %482 : vector<16x128xf32>
    %cst_133 = arith.constant 1.000000e+00 : f32
    %484 = vector.broadcast %cst_133 : f32 to vector<16x128xf32>
    %485 = arith.addf %484, %483 : vector<16x128xf32>
    %486 = arith.divf %484, %485 : vector<16x128xf32>
    %487 = vector.extract_strided_slice %480 {offsets = [0, 128], sizes = [16, 128], strides = [1, 1]} : vector<16x512xf32> to vector<16x128xf32>
    %488 = arith.negf %487 : vector<16x128xf32>
    %489 = math.exp %488 : vector<16x128xf32>
    %cst_134 = arith.constant 1.000000e+00 : f32
    %490 = vector.broadcast %cst_134 : f32 to vector<16x128xf32>
    %491 = arith.addf %490, %489 : vector<16x128xf32>
    %492 = arith.divf %490, %491 : vector<16x128xf32>
    %493 = vector.extract_strided_slice %480 {offsets = [0, 256], sizes = [16, 128], strides = [1, 1]} : vector<16x512xf32> to vector<16x128xf32>
    %494 = math.tanh %493 : vector<16x128xf32>
    %495 = vector.extract_strided_slice %480 {offsets = [0, 384], sizes = [16, 128], strides = [1, 1]} : vector<16x512xf32> to vector<16x128xf32>
    %496 = arith.negf %495 : vector<16x128xf32>
    %497 = math.exp %496 : vector<16x128xf32>
    %cst_135 = arith.constant 1.000000e+00 : f32
    %498 = vector.broadcast %cst_135 : f32 to vector<16x128xf32>
    %499 = arith.addf %498, %497 : vector<16x128xf32>
    %500 = arith.divf %498, %499 : vector<16x128xf32>
    %501 = arith.mulf %492, %437 : vector<16x128xf32>
    %502 = arith.mulf %486, %494 : vector<16x128xf32>
    %503 = arith.addf %501, %502 : vector<16x128xf32>
    %504 = math.tanh %503 : vector<16x128xf32>
    %505 = arith.mulf %500, %504 : vector<16x128xf32>
    %506 = arith.truncf %505 : vector<16x128xf32> to vector<16x128xbf16>
    %c0_136 = arith.constant 0 : index
    %c0_137 = arith.constant 0 : index
    %507 = vector.load %arg5[%c0_136, %c0_137] : memref<128x512xbf16, #tpu.memory_space<vmem>>, vector<128x512xbf16>
    %cst_138 = arith.constant dense<0.000000e+00> : vector<16x512xf32>
    %508 = tpu.matmul %506, %507, %cst_138 {dimension_numbers = #tpu.dot_dimension_numbers<[1], [0], [0], [1], [0, 0, 1, 1], [], []>} : vector<16x128xbf16>, vector<128x512xbf16>, vector<16x512xf32> -> vector<16x512xf32>
    %509 = arith.truncf %472 : vector<16x128xf32> to vector<16x128xbf16>
    %c0_139 = arith.constant 0 : index
    %c0_140 = arith.constant 0 : index
    %510 = vector.load %arg6[%c0_139, %c0_140] : memref<128x512xbf16, #tpu.memory_space<vmem>>, vector<128x512xbf16>
    %cst_141 = arith.constant dense<0.000000e+00> : vector<16x512xf32>
    %511 = tpu.matmul %509, %510, %cst_141 {dimension_numbers = #tpu.dot_dimension_numbers<[1], [0], [0], [1], [0, 0, 1, 1], [], []>} : vector<16x128xbf16>, vector<128x512xbf16>, vector<16x512xf32> -> vector<16x512xf32>
    %512 = arith.addf %508, %511 : vector<16x512xf32>
    %513 = arith.addf %512, %9 : vector<16x512xf32>
    %514 = vector.extract_strided_slice %513 {offsets = [0, 0], sizes = [16, 128], strides = [1, 1]} : vector<16x512xf32> to vector<16x128xf32>
    %515 = arith.negf %514 : vector<16x128xf32>
    %516 = math.exp %515 : vector<16x128xf32>
    %cst_142 = arith.constant 1.000000e+00 : f32
    %517 = vector.broadcast %cst_142 : f32 to vector<16x128xf32>
    %518 = arith.addf %517, %516 : vector<16x128xf32>
    %519 = arith.divf %517, %518 : vector<16x128xf32>
    %520 = vector.extract_strided_slice %513 {offsets = [0, 128], sizes = [16, 128], strides = [1, 1]} : vector<16x512xf32> to vector<16x128xf32>
    %521 = arith.negf %520 : vector<16x128xf32>
    %522 = math.exp %521 : vector<16x128xf32>
    %cst_143 = arith.constant 1.000000e+00 : f32
    %523 = vector.broadcast %cst_143 : f32 to vector<16x128xf32>
    %524 = arith.addf %523, %522 : vector<16x128xf32>
    %525 = arith.divf %523, %524 : vector<16x128xf32>
    %526 = vector.extract_strided_slice %513 {offsets = [0, 256], sizes = [16, 128], strides = [1, 1]} : vector<16x512xf32> to vector<16x128xf32>
    %527 = math.tanh %526 : vector<16x128xf32>
    %528 = vector.extract_strided_slice %513 {offsets = [0, 384], sizes = [16, 128], strides = [1, 1]} : vector<16x512xf32> to vector<16x128xf32>
    %529 = arith.negf %528 : vector<16x128xf32>
    %530 = math.exp %529 : vector<16x128xf32>
    %cst_144 = arith.constant 1.000000e+00 : f32
    %531 = vector.broadcast %cst_144 : f32 to vector<16x128xf32>
    %532 = arith.addf %531, %530 : vector<16x128xf32>
    %533 = arith.divf %531, %532 : vector<16x128xf32>
    %534 = arith.mulf %525, %470 : vector<16x128xf32>
    %535 = arith.mulf %519, %527 : vector<16x128xf32>
    %536 = arith.addf %534, %535 : vector<16x128xf32>
    %537 = math.tanh %536 : vector<16x128xf32>
    %538 = arith.mulf %533, %537 : vector<16x128xf32>
    %c8_i32 = arith.constant 8 : i32
    %539 = arith.truncf %538 : vector<16x128xf32> to vector<16x128xbf16>
    %c0_145 = arith.constant 0 : index
    %c0_146 = arith.constant 0 : index
    %540 = vector.load %arg8[%c0_145, %c0_146] : memref<128x128xbf16, #tpu.memory_space<vmem>>, vector<128x128xbf16>
    %cst_147 = arith.constant dense<0.000000e+00> : vector<16x128xf32>
    %541 = tpu.matmul %539, %540, %cst_147 {dimension_numbers = #tpu.dot_dimension_numbers<[1], [0], [0], [1], [0, 0, 1, 1], [], []>} : vector<16x128xbf16>, vector<128x128xbf16>, vector<16x128xf32> -> vector<16x128xf32>
    %c0_148 = arith.constant 0 : index
    %c0_149 = arith.constant 0 : index
    %542 = vector.load %arg9[%c0_148, %c0_149] : memref<1x128xf32, #tpu.memory_space<vmem>>, vector<1x128xf32>
    %543 = vector.broadcast %542 : vector<1x128xf32> to vector<16x128xf32>
    %544 = arith.addf %541, %543 : vector<16x128xf32>
    %c0_150 = arith.constant 0 : index
    %c0_151 = arith.constant 0 : index
    %545 = vector.load %arg10[%c0_150, %c0_151] : memref<16x128xf32, #tpu.memory_space<vmem>>, vector<16x128xf32>
    tpu.vector_store %arg10[%c0_150, %c0_151], %544 {strides = array<i32>} : memref<16x128xf32, #tpu.memory_space<vmem>>, vector<16x128xf32>,
    return
  }
  func.func @transform_0(%arg0: i32) -> (i32, i32) {
    %c0_i32 = arith.constant 0 : i32
    %c0_i32_0 = arith.constant 0 : i32
    return %arg0, %c0_i32 : i32, i32
  }
  func.func @transform_1(%arg0: i32) -> (i32, i32) {
    %c0_i32 = arith.constant 0 : i32
    %c0_i32_0 = arith.constant 0 : i32
    %c0_i32_1 = arith.constant 0 : i32
    return %c0_i32, %c0_i32_0 : i32, i32
  }
  func.func @transform_2(%arg0: i32) -> (i32, i32) {
    %c0_i32 = arith.constant 0 : i32
    %c0_i32_0 = arith.constant 0 : i32
    %c0_i32_1 = arith.constant 0 : i32
    return %c0_i32, %c0_i32_0 : i32, i32
  }
  func.func @transform_3(%arg0: i32) -> (i32, i32) {
    %c0_i32 = arith.constant 0 : i32
    %c0_i32_0 = arith.constant 0 : i32
    %c0_i32_1 = arith.constant 0 : i32
    return %c0_i32, %c0_i32_0 : i32, i32
  }
  func.func @transform_4(%arg0: i32) -> (i32, i32) {
    %c0_i32 = arith.constant 0 : i32
    %c0_i32_0 = arith.constant 0 : i32
    %c0_i32_1 = arith.constant 0 : i32
    return %c0_i32, %c0_i32_0 : i32, i32
  }
  func.func @transform_5(%arg0: i32) -> (i32, i32) {
    %c0_i32 = arith.constant 0 : i32
    %c0_i32_0 = arith.constant 0 : i32
    %c0_i32_1 = arith.constant 0 : i32
    return %c0_i32, %c0_i32_0 : i32, i32
  }
  func.func @transform_6(%arg0: i32) -> (i32, i32) {
    %c0_i32 = arith.constant 0 : i32
    %c0_i32_0 = arith.constant 0 : i32
    %c0_i32_1 = arith.constant 0 : i32
    return %c0_i32, %c0_i32_0 : i32, i32
  }
  func.func @transform_7(%arg0: i32) -> (i32, i32) {
    %c0_i32 = arith.constant 0 : i32
    %c0_i32_0 = arith.constant 0 : i32
    %c0_i32_1 = arith.constant 0 : i32
    return %c0_i32, %c0_i32_0 : i32, i32
  }
  func.func @transform_8(%arg0: i32) -> (i32, i32) {
    %c0_i32 = arith.constant 0 : i32
    %c0_i32_0 = arith.constant 0 : i32
    %c0_i32_1 = arith.constant 0 : i32
    return %c0_i32, %c0_i32_0 : i32, i32
  }
  func.func @transform_9(%arg0: i32) -> (i32, i32) {
    %c0_i32 = arith.constant 0 : i32
    %c0_i32_0 = arith.constant 0 : i32
    return %arg0, %c0_i32 : i32, i32
  }
}

</mosaic_0001>

<llo_original>
// kernel: tpu_custom_call.1
$region0: #{tpu_custom_call.1}
  #allocation0 [shape = 'u32[]', space=smem, size = 0x4, offset = 0x4, fixed_abs, tag = 'smem constant byte address 0x4 - core index']
  #allocation1 [shape = 'u32[144,128]{1,0:T(1,128)}', space=vmem, size = 0x12000, scoped, tag = 'internal scratch']
  #allocation2 [shape = 'f32[128,512]{1,0:T(8,128)}', space=vmem, size = 0x40000, scoped, tag = 'scratch operand']
  %s0 = inlined_call_operand.vmem [shape: bf16[128,32], index: 0, kind: input, shape index: {}]
  %s1 = inlined_call_operand.vmem [shape: bf16[32,512], index: 1, kind: input, shape index: {}]
  %s2 = inlined_call_operand.hbm [shape: bf16[128,512], index: 2, kind: input, shape index: {}]
  %s3 = inlined_call_operand.vmem [shape: f32[1,512], index: 3, kind: input, shape index: {}]
  %s4 = inlined_call_operand.hbm [shape: bf16[128,512], index: 4, kind: input, shape index: {}]
  %s5 = inlined_call_operand.hbm [shape: bf16[128,512], index: 5, kind: input, shape index: {}]
  %s6 = inlined_call_operand.vmem [shape: f32[1,512], index: 6, kind: input, shape index: {}]
  %s7 = inlined_call_operand.hbm [shape: bf16[128,128], index: 7, kind: input, shape index: {}]
  %s8 = inlined_call_operand.vmem [shape: f32[1,128], index: 8, kind: input, shape index: {}]
  %s9 = inlined_call_operand.hbm [shape: f32[16,128], index: 9, kind: output, shape index: {}]
  %s10 = sld [smem:[#allocation0]]
  $region62: #{tpu_custom_call.1} parent=0
    _
  %s12 = ssub.s32 1, %s10
  %s13 = scalar_select 0, %s12, %s10
  $region1: #{tpu_custom_call.1} parent=0
    #allocation3 [shape = 'u8[131072]{0}', space=vmem, size = 0x20000, scoped, tag = 'input window, operand 2, single buffered']
    #allocation4 [shape = 's32[1]{0}', space=sflag, size = 0x4, scoped, tag = 'scoped memory for tpu_custom_call.1']
    #allocation5 [shape = 's32[1]{0}', space=sflag, size = 0x4, scoped, tag = 'scoped memory for tpu_custom_call.1']
    #allocation6 [shape = 'u8[131072]{0}', space=vmem, size = 0x20000, scoped, tag = 'input window, operand 4, single buffered']
    #allocation7 [shape = 's32[1]{0}', space=sflag, size = 0x4, scoped, tag = 'scoped memory for tpu_custom_call.1']
    #allocation8 [shape = 'u8[131072]{0}', space=vmem, size = 0x20000, scoped, tag = 'input window, operand 5, single buffered']
    #allocation9 [shape = 'u8[32768]{0}', space=vmem, size = 0x8000, scoped, tag = 'input window, operand 7, single buffered']
    #allocation10 [shape = 's32[1]{0}', space=sflag, size = 0x4, scoped, tag = 'scoped memory for tpu_custom_call.1']
    #allocation11 [shape = 'u8[8192]{0}', space=vmem, size = 0x2000, scoped, tag = 'output window, operand 0, single buffered']
    %14 = vsyncpa [#allocation4], 0
    %15 = vsyncpa [#allocation7], 0
    %16 = vsyncpa [#allocation10], 0
    %17 = vsyncpa [#allocation5], 0
    // Predicated region
    $region2: #{tpu_custom_call.1} parent=1 // pred_check
      _
    $region3: #{tpu_custom_call.1} parent=1 // pred_check_branch
      %19 = sbr.rel (0) target = $region5
    $region4: #{tpu_custom_call.1} parent=1 // pred_region
      _
    $region5: #{tpu_custom_call.1} parent=1 // pred_fallthru
      _
    // Predicated region
    $region6: #{tpu_custom_call.1} parent=1 // pred_check
      _
    $region7: #{tpu_custom_call.1} parent=1 // pred_check_branch
      %21 = sbr.rel (0) target = $region9
    $region8: #{tpu_custom_call.1} parent=1 // pred_region
      _
    $region9: #{tpu_custom_call.1} parent=1 // pred_fallthru
      _
    // Predicated region
    $region10: #{tpu_custom_call.1} parent=1 // pred_check
      _
    $region11: #{tpu_custom_call.1} parent=1 // pred_check_branch
      %23 = sbr.rel (0) target = $region13
    $region12: #{tpu_custom_call.1} parent=1 // pred_region
      %s25 = ssub.s32 4096, 4096
      %26 = vsyncadd [#allocation4], %s25
      %s27 = sshll.u32 [#allocation3], 4
      %s28 = int_to_ptr.vmem [resolvable:$true] %s27
      %33 = dma.hbm_to_vmem [thread:$0]  %s2, 4096, %s28, [#allocation4], 256, 256, 16
    $region13: #{tpu_custom_call.1} parent=1 // pred_fallthru
      _
    // Predicated region
    $region14: #{tpu_custom_call.1} parent=1 // pred_check
      _
    $region15: #{tpu_custom_call.1} parent=1 // pred_check_branch
      %35 = sbr.rel (0) target = $region17
    $region16: #{tpu_custom_call.1} parent=1 // pred_region
      _
    $region17: #{tpu_custom_call.1} parent=1 // pred_fallthru
      _
    // Predicated region
    $region18: #{tpu_custom_call.1} parent=1 // pred_check
      _
    $region19: #{tpu_custom_call.1} parent=1 // pred_check_branch
      %37 = sbr.rel (0) target = $region21
    $region20: #{tpu_custom_call.1} parent=1 // pred_region
      %s39 = ssub.s32 4096, 4096
      %40 = vsyncadd [#allocation7], %s39
      %s41 = sshll.u32 [#allocation6], 4
      %s42 = int_to_ptr.vmem [resolvable:$true] %s41
      %47 = dma.hbm_to_vmem [thread:$0]  %s4, 4096, %s42, [#allocation7], 256, 256, 16
    $region21: #{tpu_custom_call.1} parent=1 // pred_fallthru
      _
    // Predicated region
    $region22: #{tpu_custom_call.1} parent=1 // pred_check
      _
    $region23: #{tpu_custom_call.1} parent=1 // pred_check_branch
      %49 = sbr.rel (0) target = $region25
    $region24: #{tpu_custom_call.1} parent=1 // pred_region
      %s51 = ssub.s32 4096, 4096
      %52 = vsyncadd [#allocation7], %s51
      %s53 = sshll.u32 [#allocation8], 4
      %s54 = int_to_ptr.vmem [resolvable:$true] %s53
      %59 = dma.hbm_to_vmem [thread:$0]  %s5, 4096, %s54, [#allocation7], 256, 256, 16
    $region25: #{tpu_custom_call.1} parent=1 // pred_fallthru
      _
    // Predicated region
    $region26: #{tpu_custom_call.1} parent=1 // pred_check
      _
    $region27: #{tpu_custom_call.1} parent=1 // pred_check_branch
      %61 = sbr.rel (0) target = $region29
    $region28: #{tpu_custom_call.1} parent=1 // pred_region
      _
    $region29: #{tpu_custom_call.1} parent=1 // pred_fallthru
      _
    // Predicated region
    $region30: #{tpu_custom_call.1} parent=1 // pred_check
      _
    $region31: #{tpu_custom_call.1} parent=1 // pred_check_branch
      %63 = sbr.rel (0) target = $region33
    $region32: #{tpu_custom_call.1} parent=1 // pred_region
      %s65 = ssub.s32 1024, 1024
      %66 = vsyncadd [#allocation10], %s65
      %s67 = sshll.u32 [#allocation9], 4
      %s68 = int_to_ptr.vmem [resolvable:$true] %s67
      %73 = dma.hbm_to_vmem [thread:$0]  %s7, 1024, %s68, [#allocation10], 64, 64, 4
    $region33: #{tpu_custom_call.1} parent=1 // pred_fallthru
      _
    // Predicated region
    $region34: #{tpu_custom_call.1} parent=1 // pred_check
      _
    $region35: #{tpu_custom_call.1} parent=1 // pred_check_branch
      %75 = sbr.rel (0) target = $region37
    $region36: #{tpu_custom_call.1} parent=1 // pred_region
      _
    $region37: #{tpu_custom_call.1} parent=1 // pred_fallthru
      _
    // Predicated region
    $region38: #{tpu_custom_call.1} parent=1 // pred_check
      _
    $region39: #{tpu_custom_call.1} parent=1 // pred_check_branch
      %77 = sbr.rel (0) target = $region41
    $region40: #{tpu_custom_call.1} parent=1 // pred_region
      %78 = dma.done [#allocation4], 4096
    $region41: #{tpu_custom_call.1} parent=1 // pred_fallthru
      _
    // Predicated region
    $region42: #{tpu_custom_call.1} parent=1 // pred_check
      _
    $region43: #{tpu_custom_call.1} parent=1 // pred_check_branch
      %80 = sbr.rel (0) target = $region45
    $region44: #{tpu_custom_call.1} parent=1 // pred_region
      %81 = dma.done [#allocation7], 4096
    $region45: #{tpu_custom_call.1} parent=1 // pred_fallthru
      _
    // Predicated region
    $region46: #{tpu_custom_call.1} parent=1 // pred_check
      _
    $region47: #{tpu_custom_call.1} parent=1 // pred_check_branch
      %83 = sbr.rel (0) target = $region49
    $region48: #{tpu_custom_call.1} parent=1 // pred_region
      %84 = dma.done [#allocation7], 4096
    $region49: #{tpu_custom_call.1} parent=1 // pred_fallthru
      _
    // Predicated region
    $region50: #{tpu_custom_call.1} parent=1 // pred_check
      _
    $region51: #{tpu_custom_call.1} parent=1 // pred_check_branch
      %86 = sbr.rel (0) target = $region53
    $region52: #{tpu_custom_call.1} parent=1 // pred_region
      %87 = dma.done [#allocation10], 1024
    $region53: #{tpu_custom_call.1} parent=1 // pred_fallthru
      _
    %v89 = vld [vmem:[%s0] sm:$0xf]
    %v90 = vld [vmem:[%s0 + $0x4] sm:$0xf]
    %v91 = vld [vmem:[%s0 + $0x8] sm:$0xf]
    %v92 = vld [vmem:[%s0 + $0xc] sm:$0xf]
    %v93 = vld [vmem:[%s0 + $0x10] sm:$0xf]
    %v94 = vld [vmem:[%s0 + $0x14] sm:$0xf]
    %v95 = vld [vmem:[%s0 + $0x18] sm:$0xf]
    %v96 = vld [vmem:[%s0 + $0x1c] sm:$0xf]
    %v97 = vld [vmem:[%s0 + $0x20] sm:$0xf]
    %v98 = vld [vmem:[%s0 + $0x24] sm:$0xf]
    %v99 = vld [vmem:[%s0 + $0x28] sm:$0xf]
    %v100 = vld [vmem:[%s0 + $0x2c] sm:$0xf]
    %v101 = vld [vmem:[%s0 + $0x30] sm:$0xf]
    %v102 = vld [vmem:[%s0 + $0x34] sm:$0xf]
    %v103 = vld [vmem:[%s0 + $0x38] sm:$0xf]
    %v104 = vld [vmem:[%s0 + $0x3c] sm:$0xf]
    %v105 = vld [vmem:[%s1] sm:$0xff]
    %v106 = vld [vmem:[%s1 + $0x8] sm:$0xff]
    %v107 = vld [vmem:[%s1 + $0x10] sm:$0xff]
    %v108 = vld [vmem:[%s1 + $0x18] sm:$0xff]
    %v109 = vld [vmem:[%s1 + $0x20] sm:$0xff]
    %v110 = vld [vmem:[%s1 + $0x28] sm:$0xff]
    %v111 = vld [vmem:[%s1 + $0x30] sm:$0xff]
    %v112 = vld [vmem:[%s1 + $0x38] sm:$0xff]
    %v113 = vld [vmem:[%s3] sm:$0xf]
    %v115 = vlaneseq
    %v116 = vshrl.u32 %v115, 7
    %v117 = vsub.s32 0, %v116
    %v118 = vrot.slane %v113, %v117
    %v119 = vlaneseq
    %v120 = vshrl.u32 %v119, 7
    %v121 = vsub.s32 1, %v120
    %v122 = vrot.slane %v113, %v121
    %v123 = vlaneseq
    %v124 = vshrl.u32 %v123, 7
    %v125 = vsub.s32 2, %v124
    %v126 = vrot.slane %v113, %v125
    %v127 = vlaneseq
    %v128 = vshrl.u32 %v127, 7
    %v129 = vsub.s32 3, %v128
    %v130 = vrot.slane %v113, %v129
    %v151 = vunpack.c.l.b16 %v89
    %v152 = vunpack.c.l.b16 %v90
    %v153 = vunpack.c.l.b16 %v91
    %v154 = vunpack.c.l.b16 %v92
    %v155 = vunpack.c.l.b16 %v93
    %v156 = vunpack.c.l.b16 %v94
    %v157 = vunpack.c.l.b16 %v95
    %v158 = vunpack.c.l.b16 %v96
    %v159 = vunpack.c.l.b16 %v97
    %v160 = vunpack.c.l.b16 %v98
    %v161 = vunpack.c.l.b16 %v99
    %v162 = vunpack.c.l.b16 %v100
    %v163 = vunpack.c.l.b16 %v101
    %v164 = vunpack.c.l.b16 %v102
    %v165 = vunpack.c.l.b16 %v103
    %v166 = vunpack.c.l.b16 %v104
    %v167 = vpack.c.b16 %v152, %v151
    %v168 = vpack.c.b16 %v154, %v153
    %v169 = vpack.c.b16 %v156, %v155
    %v170 = vpack.c.b16 %v158, %v157
    %v171 = vpack.c.b16 %v160, %v159
    %v172 = vpack.c.b16 %v162, %v161
    %v173 = vpack.c.b16 %v164, %v163
    %v174 = vpack.c.b16 %v166, %v165
    %v183 = vunpack.c.l.b16 %v105
    %v184 = vunpack.c.h.b16 %v105
    %v185 = vunpack.c.l.b16 %v106
    %v186 = vunpack.c.h.b16 %v106
    %v187 = vunpack.c.l.b16 %v107
    %v188 = vunpack.c.h.b16 %v107
    %v189 = vunpack.c.l.b16 %v108
    %v190 = vunpack.c.h.b16 %v108
    %v191 = vunpack.c.l.b16 %v109
    %v192 = vunpack.c.h.b16 %v109
    %v193 = vunpack.c.l.b16 %v110
    %v194 = vunpack.c.h.b16 %v110
    %v195 = vunpack.c.l.b16 %v111
    %v196 = vunpack.c.h.b16 %v111
    %v197 = vunpack.c.l.b16 %v112
    %v198 = vunpack.c.h.b16 %v112
    %v199 = vpack.c.b16 %v187, %v183
    %v200 = vpack.c.b16 %v188, %v184
    %v201 = vpack.c.b16 %v189, %v185
    %v202 = vpack.c.b16 %v190, %v186
    %v203 = vpack.c.b16 %v195, %v191
    %v204 = vpack.c.b16 %v196, %v192
    %v205 = vpack.c.b16 %v197, %v193
    %v206 = vpack.c.b16 %v198, %v194
    %vm215 = vcmask 261120
    %v217 = vsel %vm215, %v167, 0
    %v220 = vsel %vm215, %v168, 0
    %v223 = vsel %vm215, %v169, 0
    %v226 = vsel %vm215, %v170, 0
    %v229 = vsel %vm215, %v171, 0
    %v232 = vsel %vm215, %v172, 0
    %v235 = vsel %vm215, %v173, 0
    %v238 = vsel %vm215, %v174, 0
    %240 = vmatprep.subr.bf16.mxu0 %v200
    %241 = vmatpush1.bf16.msra.mxu0 %v199
    %242 = vmatprep.subr.bf16.mxu0 %v204
    %243 = vmatpush1.bf16.msra.mxu0 %v203
    %244 = vmatprep.subr.bf16.mxu0 0
    %245 = vmatpush1.bf16.msra.mxu0 0
    %246 = vmatprep.subr.bf16.mxu0 0
    %247 = vmatpush1.bf16.msra.mxu0 0
    %248 = vmatprep.subr.bf16.mxu0 0
    %249 = vmatpush1.bf16.msra.mxu0 0
    %250 = vmatprep.subr.bf16.mxu0 0
    %251 = vmatpush1.bf16.msra.mxu0 0
    %252 = vmatprep.subr.bf16.mxu0 0
    %253 = vmatpush1.bf16.msra.mxu0 0
    %254 = vmatprep.subr.bf16.mxu0 0
    %255 = vmatpush1.bf16.msra.mxu0 0
    %256 = vmatprep.subr.bf16.mxu0 0
    %257 = vmatpush1.bf16.msra.mxu0 0
    %258 = vmatprep.subr.bf16.mxu0 0
    %259 = vmatpush1.bf16.msra.mxu0 0
    %260 = vmatprep.subr.bf16.mxu0 0
    %261 = vmatpush1.bf16.msra.mxu0 0
    %262 = vmatprep.subr.bf16.mxu0 0
    %263 = vmatpush1.bf16.msra.mxu0 0
    %264 = vmatprep.subr.bf16.mxu0 0
    %265 = vmatpush1.bf16.msra.mxu0 0
    %266 = vmatprep.subr.bf16.mxu0 0
    %267 = vmatpush1.bf16.msra.mxu0 0
    %268 = vmatprep.subr.bf16.mxu0 0
    %269 = vmatpush1.bf16.msra.mxu0 0
    %270 = vmatprep.subr.bf16.mxu0 0
    %271 = vmatpush1.bf16.msra.mxu0 0
    %272 = vmatprep.mubr.bf16.mxu0 0
    %273 = vmatmul.mubr.bf16.gmra.mrb[0].mxu0 %v217
    %v274 = vpop.f32.mrb[0].mxu0
    %v275 = vadd.f32 %v118, %v274
    %v276 = vpop.f32.mrb[0].mxu0
    %v277 = vadd.f32 %v122, %v276
    %v278 = vpop.f32.mrb[0].mxu0
    %v279 = vadd.f32 %v118, %v278
    %v280 = vpop.f32.mrb[0].mxu0
    %v281 = vadd.f32 %v122, %v280
    %282 = vmatprep.mubr.bf16.mxu0 0
    %283 = vmatmul.mubr.bf16.gmra.mrb[0].mxu0 %v220
    %v284 = vpop.f32.mrb[0].mxu0
    %v285 = vadd.f32 %v118, %v284
    %v286 = vpop.f32.mrb[0].mxu0
    %v287 = vadd.f32 %v122, %v286
    %v288 = vpop.f32.mrb[0].mxu0
    %v289 = vadd.f32 %v118, %v288
    %v290 = vpop.f32.mrb[0].mxu0
    %v291 = vadd.f32 %v122, %v290
    %292 = vmatprep.mubr.bf16.mxu0 0
    %293 = vmatmul.mubr.bf16.gmra.mrb[0].mxu0 %v223
    %v294 = vpop.f32.mrb[0].mxu0
    %v295 = vadd.f32 %v118, %v294
    %v296 = vpop.f32.mrb[0].mxu0
    %v297 = vadd.f32 %v122, %v296
    %v298 = vpop.f32.mrb[0].mxu0
    %v299 = vadd.f32 %v118, %v298
    %v300 = vpop.f32.mrb[0].mxu0
    %v301 = vadd.f32 %v122, %v300
    %302 = vmatprep.mubr.bf16.mxu0 0
    %303 = vmatmul.mubr.bf16.gmra.mrb[0].mxu0 %v226
    %v304 = vpop.f32.mrb[0].mxu0
    %v305 = vadd.f32 %v118, %v304
    %v306 = vpop.f32.mrb[0].mxu0
    %v307 = vadd.f32 %v122, %v306
    %v308 = vpop.f32.mrb[0].mxu0
    %v309 = vadd.f32 %v118, %v308
    %v310 = vpop.f32.mrb[0].mxu0
    %v311 = vadd.f32 %v122, %v310
    %312 = vmatprep.mubr.bf16.mxu0 0
    %313 = vmatmul.mubr.bf16.gmra.mrb[0].mxu0 %v229
    %v314 = vpop.f32.mrb[0].mxu0
    %v315 = vadd.f32 %v118, %v314
    %v316 = vpop.f32.mrb[0].mxu0
    %v317 = vadd.f32 %v122, %v316
    %v318 = vpop.f32.mrb[0].mxu0
    %v319 = vadd.f32 %v118, %v318
    %v320 = vpop.f32.mrb[0].mxu0
    %v321 = vadd.f32 %v122, %v320
    %322 = vmatprep.mubr.bf16.mxu0 0
    %323 = vmatmul.mubr.bf16.gmra.mrb[0].mxu0 %v232
    %v324 = vpop.f32.mrb[0].mxu0
    %v325 = vadd.f32 %v118, %v324
    %v326 = vpop.f32.mrb[0].mxu0
    %v327 = vadd.f32 %v122, %v326
    %v328 = vpop.f32.mrb[0].mxu0
    %v329 = vadd.f32 %v118, %v328
    %v330 = vpop.f32.mrb[0].mxu0
    %v331 = vadd.f32 %v122, %v330
    %332 = vmatprep.mubr.bf16.mxu0 0
    %333 = vmatmul.mubr.bf16.gmra.mrb[0].mxu0 %v235
    %v334 = vpop.f32.mrb[0].mxu0
    %v335 = vadd.f32 %v118, %v334
    %v336 = vpop.f32.mrb[0].mxu0
    %v337 = vadd.f32 %v122, %v336
    %v338 = vpop.f32.mrb[0].mxu0
    %v339 = vadd.f32 %v118, %v338
    %v340 = vpop.f32.mrb[0].mxu0
    %v341 = vadd.f32 %v122, %v340
    %342 = vmatprep.mubr.bf16.mxu0 0
    %343 = vmatmul.mubr.bf16.gmra.mrb[0].mxu0 %v238
    %v344 = vpop.f32.mrb[0].mxu0
    %v345 = vadd.f32 %v118, %v344
    %v346 = vpop.f32.mrb[0].mxu0
    %v347 = vadd.f32 %v122, %v346
    %v348 = vpop.f32.mrb[0].mxu0
    %v349 = vadd.f32 %v118, %v348
    %v350 = vpop.f32.mrb[0].mxu0
    %v351 = vadd.f32 %v122, %v350
    %352 = vdwg.mxu0
    %353 = vmatprep.subr.bf16.mxu0 %v202
    %354 = vmatpush1.bf16.msra.mxu0 %v201
    %355 = vmatprep.subr.bf16.mxu0 %v206
    %356 = vmatpush1.bf16.msra.mxu0 %v205
    %357 = vmatprep.subr.bf16.mxu0 0
    %358 = vmatpush1.bf16.msra.mxu0 0
    %359 = vmatprep.subr.bf16.mxu0 0
    %360 = vmatpush1.bf16.msra.mxu0 0
    %361 = vmatprep.subr.bf16.mxu0 0
    %362 = vmatpush1.bf16.msra.mxu0 0
    %363 = vmatprep.subr.bf16.mxu0 0
    %364 = vmatpush1.bf16.msra.mxu0 0
    %365 = vmatprep.subr.bf16.mxu0 0
    %366 = vmatpush1.bf16.msra.mxu0 0
    %367 = vmatprep.subr.bf16.mxu0 0
    %368 = vmatpush1.bf16.msra.mxu0 0
    %369 = vmatprep.subr.bf16.mxu0 0
    %370 = vmatpush1.bf16.msra.mxu0 0
    %371 = vmatprep.subr.bf16.mxu0 0
    %372 = vmatpush1.bf16.msra.mxu0 0
    %373 = vmatprep.subr.bf16.mxu0 0
    %374 = vmatpush1.bf16.msra.mxu0 0
    %375 = vmatprep.subr.bf16.mxu0 0
    %376 = vmatpush1.bf16.msra.mxu0 0
    %377 = vmatprep.subr.bf16.mxu0 0
    %378 = vmatpush1.bf16.msra.mxu0 0
    %379 = vmatprep.subr.bf16.mxu0 0
    %380 = vmatpush1.bf16.msra.mxu0 0
    %381 = vmatprep.subr.bf16.mxu0 0
    %382 = vmatpush1.bf16.msra.mxu0 0
    %383 = vmatprep.subr.bf16.mxu0 0
    %384 = vmatpush1.bf16.msra.mxu0 0
    %385 = vmatprep.mubr.bf16.mxu0 0
    %386 = vmatmul.mubr.bf16.gmra.mrb[0].mxu0 %v217
    %v387 = vpop.f32.mrb[0].mxu0
    %v388 = vadd.f32 %v126, %v387
    %v389 = vpop.f32.mrb[0].mxu0
    %v390 = vadd.f32 %v130, %v389
    %v391 = vpop.f32.mrb[0].mxu0
    %v392 = vadd.f32 %v126, %v391
    %v393 = vpop.f32.mrb[0].mxu0
    %v394 = vadd.f32 %v130, %v393
    %395 = vmatprep.mubr.bf16.mxu0 0
    %396 = vmatmul.mubr.bf16.gmra.mrb[0].mxu0 %v220
    %v397 = vpop.f32.mrb[0].mxu0
    %v398 = vadd.f32 %v126, %v397
    %v399 = vpop.f32.mrb[0].mxu0
    %v400 = vadd.f32 %v130, %v399
    %v401 = vpop.f32.mrb[0].mxu0
    %v402 = vadd.f32 %v126, %v401
    %v403 = vpop.f32.mrb[0].mxu0
    %v404 = vadd.f32 %v130, %v403
    %405 = vmatprep.mubr.bf16.mxu0 0
    %406 = vmatmul.mubr.bf16.gmra.mrb[0].mxu0 %v223
    %v407 = vpop.f32.mrb[0].mxu0
    %v408 = vadd.f32 %v126, %v407
    %v409 = vpop.f32.mrb[0].mxu0
    %v410 = vadd.f32 %v130, %v409
    %v411 = vpop.f32.mrb[0].mxu0
    %v412 = vadd.f32 %v126, %v411
    %v413 = vpop.f32.mrb[0].mxu0
    %v414 = vadd.f32 %v130, %v413
    %415 = vmatprep.mubr.bf16.mxu0 0
    %416 = vmatmul.mubr.bf16.gmra.mrb[0].mxu0 %v226
    %v417 = vpop.f32.mrb[0].mxu0
    %v418 = vadd.f32 %v126, %v417
    %v419 = vpop.f32.mrb[0].mxu0
    %v420 = vadd.f32 %v130, %v419
    %v421 = vpop.f32.mrb[0].mxu0
    %v422 = vadd.f32 %v126, %v421
    %v423 = vpop.f32.mrb[0].mxu0
    %v424 = vadd.f32 %v130, %v423
    %425 = vmatprep.mubr.bf16.mxu0 0
    %426 = vmatmul.mubr.bf16.gmra.mrb[0].mxu0 %v229
    %v427 = vpop.f32.mrb[0].mxu0
    %v428 = vadd.f32 %v126, %v427
    %v429 = vpop.f32.mrb[0].mxu0
    %v430 = vadd.f32 %v130, %v429
    %v431 = vpop.f32.mrb[0].mxu0
    %v432 = vadd.f32 %v126, %v431
    %v433 = vpop.f32.mrb[0].mxu0
    %v434 = vadd.f32 %v130, %v433
    %435 = vmatprep.mubr.bf16.mxu0 0
    %436 = vmatmul.mubr.bf16.gmra.mrb[0].mxu0 %v232
    %v437 = vpop.f32.mrb[0].mxu0
    %v438 = vadd.f32 %v126, %v437
    %v439 = vpop.f32.mrb[0].mxu0
    %v440 = vadd.f32 %v130, %v439
    %v441 = vpop.f32.mrb[0].mxu0
    %v442 = vadd.f32 %v126, %v441
    %v443 = vpop.f32.mrb[0].mxu0
    %v444 = vadd.f32 %v130, %v443
    %445 = vmatprep.mubr.bf16.mxu0 0
    %446 = vmatmul.mubr.bf16.gmra.mrb[0].mxu0 %v235
    %v447 = vpop.f32.mrb[0].mxu0
    %v448 = vadd.f32 %v126, %v447
    %v449 = vpop.f32.mrb[0].mxu0
    %v450 = vadd.f32 %v130, %v449
    %v451 = vpop.f32.mrb[0].mxu0
    %v452 = vadd.f32 %v126, %v451
    %v453 = vpop.f32.mrb[0].mxu0
    %v454 = vadd.f32 %v130, %v453
    %455 = vmatprep.mubr.bf16.mxu0 0
    %456 = vmatmul.mubr.bf16.gmra.mrb[0].mxu0 %v238
    %v457 = vpop.f32.mrb[0].mxu0
    %v458 = vadd.f32 %v126, %v457
    %v459 = vpop.f32.mrb[0].mxu0
    %v460 = vadd.f32 %v130, %v459
    %v461 = vpop.f32.mrb[0].mxu0
    %v462 = vadd.f32 %v126, %v461
    %v463 = vpop.f32.mrb[0].mxu0
    %v464 = vadd.f32 %v130, %v463
    %465 = vdwg.mxu0
    %466 = vst [vmem:[#allocation2] sm:$0xff] %v275
    %467 = vst [vmem:[#allocation2 + $0x8] sm:$0xff] %v277
    %468 = vst [vmem:[#allocation2 + $0x10] sm:$0xff] %v388
    %469 = vst [vmem:[#allocation2 + $0x18] sm:$0xff] %v390
    %470 = vst [vmem:[#allocation2 + $0x20] sm:$0xff] %v279
    %471 = vst [vmem:[#allocation2 + $0x28] sm:$0xff] %v281
    %472 = vst [vmem:[#allocation2 + $0x30] sm:$0xff] %v392
    %473 = vst [vmem:[#allocation2 + $0x38] sm:$0xff] %v394
    %474 = vst [vmem:[#allocation2 + $0x40] sm:$0xff] %v285
    %475 = vst [vmem:[#allocation2 + $0x48] sm:$0xff] %v287
    %476 = vst [vmem:[#allocation2 + $0x50] sm:$0xff] %v398
    %477 = vst [vmem:[#allocation2 + $0x58] sm:$0xff] %v400
    %478 = vst [vmem:[#allocation2 + $0x60] sm:$0xff] %v289
    %479 = vst [vmem:[#allocation2 + $0x68] sm:$0xff] %v291
    %480 = vst [vmem:[#allocation2 + $0x70] sm:$0xff] %v402
    %481 = vst [vmem:[#allocation2 + $0x78] sm:$0xff] %v404
    %482 = vst [vmem:[#allocation2 + $0x80] sm:$0xff] %v295
    %483 = vst [vmem:[#allocation2 + $0x88] sm:$0xff] %v297
    %484 = vst [vmem:[#allocation2 + $0x90] sm:$0xff] %v408
    %485 = vst [vmem:[#allocation2 + $0x98] sm:$0xff] %v410
    %486 = vst [vmem:[#allocation2 + $0xa0] sm:$0xff] %v299
    %487 = vst [vmem:[#allocation2 + $0xa8] sm:$0xff] %v301
    %488 = vst [vmem:[#allocation2 + $0xb0] sm:$0xff] %v412
    %489 = vst [vmem:[#allocation2 + $0xb8] sm:$0xff] %v414
    %490 = vst [vmem:[#allocation2 + $0xc0] sm:$0xff] %v305
    %491 = vst [vmem:[#allocation2 + $0xc8] sm:$0xff] %v307
    %492 = vst [vmem:[#allocation2 + $0xd0] sm:$0xff] %v418
    %493 = vst [vmem:[#allocation2 + $0xd8] sm:$0xff] %v420
    %494 = vst [vmem:[#allocation2 + $0xe0] sm:$0xff] %v309
    %495 = vst [vmem:[#allocation2 + $0xe8] sm:$0xff] %v311
    %496 = vst [vmem:[#allocation2 + $0xf0] sm:$0xff] %v422
    %497 = vst [vmem:[#allocation2 + $0xf8] sm:$0xff] %v424
    %498 = vst [vmem:[#allocation2 + $0x100] sm:$0xff] %v315
    %499 = vst [vmem:[#allocation2 + $0x108] sm:$0xff] %v317
    %500 = vst [vmem:[#allocation2 + $0x110] sm:$0xff] %v428
    %501 = vst [vmem:[#allocation2 + $0x118] sm:$0xff] %v430
    %502 = vst [vmem:[#allocation2 + $0x120] sm:$0xff] %v319
    %503 = vst [vmem:[#allocation2 + $0x128] sm:$0xff] %v321
    %504 = vst [vmem:[#allocation2 + $0x130] sm:$0xff] %v432
    %505 = vst [vmem:[#allocation2 + $0x138] sm:$0xff] %v434
    %506 = vst [vmem:[#allocation2 + $0x140] sm:$0xff] %v325
    %507 = vst [vmem:[#allocation2 + $0x148] sm:$0xff] %v327
    %508 = vst [vmem:[#allocation2 + $0x150] sm:$0xff] %v438
    %509 = vst [vmem:[#allocation2 + $0x158] sm:$0xff] %v440
    %510 = vst [vmem:[#allocation2 + $0x160] sm:$0xff] %v329
    %511 = vst [vmem:[#allocation2 + $0x168] sm:$0xff] %v331
    %512 = vst [vmem:[#allocation2 + $0x170] sm:$0xff] %v442
    %513 = vst [vmem:[#allocation2 + $0x178] sm:$0xff] %v444
    %514 = vst [vmem:[#allocation2 + $0x180] sm:$0xff] %v335
    %515 = vst [vmem:[#allocation2 + $0x188] sm:$0xff] %v337
    %516 = vst [vmem:[#allocation2 + $0x190] sm:$0xff] %v448
    %517 = vst [vmem:[#allocation2 + $0x198] sm:$0xff] %v450
    %518 = vst [vmem:[#allocation2 + $0x1a0] sm:$0xff] %v339
    %519 = vst [vmem:[#allocation2 + $0x1a8] sm:$0xff] %v341
    %520 = vst [vmem:[#allocation2 + $0x1b0] sm:$0xff] %v452
    %521 = vst [vmem:[#allocation2 + $0x1b8] sm:$0xff] %v454
    %522 = vst [vmem:[#allocation2 + $0x1c0] sm:$0xff] %v345
    %523 = vst [vmem:[#allocation2 + $0x1c8] sm:$0xff] %v347
    %524 = vst [vmem:[#allocation2 + $0x1d0] sm:$0xff] %v458
    %525 = vst [vmem:[#allocation2 + $0x1d8] sm:$0xff] %v460
    %526 = vst [vmem:[#allocation2 + $0x1e0] sm:$0xff] %v349
    %527 = vst [vmem:[#allocation2 + $0x1e8] sm:$0xff] %v351
    %528 = vst [vmem:[#allocation2 + $0x1f0] sm:$0xff] %v462
    %529 = vst [vmem:[#allocation2 + $0x1f8] sm:$0xff] %v464
    %v530 = vld [vmem:[%s6] sm:$0xf]
    %v532 = vlaneseq
    %v533 = vshrl.u32 %v532, 7
    %v534 = vsub.s32 0, %v533
    %v535 = vrot.slane %v530, %v534
    %v536 = vlaneseq
    %v537 = vshrl.u32 %v536, 7
    %v538 = vsub.s32 1, %v537
    %v539 = vrot.slane %v530, %v538
    %v540 = vlaneseq
    %v541 = vshrl.u32 %v540, 7
    %v542 = vsub.s32 2, %v541
    %v543 = vrot.slane %v530, %v542
    %v544 = vlaneseq
    %v545 = vshrl.u32 %v544, 7
    %v546 = vsub.s32 3, %v545
    %v547 = vrot.slane %v530, %v546
    %s552 = smul.u32 0, 4
    %s553 = smul.addr %s552, 8
    %s554 = scalar_lea.vmem [#allocation2], %s553
    %v555 = vld [vmem:[%s554] sm:$0xff]
    %v556 = vld [vmem:[%s554 + $0x8] sm:$0xff]
    %v557 = vld [vmem:[%s554 + $0x10] sm:$0xff]
    %v558 = vld [vmem:[%s554 + $0x18] sm:$0xff]
    %v559 = vld [vmem:[%s554 + $0x20] sm:$0xff]
    %v560 = vld [vmem:[%s554 + $0x28] sm:$0xff]
    %v561 = vld [vmem:[%s554 + $0x30] sm:$0xff]
    %v562 = vld [vmem:[%s554 + $0x38] sm:$0xff]
    %v563 = vld [vmem:[#allocation3] sm:$0xff]
    %v564 = vld [vmem:[#allocation3 + $0x8] sm:$0xff]
    %v565 = vld [vmem:[#allocation3 + $0x10] sm:$0xff]
    %v566 = vld [vmem:[#allocation3 + $0x18] sm:$0xff]
    %v567 = vld [vmem:[#allocation3 + $0x20] sm:$0xff]
    %v568 = vld [vmem:[#allocation3 + $0x28] sm:$0xff]
    %v569 = vld [vmem:[#allocation3 + $0x30] sm:$0xff]
    %v570 = vld [vmem:[#allocation3 + $0x38] sm:$0xff]
    %v571 = vld [vmem:[#allocation3 + $0x40] sm:$0xff]
    %v572 = vld [vmem:[#allocation3 + $0x48] sm:$0xff]
    %v573 = vld [vmem:[#allocation3 + $0x50] sm:$0xff]
    %v574 = vld [vmem:[#allocation3 + $0x58] sm:$0xff]
    %v575 = vld [vmem:[#allocation3 + $0x60] sm:$0xff]
    %v576 = vld [vmem:[#allocation3 + $0x68] sm:$0xff]
    %v577 = vld [vmem:[#allocation3 + $0x70] sm:$0xff]
    %v578 = vld [vmem:[#allocation3 + $0x78] sm:$0xff]
    %v579 = vld [vmem:[#allocation3 + $0x80] sm:$0xff]
    %v580 = vld [vmem:[#allocation3 + $0x88] sm:$0xff]
    %v581 = vld [vmem:[#allocation3 + $0x90] sm:$0xff]
    %v582 = vld [vmem:[#allocation3 + $0x98] sm:$0xff]
    %v583 = vld [vmem:[#allocation3 + $0xa0] sm:$0xff]
    %v584 = vld [vmem:[#allocation3 + $0xa8] sm:$0xff]
    %v585 = vld [vmem:[#allocation3 + $0xb0] sm:$0xff]
    %v586 = vld [vmem:[#allocation3 + $0xb8] sm:$0xff]
    %v587 = vld [vmem:[#allocation3 + $0xc0] sm:$0xff]
    %v588 = vld [vmem:[#allocation3 + $0xc8] sm:$0xff]
    %v589 = vld [vmem:[#allocation3 + $0xd0] sm:$0xff]
    %v590 = vld [vmem:[#allocation3 + $0xd8] sm:$0xff]
    %v591 = vld [vmem:[#allocation3 + $0xe0] sm:$0xff]
    %v592 = vld [vmem:[#allocation3 + $0xe8] sm:$0xff]
    %v593 = vld [vmem:[#allocation3 + $0xf0] sm:$0xff]
    %v594 = vld [vmem:[#allocation3 + $0xf8] sm:$0xff]
    %v627 = vunpack.c.l.b16 %v563
    %v628 = vunpack.c.h.b16 %v563
    %v629 = vunpack.c.l.b16 %v564
    %v630 = vunpack.c.h.b16 %v564
    %v631 = vunpack.c.l.b16 %v565
    %v632 = vunpack.c.h.b16 %v565
    %v633 = vunpack.c.l.b16 %v566
    %v634 = vunpack.c.h.b16 %v566
    %v635 = vunpack.c.l.b16 %v567
    %v636 = vunpack.c.h.b16 %v567
    %v637 = vunpack.c.l.b16 %v568
    %v638 = vunpack.c.h.b16 %v568
    %v639 = vunpack.c.l.b16 %v569
    %v640 = vunpack.c.h.b16 %v569
    %v641 = vunpack.c.l.b16 %v570
    %v642 = vunpack.c.h.b16 %v570
    %v643 = vunpack.c.l.b16 %v571
    %v644 = vunpack.c.h.b16 %v571
    %v645 = vunpack.c.l.b16 %v572
    %v646 = vunpack.c.h.b16 %v572
    %v647 = vunpack.c.l.b16 %v573
    %v648 = vunpack.c.h.b16 %v573
    %v649 = vunpack.c.l.b16 %v574
    %v650 = vunpack.c.h.b16 %v574
    %v651 = vunpack.c.l.b16 %v575
    %v652 = vunpack.c.h.b16 %v575
    %v653 = vunpack.c.l.b16 %v576
    %v654 = vunpack.c.h.b16 %v576
    %v655 = vunpack.c.l.b16 %v577
    %v656 = vunpack.c.h.b16 %v577
    %v657 = vunpack.c.l.b16 %v578
    %v658 = vunpack.c.h.b16 %v578
    %v659 = vunpack.c.l.b16 %v579
    %v660 = vunpack.c.h.b16 %v579
    %v661 = vunpack.c.l.b16 %v580
    %v662 = vunpack.c.h.b16 %v580
    %v663 = vunpack.c.l.b16 %v581
    %v664 = vunpack.c.h.b16 %v581
    %v665 = vunpack.c.l.b16 %v582
    %v666 = vunpack.c.h.b16 %v582
    %v667 = vunpack.c.l.b16 %v583
    %v668 = vunpack.c.h.b16 %v583
    %v669 = vunpack.c.l.b16 %v584
    %v670 = vunpack.c.h.b16 %v584
    %v671 = vunpack.c.l.b16 %v585
    %v672 = vunpack.c.h.b16 %v585
    %v673 = vunpack.c.l.b16 %v586
    %v674 = vunpack.c.h.b16 %v586
    %v675 = vunpack.c.l.b16 %v587
    %v676 = vunpack.c.h.b16 %v587
    %v677 = vunpack.c.l.b16 %v588
    %v678 = vunpack.c.h.b16 %v588
    %v679 = vunpack.c.l.b16 %v589
    %v680 = vunpack.c.h.b16 %v589
    %v681 = vunpack.c.l.b16 %v590
    %v682 = vunpack.c.h.b16 %v590
    %v683 = vunpack.c.l.b16 %v591
    %v684 = vunpack.c.h.b16 %v591
    %v685 = vunpack.c.l.b16 %v592
    %v686 = vunpack.c.h.b16 %v592
    %v687 = vunpack.c.l.b16 %v593
    %v688 = vunpack.c.h.b16 %v593
    %v689 = vunpack.c.l.b16 %v594
    %v690 = vunpack.c.h.b16 %v594
    %v691 = vpack.c.b16 %v631, %v627
    %v692 = vpack.c.b16 %v632, %v628
    %v693 = vpack.c.b16 %v633, %v629
    %v694 = vpack.c.b16 %v634, %v630
    %v695 = vpack.c.b16 %v639, %v635
    %v696 = vpack.c.b16 %v640, %v636
    %v697 = vpack.c.b16 %v641, %v637
    %v698 = vpack.c.b16 %v642, %v638
    %v699 = vpack.c.b16 %v647, %v643
    %v700 = vpack.c.b16 %v648, %v644
    %v701 = vpack.c.b16 %v649, %v645
    %v702 = vpack.c.b16 %v650, %v646
    %v703 = vpack.c.b16 %v655, %v651
    %v704 = vpack.c.b16 %v656, %v652
    %v705 = vpack.c.b16 %v657, %v653
    %v706 = vpack.c.b16 %v658, %v654
    %v707 = vpack.c.b16 %v663, %v659
    %v708 = vpack.c.b16 %v664, %v660
    %v709 = vpack.c.b16 %v665, %v661
    %v710 = vpack.c.b16 %v666, %v662
    %v711 = vpack.c.b16 %v671, %v667
    %v712 = vpack.c.b16 %v672, %v668
    %v713 = vpack.c.b16 %v673, %v669
    %v714 = vpack.c.b16 %v674, %v670
    %v715 = vpack.c.b16 %v679, %v675
    %v716 = vpack.c.b16 %v680, %v676
    %v717 = vpack.c.b16 %v681, %v677
    %v718 = vpack.c.b16 %v682, %v678
    %v719 = vpack.c.b16 %v687, %v683
    %v720 = vpack.c.b16 %v688, %v684
    %v721 = vpack.c.b16 %v689, %v685
    %v722 = vpack.c.b16 %v690, %v686
    %755 = vmatprep.subr.bf16.mxu0 %v692
    %756 = vmatpush1.bf16.msra.mxu0 %v691
    %757 = vmatprep.subr.bf16.mxu0 %v696
    %758 = vmatpush1.bf16.msra.mxu0 %v695
    %759 = vmatprep.subr.bf16.mxu0 %v700
    %760 = vmatpush1.bf16.msra.mxu0 %v699
    %761 = vmatprep.subr.bf16.mxu0 %v704
    %762 = vmatpush1.bf16.msra.mxu0 %v703
    %763 = vmatprep.subr.bf16.mxu0 %v708
    %764 = vmatpush1.bf16.msra.mxu0 %v707
    %765 = vmatprep.subr.bf16.mxu0 %v712
    %766 = vmatpush1.bf16.msra.mxu0 %v711
    %767 = vmatprep.subr.bf16.mxu0 %v716
    %768 = vmatpush1.bf16.msra.mxu0 %v715
    %769 = vmatprep.subr.bf16.mxu0 %v720
    %770 = vmatpush1.bf16.msra.mxu0 %v719
    %771 = vmatprep.subr.bf16.mxu0 0
    %772 = vmatpush1.bf16.msra.mxu0 0
    %773 = vmatprep.subr.bf16.mxu0 0
    %774 = vmatpush1.bf16.msra.mxu0 0
    %775 = vmatprep.subr.bf16.mxu0 0
    %776 = vmatpush1.bf16.msra.mxu0 0
    %777 = vmatprep.subr.bf16.mxu0 0
    %778 = vmatpush1.bf16.msra.mxu0 0
    %779 = vmatprep.subr.bf16.mxu0 0
    %780 = vmatpush1.bf16.msra.mxu0 0
    %781 = vmatprep.subr.bf16.mxu0 0
    %782 = vmatpush1.bf16.msra.mxu0 0
    %783 = vmatprep.subr.bf16.mxu0 0
    %784 = vmatpush1.bf16.msra.mxu0 0
    %785 = vmatprep.subr.bf16.mxu0 0
    %786 = vmatpush1.bf16.msra.mxu0 0
    %787 = vmatprep.mubr.bf16.mxu0 0
    %788 = vmatmul.mubr.bf16.gmra.mrb[0].mxu0 0
    %v789 = vpop.f32.mrb[0].mxu0
    %v790 = vadd.f32 0.0, %v789
    %v791 = vpop.f32.mrb[0].mxu0
    %v792 = vadd.f32 0.0, %v791
    %v793 = vpop.f32.mrb[0].mxu0
    %v794 = vadd.f32 0.0, %v793
    %v795 = vpop.f32.mrb[0].mxu0
    %v796 = vadd.f32 0.0, %v795
    %797 = vdwg.mxu0
    %798 = vmatprep.subr.bf16.mxu0 %v694
    %799 = vmatpush1.bf16.msra.mxu0 %v693
    %800 = vmatprep.subr.bf16.mxu0 %v698
    %801 = vmatpush1.bf16.msra.mxu0 %v697
    %802 = vmatprep.subr.bf16.mxu0 %v702
    %803 = vmatpush1.bf16.msra.mxu0 %v701
    %804 = vmatprep.subr.bf16.mxu0 %v706
    %805 = vmatpush1.bf16.msra.mxu0 %v705
    %806 = vmatprep.subr.bf16.mxu0 %v710
    %807 = vmatpush1.bf16.msra.mxu0 %v709
    %808 = vmatprep.subr.bf16.mxu0 %v714
    %809 = vmatpush1.bf16.msra.mxu0 %v713
    %810 = vmatprep.subr.bf16.mxu0 %v718
    %811 = vmatpush1.bf16.msra.mxu0 %v717
    %812 = vmatprep.subr.bf16.mxu0 %v722
    %813 = vmatpush1.bf16.msra.mxu0 %v721
    %814 = vmatprep.subr.bf16.mxu0 0
    %815 = vmatpush1.bf16.msra.mxu0 0
    %816 = vmatprep.subr.bf16.mxu0 0
    %817 = vmatpush1.bf16.msra.mxu0 0
    %818 = vmatprep.subr.bf16.mxu0 0
    %819 = vmatpush1.bf16.msra.mxu0 0
    %820 = vmatprep.subr.bf16.mxu0 0
    %821 = vmatpush1.bf16.msra.mxu0 0
    %822 = vmatprep.subr.bf16.mxu0 0
    %823 = vmatpush1.bf16.msra.mxu0 0
    %824 = vmatprep.subr.bf16.mxu0 0
    %825 = vmatpush1.bf16.msra.mxu0 0
    %826 = vmatprep.subr.bf16.mxu0 0
    %827 = vmatpush1.bf16.msra.mxu0 0
    %828 = vmatprep.subr.bf16.mxu0 0
    %829 = vmatpush1.bf16.msra.mxu0 0
    %830 = vmatprep.mubr.bf16.mxu0 0
    %831 = vmatmul.mubr.bf16.gmra.mrb[0].mxu0 0
    %v832 = vpop.f32.mrb[0].mxu0
    %v833 = vadd.f32 0.0, %v832
    %v834 = vpop.f32.mrb[0].mxu0
    %v835 = vadd.f32 0.0, %v834
    %v836 = vpop.f32.mrb[0].mxu0
    %v837 = vadd.f32 0.0, %v836
    %v838 = vpop.f32.mrb[0].mxu0
    %v839 = vadd.f32 0.0, %v838
    %840 = vdwg.mxu0
    %v841 = vadd.f32 %v555, %v790
    %v842 = vadd.f32 %v556, %v792
    %v843 = vadd.f32 %v557, %v833
    %v844 = vadd.f32 %v558, %v835
    %v845 = vadd.f32 %v559, %v794
    %v846 = vadd.f32 %v560, %v796
    %v847 = vadd.f32 %v561, %v837
    %v848 = vadd.f32 %v562, %v839
    %v849 = vxor.u32 %v841, 2147483648
    %v850 = vxor.u32 %v845, 2147483648
    %v851 = vmul.f32 %v849, 1.442695
    %v852 = vpow.pop %v851
    %v853 = vmul.f32 %v850, 1.442695
    %v854 = vpow.pop %v853
    %v855 = vadd.f32 %v852, 1.0
    %v856 = vadd.f32 %v854, 1.0
    %v857 = vrcp.pop %v855
    %v858 = vmul.f32 1.0, %v857
    %v859 = vrcp.pop %v856
    %v860 = vmul.f32 1.0, %v859
    %v861 = vxor.u32 %v842, 2147483648
    %v862 = vxor.u32 %v846, 2147483648
    %v863 = vmul.f32 %v861, 1.442695
    %v864 = vpow.pop %v863
    %v865 = vmul.f32 %v862, 1.442695
    %v866 = vpow.pop %v865
    %v867 = vadd.f32 %v864, 1.0
    %v868 = vadd.f32 %v866, 1.0
    %v869 = vrcp.pop %v867
    %v870 = vmul.f32 1.0, %v869
    %v871 = vrcp.pop %v868
    %v872 = vmul.f32 1.0, %v871
    %v873 = vtanh.pop %v843
    %v874 = vtanh.pop %v847
    %v875 = vxor.u32 %v844, 2147483648
    %v876 = vxor.u32 %v848, 2147483648
    %v877 = vmul.f32 %v875, 1.442695
    %v878 = vpow.pop %v877
    %v879 = vmul.f32 %v876, 1.442695
    %v880 = vpow.pop %v879
    %v881 = vadd.f32 %v878, 1.0
    %v882 = vadd.f32 %v880, 1.0
    %v883 = vrcp.pop %v881
    %v884 = vmul.f32 1.0, %v883
    %v885 = vrcp.pop %v882
    %v886 = vmul.f32 1.0, %v885
    %v887 = vmul.f32 %v870, 0.0
    %v888 = vmul.f32 %v872, 0.0
    %v889 = vmul.f32 %v858, %v873
    %v890 = vmul.f32 %v860, %v874
    %v891 = vadd.f32 %v887, %v889
    %v892 = vadd.f32 %v888, %v890
    %v893 = vtanh.pop %v891
    %v894 = vtanh.pop %v892
    %v895 = vmul.f32 %v884, %v893
    %v896 = vmul.f32 %v886, %v894
    %v897 = vpack.c.bf16 %v896, %v895
    %v898 = vld [vmem:[#allocation6] sm:$0xff]
    %v899 = vld [vmem:[#allocation6 + $0x8] sm:$0xff]
    %v900 = vld [vmem:[#allocation6 + $0x10] sm:$0xff]
    %v901 = vld [vmem:[#allocation6 + $0x18] sm:$0xff]
    %v902 = vld [vmem:[#allocation6 + $0x20] sm:$0xff]
    %v903 = vld [vmem:[#allocation6 + $0x28] sm:$0xff]
    %v904 = vld [vmem:[#allocation6 + $0x30] sm:$0xff]
    %v905 = vld [vmem:[#allocation6 + $0x38] sm:$0xff]
    %v906 = vld [vmem:[#allocation6 + $0x40] sm:$0xff]
    %v907 = vld [vmem:[#allocation6 + $0x48] sm:$0xff]
    %v908 = vld [vmem:[#allocation6 + $0x50] sm:$0xff]
    %v909 = vld [vmem:[#allocation6 + $0x58] sm:$0xff]
    %v910 = vld [vmem:[#allocation6 + $0x60] sm:$0xff]
    %v911 = vld [vmem:[#allocation6 + $0x68] sm:$0xff]
    %v912 = vld [vmem:[#allocation6 + $0x70] sm:$0xff]
    %v913 = vld [vmem:[#allocation6 + $0x78] sm:$0xff]
    %v914 = vld [vmem:[#allocation6 + $0x80] sm:$0xff]
    %v915 = vld [vmem:[#allocation6 + $0x88] sm:$0xff]
    %v916 = vld [vmem:[#allocation6 + $0x90] sm:$0xff]
    %v917 = vld [vmem:[#allocation6 + $0x98] sm:$0xff]
    %v918 = vld [vmem:[#allocation6 + $0xa0] sm:$0xff]
    %v919 = vld [vmem:[#allocation6 + $0xa8] sm:$0xff]
    %v920 = vld [vmem:[#allocation6 + $0xb0] sm:$0xff]
    %v921 = vld [vmem:[#allocation6 + $0xb8] sm:$0xff]
    %v922 = vld [vmem:[#allocation6 + $0xc0] sm:$0xff]
    %v923 = vld [vmem:[#allocation6 + $0xc8] sm:$0xff]
    %v924 = vld [vmem:[#allocation6 + $0xd0] sm:$0xff]
    %v925 = vld [vmem:[#allocation6 + $0xd8] sm:$0xff]
    %v926 = vld [vmem:[#allocation6 + $0xe0] sm:$0xff]
    %v927 = vld [vmem:[#allocation6 + $0xe8] sm:$0xff]
    %v928 = vld [vmem:[#allocation6 + $0xf0] sm:$0xff]
    %v929 = vld [vmem:[#allocation6 + $0xf8] sm:$0xff]
    %v930 = vld [vmem:[#allocation8] sm:$0xff]
    %v931 = vld [vmem:[#allocation8 + $0x8] sm:$0xff]
    %v932 = vld [vmem:[#allocation8 + $0x10] sm:$0xff]
    %v933 = vld [vmem:[#allocation8 + $0x18] sm:$0xff]
    %v934 = vld [vmem:[#allocation8 + $0x20] sm:$0xff]
    %v935 = vld [vmem:[#allocation8 + $0x28] sm:$0xff]
    %v936 = vld [vmem:[#allocation8 + $0x30] sm:$0xff]
    %v937 = vld [vmem:[#allocation8 + $0x38] sm:$0xff]
    %v938 = vld [vmem:[#allocation8 + $0x40] sm:$0xff]
    %v939 = vld [vmem:[#allocation8 + $0x48] sm:$0xff]
    %v940 = vld [vmem:[#allocation8 + $0x50] sm:$0xff]
    %v941 = vld [vmem:[#allocation8 + $0x58] sm:$0xff]
    %v942 = vld [vmem:[#allocation8 + $0x60] sm:$0xff]
    %v943 = vld [vmem:[#allocation8 + $0x68] sm:$0xff]
    %v944 = vld [vmem:[#allocation8 + $0x70] sm:$0xff]
    %v945 = vld [vmem:[#allocation8 + $0x78] sm:$0xff]
    %v946 = vld [vmem:[#allocation8 + $0x80] sm:$0xff]
    %v947 = vld [vmem:[#allocation8 + $0x88] sm:$0xff]
    %v948 = vld [vmem:[#allocation8 + $0x90] sm:$0xff]
    %v949 = vld [vmem:[#allocation8 + $0x98] sm:$0xff]
    %v950 = vld [vmem:[#allocation8 + $0xa0] sm:$0xff]
    %v951 = vld [vmem:[#allocation8 + $0xa8] sm:$0xff]
    %v952 = vld [vmem:[#allocation8 + $0xb0] sm:$0xff]
    %v953 = vld [vmem:[#allocation8 + $0xb8] sm:$0xff]
    %v954 = vld [vmem:[#allocation8 + $0xc0] sm:$0xff]
    %v955 = vld [vmem:[#allocation8 + $0xc8] sm:$0xff]
    %v956 = vld [vmem:[#allocation8 + $0xd0] sm:$0xff]
    %v957 = vld [vmem:[#allocation8 + $0xd8] sm:$0xff]
    %v958 = vld [vmem:[#allocation8 + $0xe0] sm:$0xff]
    %v959 = vld [vmem:[#allocation8 + $0xe8] sm:$0xff]
    %v960 = vld [vmem:[#allocation8 + $0xf0] sm:$0xff]
    %v961 = vld [vmem:[#allocation8 + $0xf8] sm:$0xff]
    %v994 = vunpack.c.l.b16 %v930
    %v995 = vunpack.c.h.b16 %v930
    %v996 = vunpack.c.l.b16 %v931
    %v997 = vunpack.c.h.b16 %v931
    %v998 = vunpack.c.l.b16 %v932
    %v999 = vunpack.c.h.b16 %v932
    %v1000 = vunpack.c.l.b16 %v933
    %v1001 = vunpack.c.h.b16 %v933
    %v1002 = vunpack.c.l.b16 %v934
    %v1003 = vunpack.c.h.b16 %v934
    %v1004 = vunpack.c.l.b16 %v935
    %v1005 = vunpack.c.h.b16 %v935
    %v1006 = vunpack.c.l.b16 %v936
    %v1007 = vunpack.c.h.b16 %v936
    %v1008 = vunpack.c.l.b16 %v937
    %v1009 = vunpack.c.h.b16 %v937
    %v1010 = vunpack.c.l.b16 %v938
    %v1011 = vunpack.c.h.b16 %v938
    %v1012 = vunpack.c.l.b16 %v939
    %v1013 = vunpack.c.h.b16 %v939
    %v1014 = vunpack.c.l.b16 %v940
    %v1015 = vunpack.c.h.b16 %v940
    %v1016 = vunpack.c.l.b16 %v941
    %v1017 = vunpack.c.h.b16 %v941
    %v1018 = vunpack.c.l.b16 %v942
    %v1019 = vunpack.c.h.b16 %v942
    %v1020 = vunpack.c.l.b16 %v943
    %v1021 = vunpack.c.h.b16 %v943
    %v1022 = vunpack.c.l.b16 %v944
    %v1023 = vunpack.c.h.b16 %v944
    %v1024 = vunpack.c.l.b16 %v945
    %v1025 = vunpack.c.h.b16 %v945
    %v1026 = vunpack.c.l.b16 %v946
    %v1027 = vunpack.c.h.b16 %v946
    %v1028 = vunpack.c.l.b16 %v947
    %v1029 = vunpack.c.h.b16 %v947
    %v1030 = vunpack.c.l.b16 %v948
    %v1031 = vunpack.c.h.b16 %v948
    %v1032 = vunpack.c.l.b16 %v949
    %v1033 = vunpack.c.h.b16 %v949
    %v1034 = vunpack.c.l.b16 %v950
    %v1035 = vunpack.c.h.b16 %v950
    %v1036 = vunpack.c.l.b16 %v951
    %v1037 = vunpack.c.h.b16 %v951
    %v1038 = vunpack.c.l.b16 %v952
    %v1039 = vunpack.c.h.b16 %v952
    %v1040 = vunpack.c.l.b16 %v953
    %v1041 = vunpack.c.h.b16 %v953
    %v1042 = vunpack.c.l.b16 %v954
    %v1043 = vunpack.c.h.b16 %v954
    %v1044 = vunpack.c.l.b16 %v955
    %v1045 = vunpack.c.h.b16 %v955
    %v1046 = vunpack.c.l.b16 %v956
    %v1047 = vunpack.c.h.b16 %v956
    %v1048 = vunpack.c.l.b16 %v957
    %v1049 = vunpack.c.h.b16 %v957
    %v1050 = vunpack.c.l.b16 %v958
    %v1051 = vunpack.c.h.b16 %v958
    %v1052 = vunpack.c.l.b16 %v959
    %v1053 = vunpack.c.h.b16 %v959
    %v1054 = vunpack.c.l.b16 %v960
    %v1055 = vunpack.c.h.b16 %v960
    %v1056 = vunpack.c.l.b16 %v961
    %v1057 = vunpack.c.h.b16 %v961
    %v1058 = vpack.c.b16 %v998, %v994
    %v1059 = vpack.c.b16 %v999, %v995
    %v1060 = vpack.c.b16 %v1000, %v996
    %v1061 = vpack.c.b16 %v1001, %v997
    %v1062 = vpack.c.b16 %v1006, %v1002
    %v1063 = vpack.c.b16 %v1007, %v1003
    %v1064 = vpack.c.b16 %v1008, %v1004
    %v1065 = vpack.c.b16 %v1009, %v1005
    %v1066 = vpack.c.b16 %v1014, %v1010
    %v1067 = vpack.c.b16 %v1015, %v1011
    %v1068 = vpack.c.b16 %v1016, %v1012
    %v1069 = vpack.c.b16 %v1017, %v1013
    %v1070 = vpack.c.b16 %v1022, %v1018
    %v1071 = vpack.c.b16 %v1023, %v1019
    %v1072 = vpack.c.b16 %v1024, %v1020
    %v1073 = vpack.c.b16 %v1025, %v1021
    %v1074 = vpack.c.b16 %v1030, %v1026
    %v1075 = vpack.c.b16 %v1031, %v1027
    %v1076 = vpack.c.b16 %v1032, %v1028
    %v1077 = vpack.c.b16 %v1033, %v1029
    %v1078 = vpack.c.b16 %v1038, %v1034
    %v1079 = vpack.c.b16 %v1039, %v1035
    %v1080 = vpack.c.b16 %v1040, %v1036
    %v1081 = vpack.c.b16 %v1041, %v1037
    %v1082 = vpack.c.b16 %v1046, %v1042
    %v1083 = vpack.c.b16 %v1047, %v1043
    %v1084 = vpack.c.b16 %v1048, %v1044
    %v1085 = vpack.c.b16 %v1049, %v1045
    %v1086 = vpack.c.b16 %v1054, %v1050
    %v1087 = vpack.c.b16 %v1055, %v1051
    %v1088 = vpack.c.b16 %v1056, %v1052
    %v1089 = vpack.c.b16 %v1057, %v1053
    %1122 = vmatprep.subr.bf16.mxu0 %v1059
    %1123 = vmatpush1.bf16.msra.mxu0 %v1058
    %1124 = vmatprep.subr.bf16.mxu0 %v1063
    %1125 = vmatpush1.bf16.msra.mxu0 %v1062
    %1126 = vmatprep.subr.bf16.mxu0 %v1067
    %1127 = vmatpush1.bf16.msra.mxu0 %v1066
    %1128 = vmatprep.subr.bf16.mxu0 %v1071
    %1129 = vmatpush1.bf16.msra.mxu0 %v1070
    %1130 = vmatprep.subr.bf16.mxu0 %v1075
    %1131 = vmatpush1.bf16.msra.mxu0 %v1074
    %1132 = vmatprep.subr.bf16.mxu0 %v1079
    %1133 = vmatpush1.bf16.msra.mxu0 %v1078
    %1134 = vmatprep.subr.bf16.mxu0 %v1083
    %1135 = vmatpush1.bf16.msra.mxu0 %v1082
    %1136 = vmatprep.subr.bf16.mxu0 %v1087
    %1137 = vmatpush1.bf16.msra.mxu0 %v1086
    %1138 = vmatprep.subr.bf16.mxu0 0
    %1139 = vmatpush1.bf16.msra.mxu0 0
    %1140 = vmatprep.subr.bf16.mxu0 0
    %1141 = vmatpush1.bf16.msra.mxu0 0
    %1142 = vmatprep.subr.bf16.mxu0 0
    %1143 = vmatpush1.bf16.msra.mxu0 0
    %1144 = vmatprep.subr.bf16.mxu0 0
    %1145 = vmatpush1.bf16.msra.mxu0 0
    %1146 = vmatprep.subr.bf16.mxu0 0
    %1147 = vmatpush1.bf16.msra.mxu0 0
    %1148 = vmatprep.subr.bf16.mxu0 0
    %1149 = vmatpush1.bf16.msra.mxu0 0
    %1150 = vmatprep.subr.bf16.mxu0 0
    %1151 = vmatpush1.bf16.msra.mxu0 0
    %1152 = vmatprep.subr.bf16.mxu0 0
    %1153 = vmatpush1.bf16.msra.mxu0 0
    %1154 = vmatprep.mubr.bf16.mxu0 0
    %1155 = vmatmul.mubr.bf16.gmra.mrb[0].mxu0 0
    %v1156 = vpop.f32.mrb[0].mxu0
    %v1157 = vadd.f32 0.0, %v1156
    %v1158 = vpop.f32.mrb[0].mxu0
    %v1159 = vadd.f32 0.0, %v1158
    %v1160 = vpop.f32.mrb[0].mxu0
    %v1161 = vadd.f32 0.0, %v1160
    %v1162 = vpop.f32.mrb[0].mxu0
    %v1163 = vadd.f32 0.0, %v1162
    %1164 = vdwg.mxu0
    %1165 = vmatprep.subr.bf16.mxu0 %v1061
    %1166 = vmatpush1.bf16.msra.mxu0 %v1060
    %1167 = vmatprep.subr.bf16.mxu0 %v1065
    %1168 = vmatpush1.bf16.msra.mxu0 %v1064
    %1169 = vmatprep.subr.bf16.mxu0 %v1069
    %1170 = vmatpush1.bf16.msra.mxu0 %v1068
    %1171 = vmatprep.subr.bf16.mxu0 %v1073
    %1172 = vmatpush1.bf16.msra.mxu0 %v1072
    %1173 = vmatprep.subr.bf16.mxu0 %v1077
    %1174 = vmatpush1.bf16.msra.mxu0 %v1076
    %1175 = vmatprep.subr.bf16.mxu0 %v1081
    %1176 = vmatpush1.bf16.msra.mxu0 %v1080
    %1177 = vmatprep.subr.bf16.mxu0 %v1085
    %1178 = vmatpush1.bf16.msra.mxu0 %v1084
    %1179 = vmatprep.subr.bf16.mxu0 %v1089
    %1180 = vmatpush1.bf16.msra.mxu0 %v1088
    %1181 = vmatprep.subr.bf16.mxu0 0
    %1182 = vmatpush1.bf16.msra.mxu0 0
    %1183 = vmatprep.subr.bf16.mxu0 0
    %1184 = vmatpush1.bf16.msra.mxu0 0
    %1185 = vmatprep.subr.bf16.mxu0 0
    %1186 = vmatpush1.bf16.msra.mxu0 0
    %1187 = vmatprep.subr.bf16.mxu0 0
    %1188 = vmatpush1.bf16.msra.mxu0 0
    %1189 = vmatprep.subr.bf16.mxu0 0
    %1190 = vmatpush1.bf16.msra.mxu0 0
    %1191 = vmatprep.subr.bf16.mxu0 0
    %1192 = vmatpush1.bf16.msra.mxu0 0
    %1193 = vmatprep.subr.bf16.mxu0 0
    %1194 = vmatpush1.bf16.msra.mxu0 0
    %1195 = vmatprep.subr.bf16.mxu0 0
    %1196 = vmatpush1.bf16.msra.mxu0 0
    %1197 = vmatprep.mubr.bf16.mxu0 0
    %1198 = vmatmul.mubr.bf16.gmra.mrb[0].mxu0 0
    %v1199 = vpop.f32.mrb[0].mxu0
    %v1200 = vadd.f32 0.0, %v1199
    %v1201 = vpop.f32.mrb[0].mxu0
    %v1202 = vadd.f32 0.0, %v1201
    %v1203 = vpop.f32.mrb[0].mxu0
    %v1204 = vadd.f32 0.0, %v1203
    %v1205 = vpop.f32.mrb[0].mxu0
    %v1206 = vadd.f32 0.0, %v1205
    %1207 = vdwg.mxu0
    %v1240 = vunpack.c.l.b16 %v898
    %v1241 = vunpack.c.h.b16 %v898
    %v1242 = vunpack.c.l.b16 %v899
    %v1243 = vunpack.c.h.b16 %v899
    %v1244 = vunpack.c.l.b16 %v900
    %v1245 = vunpack.c.h.b16 %v900
    %v1246 = vunpack.c.l.b16 %v901
    %v1247 = vunpack.c.h.b16 %v901
    %v1248 = vunpack.c.l.b16 %v902
    %v1249 = vunpack.c.h.b16 %v902
    %v1250 = vunpack.c.l.b16 %v903
    %v1251 = vunpack.c.h.b16 %v903
    %v1252 = vunpack.c.l.b16 %v904
    %v1253 = vunpack.c.h.b16 %v904
    %v1254 = vunpack.c.l.b16 %v905
    %v1255 = vunpack.c.h.b16 %v905
    %v1256 = vunpack.c.l.b16 %v906
    %v1257 = vunpack.c.h.b16 %v906
    %v1258 = vunpack.c.l.b16 %v907
    %v1259 = vunpack.c.h.b16 %v907
    %v1260 = vunpack.c.l.b16 %v908
    %v1261 = vunpack.c.h.b16 %v908
    %v1262 = vunpack.c.l.b16 %v909
    %v1263 = vunpack.c.h.b16 %v909
    %v1264 = vunpack.c.l.b16 %v910
    %v1265 = vunpack.c.h.b16 %v910
    %v1266 = vunpack.c.l.b16 %v911
    %v1267 = vunpack.c.h.b16 %v911
    %v1268 = vunpack.c.l.b16 %v912
    %v1269 = vunpack.c.h.b16 %v912
    %v1270 = vunpack.c.l.b16 %v913
    %v1271 = vunpack.c.h.b16 %v913
    %v1272 = vunpack.c.l.b16 %v914
    %v1273 = vunpack.c.h.b16 %v914
    %v1274 = vunpack.c.l.b16 %v915
    %v1275 = vunpack.c.h.b16 %v915
    %v1276 = vunpack.c.l.b16 %v916
    %v1277 = vunpack.c.h.b16 %v916
    %v1278 = vunpack.c.l.b16 %v917
    %v1279 = vunpack.c.h.b16 %v917
    %v1280 = vunpack.c.l.b16 %v918
    %v1281 = vunpack.c.h.b16 %v918
    %v1282 = vunpack.c.l.b16 %v919
    %v1283 = vunpack.c.h.b16 %v919
    %v1284 = vunpack.c.l.b16 %v920
    %v1285 = vunpack.c.h.b16 %v920
    %v1286 = vunpack.c.l.b16 %v921
    %v1287 = vunpack.c.h.b16 %v921
    %v1288 = vunpack.c.l.b16 %v922
    %v1289 = vunpack.c.h.b16 %v922
    %v1290 = vunpack.c.l.b16 %v923
    %v1291 = vunpack.c.h.b16 %v923
    %v1292 = vunpack.c.l.b16 %v924
    %v1293 = vunpack.c.h.b16 %v924
    %v1294 = vunpack.c.l.b16 %v925
    %v1295 = vunpack.c.h.b16 %v925
    %v1296 = vunpack.c.l.b16 %v926
    %v1297 = vunpack.c.h.b16 %v926
    %v1298 = vunpack.c.l.b16 %v927
    %v1299 = vunpack.c.h.b16 %v927
    %v1300 = vunpack.c.l.b16 %v928
    %v1301 = vunpack.c.h.b16 %v928
    %v1302 = vunpack.c.l.b16 %v929
    %v1303 = vunpack.c.h.b16 %v929
    %v1304 = vpack.c.b16 %v1244, %v1240
    %v1305 = vpack.c.b16 %v1245, %v1241
    %v1306 = vpack.c.b16 %v1246, %v1242
    %v1307 = vpack.c.b16 %v1247, %v1243
    %v1308 = vpack.c.b16 %v1252, %v1248
    %v1309 = vpack.c.b16 %v1253, %v1249
    %v1310 = vpack.c.b16 %v1254, %v1250
    %v1311 = vpack.c.b16 %v1255, %v1251
    %v1312 = vpack.c.b16 %v1260, %v1256
    %v1313 = vpack.c.b16 %v1261, %v1257
    %v1314 = vpack.c.b16 %v1262, %v1258
    %v1315 = vpack.c.b16 %v1263, %v1259
    %v1316 = vpack.c.b16 %v1268, %v1264
    %v1317 = vpack.c.b16 %v1269, %v1265
    %v1318 = vpack.c.b16 %v1270, %v1266
    %v1319 = vpack.c.b16 %v1271, %v1267
    %v1320 = vpack.c.b16 %v1276, %v1272
    %v1321 = vpack.c.b16 %v1277, %v1273
    %v1322 = vpack.c.b16 %v1278, %v1274
    %v1323 = vpack.c.b16 %v1279, %v1275
    %v1324 = vpack.c.b16 %v1284, %v1280
    %v1325 = vpack.c.b16 %v1285, %v1281
    %v1326 = vpack.c.b16 %v1286, %v1282
    %v1327 = vpack.c.b16 %v1287, %v1283
    %v1328 = vpack.c.b16 %v1292, %v1288
    %v1329 = vpack.c.b16 %v1293, %v1289
    %v1330 = vpack.c.b16 %v1294, %v1290
    %v1331 = vpack.c.b16 %v1295, %v1291
    %v1332 = vpack.c.b16 %v1300, %v1296
    %v1333 = vpack.c.b16 %v1301, %v1297
    %v1334 = vpack.c.b16 %v1302, %v1298
    %v1335 = vpack.c.b16 %v1303, %v1299
    %1368 = vmatprep.subr.bf16.mxu0 %v1305
    %1369 = vmatpush1.bf16.msra.mxu0 %v1304
    %1370 = vmatprep.subr.bf16.mxu0 %v1309
    %1371 = vmatpush1.bf16.msra.mxu0 %v1308
    %1372 = vmatprep.subr.bf16.mxu0 %v1313
    %1373 = vmatpush1.bf16.msra.mxu0 %v1312
    %1374 = vmatprep.subr.bf16.mxu0 %v1317
    %1375 = vmatpush1.bf16.msra.mxu0 %v1316
    %1376 = vmatprep.subr.bf16.mxu0 %v1321
    %1377 = vmatpush1.bf16.msra.mxu0 %v1320
    %1378 = vmatprep.subr.bf16.mxu0 %v1325
    %1379 = vmatpush1.bf16.msra.mxu0 %v1324
    %1380 = vmatprep.subr.bf16.mxu0 %v1329
    %1381 = vmatpush1.bf16.msra.mxu0 %v1328
    %1382 = vmatprep.subr.bf16.mxu0 %v1333
    %1383 = vmatpush1.bf16.msra.mxu0 %v1332
    %1384 = vmatprep.subr.bf16.mxu0 0
    %1385 = vmatpush1.bf16.msra.mxu0 0
    %1386 = vmatprep.subr.bf16.mxu0 0
    %1387 = vmatpush1.bf16.msra.mxu0 0
    %1388 = vmatprep.subr.bf16.mxu0 0
    %1389 = vmatpush1.bf16.msra.mxu0 0
    %1390 = vmatprep.subr.bf16.mxu0 0
    %1391 = vmatpush1.bf16.msra.mxu0 0
    %1392 = vmatprep.subr.bf16.mxu0 0
    %1393 = vmatpush1.bf16.msra.mxu0 0
    %1394 = vmatprep.subr.bf16.mxu0 0
    %1395 = vmatpush1.bf16.msra.mxu0 0
    %1396 = vmatprep.subr.bf16.mxu0 0
    %1397 = vmatpush1.bf16.msra.mxu0 0
    %1398 = vmatprep.subr.bf16.mxu0 0
    %1399 = vmatpush1.bf16.msra.mxu0 0
    %1400 = vmatprep.mubr.bf16.mxu0 0
    %1401 = vmatmul.mubr.bf16.gmra.mrb[0].mxu0 %v897
    %v1402 = vpop.f32.mrb[0].mxu0
    %v1403 = vadd.f32 %v1157, %v1402
    %v1404 = vpop.f32.mrb[0].mxu0
    %v1405 = vadd.f32 %v1159, %v1404
    %v1406 = vpop.f32.mrb[0].mxu0
    %v1407 = vadd.f32 %v1161, %v1406
    %v1408 = vpop.f32.mrb[0].mxu0
    %v1409 = vadd.f32 %v1163, %v1408
    %1410 = vdwg.mxu0
    %1411 = vmatprep.subr.bf16.mxu0 %v1307
    %1412 = vmatpush1.bf16.msra.mxu0 %v1306
    %1413 = vmatprep.subr.bf16.mxu0 %v1311
    %1414 = vmatpush1.bf16.msra.mxu0 %v1310
    %1415 = vmatprep.subr.bf16.mxu0 %v1315
    %1416 = vmatpush1.bf16.msra.mxu0 %v1314
    %1417 = vmatprep.subr.bf16.mxu0 %v1319
    %1418 = vmatpush1.bf16.msra.mxu0 %v1318
    %1419 = vmatprep.subr.bf16.mxu0 %v1323
    %1420 = vmatpush1.bf16.msra.mxu0 %v1322
    %1421 = vmatprep.subr.bf16.mxu0 %v1327
    %1422 = vmatpush1.bf16.msra.mxu0 %v1326
    %1423 = vmatprep.subr.bf16.mxu0 %v1331
    %1424 = vmatpush1.bf16.msra.mxu0 %v1330
    %1425 = vmatprep.subr.bf16.mxu0 %v1335
    %1426 = vmatpush1.bf16.msra.mxu0 %v1334
    %1427 = vmatprep.subr.bf16.mxu0 0
    %1428 = vmatpush1.bf16.msra.mxu0 0
    %1429 = vmatprep.subr.bf16.mxu0 0
    %1430 = vmatpush1.bf16.msra.mxu0 0
    %1431 = vmatprep.subr.bf16.mxu0 0
    %1432 = vmatpush1.bf16.msra.mxu0 0
    %1433 = vmatprep.subr.bf16.mxu0 0
    %1434 = vmatpush1.bf16.msra.mxu0 0
    %1435 = vmatprep.subr.bf16.mxu0 0
    %1436 = vmatpush1.bf16.msra.mxu0 0
    %1437 = vmatprep.subr.bf16.mxu0 0
    %1438 = vmatpush1.bf16.msra.mxu0 0
    %1439 = vmatprep.subr.bf16.mxu0 0
    %1440 = vmatpush1.bf16.msra.mxu0 0
    %1441 = vmatprep.subr.bf16.mxu0 0
    %1442 = vmatpush1.bf16.msra.mxu0 0
    %1443 = vmatprep.mubr.bf16.mxu0 0
    %1444 = vmatmul.mubr.bf16.gmra.mrb[0].mxu0 %v897
    %v1445 = vpop.f32.mrb[0].mxu0
    %v1446 = vadd.f32 %v1200, %v1445
    %v1447 = vpop.f32.mrb[0].mxu0
    %v1448 = vadd.f32 %v1202, %v1447
    %v1449 = vpop.f32.mrb[0].mxu0
    %v1450 = vadd.f32 %v1204, %v1449
    %v1451 = vpop.f32.mrb[0].mxu0
    %v1452 = vadd.f32 %v1206, %v1451
    %1453 = vdwg.mxu0
    %v1454 = vadd.f32 %v1403, %v535
    %v1455 = vadd.f32 %v1405, %v539
    %v1456 = vadd.f32 %v1446, %v543
    %v1457 = vadd.f32 %v1448, %v547
    %v1458 = vadd.f32 %v1407, %v535
    %v1459 = vadd.f32 %v1409, %v539
    %v1460 = vadd.f32 %v1450, %v543
    %v1461 = vadd.f32 %v1452, %v547
    %v1462 = vxor.u32 %v1454, 2147483648
    %v1463 = vxor.u32 %v1458, 2147483648
    %v1464 = vmul.f32 %v1462, 1.442695
    %v1465 = vpow.pop %v1464
    %v1466 = vmul.f32 %v1463, 1.442695
    %v1467 = vpow.pop %v1466
    %v1468 = vadd.f32 %v1465, 1.0
    %v1469 = vadd.f32 %v1467, 1.0
    %v1470 = vrcp.pop %v1468
    %v1471 = vmul.f32 1.0, %v1470
    %v1472 = vrcp.pop %v1469
    %v1473 = vmul.f32 1.0, %v1472
    %v1474 = vxor.u32 %v1455, 2147483648
    %v1475 = vxor.u32 %v1459, 2147483648
    %v1476 = vmul.f32 %v1474, 1.442695
    %v1477 = vpow.pop %v1476
    %v1478 = vmul.f32 %v1475, 1.442695
    %v1479 = vpow.pop %v1478
    %v1480 = vadd.f32 %v1477, 1.0
    %v1481 = vadd.f32 %v1479, 1.0
    %v1482 = vrcp.pop %v1480
    %v1483 = vmul.f32 1.0, %v1482
    %v1484 = vrcp.pop %v1481
    %v1485 = vmul.f32 1.0, %v1484
    %v1486 = vtanh.pop %v1456
    %v1487 = vtanh.pop %v1460
    %v1488 = vxor.u32 %v1457, 2147483648
    %v1489 = vxor.u32 %v1461, 2147483648
    %v1490 = vmul.f32 %v1488, 1.442695
    %v1491 = vpow.pop %v1490
    %v1492 = vmul.f32 %v1489, 1.442695
    %v1493 = vpow.pop %v1492
    %v1494 = vadd.f32 %v1491, 1.0
    %v1495 = vadd.f32 %v1493, 1.0
    %v1496 = vrcp.pop %v1494
    %v1497 = vmul.f32 1.0, %v1496
    %v1498 = vrcp.pop %v1495
    %v1499 = vmul.f32 1.0, %v1498
    %v1500 = vmul.f32 %v1483, 0.0
    %v1501 = vmul.f32 %v1485, 0.0
    %v1502 = vmul.f32 %v1471, %v1486
    %v1503 = vmul.f32 %v1473, %v1487
    %v1504 = vadd.f32 %v1500, %v1502
    %v1505 = vadd.f32 %v1501, %v1503
    %v1506 = vtanh.pop %v1504
    %v1507 = vtanh.pop %v1505
    %v1508 = vmul.f32 %v1497, %v1506
    %v1509 = vmul.f32 %v1499, %v1507
    %s1510 = smul.u32 2, 4
    %s1511 = smul.addr %s1510, 8
    %s1512 = scalar_lea.vmem [#allocation2], %s1511
    %v1513 = vld [vmem:[%s1512] sm:$0xff]
    %v1514 = vld [vmem:[%s1512 + $0x8] sm:$0xff]
    %v1515 = vld [vmem:[%s1512 + $0x10] sm:$0xff]
    %v1516 = vld [vmem:[%s1512 + $0x18] sm:$0xff]
    %v1517 = vld [vmem:[%s1512 + $0x20] sm:$0xff]
    %v1518 = vld [vmem:[%s1512 + $0x28] sm:$0xff]
    %v1519 = vld [vmem:[%s1512 + $0x30] sm:$0xff]
    %v1520 = vld [vmem:[%s1512 + $0x38] sm:$0xff]
    %1521 = vmatprep.subr.bf16.mxu0 %v692
    %1522 = vmatpush1.bf16.msra.mxu0 %v691
    %1523 = vmatprep.subr.bf16.mxu0 %v696
    %1524 = vmatpush1.bf16.msra.mxu0 %v695
    %1525 = vmatprep.subr.bf16.mxu0 %v700
    %1526 = vmatpush1.bf16.msra.mxu0 %v699
    %1527 = vmatprep.subr.bf16.mxu0 %v704
    %1528 = vmatpush1.bf16.msra.mxu0 %v703
    %1529 = vmatprep.subr.bf16.mxu0 %v708
    %1530 = vmatpush1.bf16.msra.mxu0 %v707
    %1531 = vmatprep.subr.bf16.mxu0 %v712
    %1532 = vmatpush1.bf16.msra.mxu0 %v711
    %1533 = vmatprep.subr.bf16.mxu0 %v716
    %1534 = vmatpush1.bf16.msra.mxu0 %v715
    %1535 = vmatprep.subr.bf16.mxu0 %v720
    %1536 = vmatpush1.bf16.msra.mxu0 %v719
    %1537 = vmatprep.subr.bf16.mxu0 0
    %1538 = vmatpush1.bf16.msra.mxu0 0
    %1539 = vmatprep.subr.bf16.mxu0 0
    %1540 = vmatpush1.bf16.msra.mxu0 0
    %1541 = vmatprep.subr.bf16.mxu0 0
    %1542 = vmatpush1.bf16.msra.mxu0 0
    %1543 = vmatprep.subr.bf16.mxu0 0
    %1544 = vmatpush1.bf16.msra.mxu0 0
    %1545 = vmatprep.subr.bf16.mxu0 0
    %1546 = vmatpush1.bf16.msra.mxu0 0
    %1547 = vmatprep.subr.bf16.mxu0 0
    %1548 = vmatpush1.bf16.msra.mxu0 0
    %1549 = vmatprep.subr.bf16.mxu0 0
    %1550 = vmatpush1.bf16.msra.mxu0 0
    %1551 = vmatprep.subr.bf16.mxu0 0
    %1552 = vmatpush1.bf16.msra.mxu0 0
    %1553 = vmatprep.mubr.bf16.mxu0 0
    %1554 = vmatmul.mubr.bf16.gmra.mrb[0].mxu0 %v897
    %v1555 = vpop.f32.mrb[0].mxu0
    %v1556 = vadd.f32 0.0, %v1555
    %v1557 = vpop.f32.mrb[0].mxu0
    %v1558 = vadd.f32 0.0, %v1557
    %v1559 = vpop.f32.mrb[0].mxu0
    %v1560 = vadd.f32 0.0, %v1559
    %v1561 = vpop.f32.mrb[0].mxu0
    %v1562 = vadd.f32 0.0, %v1561
    %1563 = vdwg.mxu0
    %1564 = vmatprep.subr.bf16.mxu0 %v694
    %1565 = vmatpush1.bf16.msra.mxu0 %v693
    %1566 = vmatprep.subr.bf16.mxu0 %v698
    %1567 = vmatpush1.bf16.msra.mxu0 %v697
    %1568 = vmatprep.subr.bf16.mxu0 %v702
    %1569 = vmatpush1.bf16.msra.mxu0 %v701
    %1570 = vmatprep.subr.bf16.mxu0 %v706
    %1571 = vmatpush1.bf16.msra.mxu0 %v705
    %1572 = vmatprep.subr.bf16.mxu0 %v710
    %1573 = vmatpush1.bf16.msra.mxu0 %v709
    %1574 = vmatprep.subr.bf16.mxu0 %v714
    %1575 = vmatpush1.bf16.msra.mxu0 %v713
    %1576 = vmatprep.subr.bf16.mxu0 %v718
    %1577 = vmatpush1.bf16.msra.mxu0 %v717
    %1578 = vmatprep.subr.bf16.mxu0 %v722
    %1579 = vmatpush1.bf16.msra.mxu0 %v721
    %1580 = vmatprep.subr.bf16.mxu0 0
    %1581 = vmatpush1.bf16.msra.mxu0 0
    %1582 = vmatprep.subr.bf16.mxu0 0
    %1583 = vmatpush1.bf16.msra.mxu0 0
    %1584 = vmatprep.subr.bf16.mxu0 0
    %1585 = vmatpush1.bf16.msra.mxu0 0
    %1586 = vmatprep.subr.bf16.mxu0 0
    %1587 = vmatpush1.bf16.msra.mxu0 0
    %1588 = vmatprep.subr.bf16.mxu0 0
    %1589 = vmatpush1.bf16.msra.mxu0 0
    %1590 = vmatprep.subr.bf16.mxu0 0
    %1591 = vmatpush1.bf16.msra.mxu0 0
    %1592 = vmatprep.subr.bf16.mxu0 0
    %1593 = vmatpush1.bf16.msra.mxu0 0
    %1594 = vmatprep.subr.bf16.mxu0 0
    %1595 = vmatpush1.bf16.msra.mxu0 0
    %1596 = vmatprep.mubr.bf16.mxu0 0
    %1597 = vmatmul.mubr.bf16.gmra.mrb[0].mxu0 %v897
    %v1598 = vpop.f32.mrb[0].mxu0
    %v1599 = vadd.f32 0.0, %v1598
    %v1600 = vpop.f32.mrb[0].mxu0
    %v1601 = vadd.f32 0.0, %v1600
    %v1602 = vpop.f32.mrb[0].mxu0
    %v1603 = vadd.f32 0.0, %v1602
    %v1604 = vpop.f32.mrb[0].mxu0
    %v1605 = vadd.f32 0.0, %v1604
    %1606 = vdwg.mxu0
    %v1607 = vadd.f32 %v1513, %v1556
    %v1608 = vadd.f32 %v1514, %v1558
    %v1609 = vadd.f32 %v1515, %v1599
    %v1610 = vadd.f32 %v1516, %v1601
    %v1611 = vadd.f32 %v1517, %v1560
    %v1612 = vadd.f32 %v1518, %v1562
    %v1613 = vadd.f32 %v1519, %v1603
    %v1614 = vadd.f32 %v1520, %v1605
    %v1615 = vxor.u32 %v1607, 2147483648
    %v1616 = vxor.u32 %v1611, 2147483648
    %v1617 = vmul.f32 %v1615, 1.442695
    %v1618 = vpow.pop %v1617
    %v1619 = vmul.f32 %v1616, 1.442695
    %v1620 = vpow.pop %v1619
    %v1621 = vadd.f32 %v1618, 1.0
    %v1622 = vadd.f32 %v1620, 1.0
    %v1623 = vrcp.pop %v1621
    %v1624 = vmul.f32 1.0, %v1623
    %v1625 = vrcp.pop %v1622
    %v1626 = vmul.f32 1.0, %v1625
    %v1627 = vxor.u32 %v1608, 2147483648
    %v1628 = vxor.u32 %v1612, 2147483648
    %v1629 = vmul.f32 %v1627, 1.442695
    %v1630 = vpow.pop %v1629
    %v1631 = vmul.f32 %v1628, 1.442695
    %v1632 = vpow.pop %v1631
    %v1633 = vadd.f32 %v1630, 1.0
    %v1634 = vadd.f32 %v1632, 1.0
    %v1635 = vrcp.pop %v1633
    %v1636 = vmul.f32 1.0, %v1635
    %v1637 = vrcp.pop %v1634
    %v1638 = vmul.f32 1.0, %v1637
    %v1639 = vtanh.pop %v1609
    %v1640 = vtanh.pop %v1613
    %v1641 = vxor.u32 %v1610, 2147483648
    %v1642 = vxor.u32 %v1614, 2147483648
    %v1643 = vmul.f32 %v1641, 1.442695
    %v1644 = vpow.pop %v1643
    %v1645 = vmul.f32 %v1642, 1.442695
    %v1646 = vpow.pop %v1645
    %v1647 = vadd.f32 %v1644, 1.0
    %v1648 = vadd.f32 %v1646, 1.0
    %v1649 = vrcp.pop %v1647
    %v1650 = vmul.f32 1.0, %v1649
    %v1651 = vrcp.pop %v1648
    %v1652 = vmul.f32 1.0, %v1651
    %v1653 = vmul.f32 %v1636, %v891
    %v1654 = vmul.f32 %v1638, %v892
    %v1655 = vmul.f32 %v1624, %v1639
    %v1656 = vmul.f32 %v1626, %v1640
    %v1657 = vadd.f32 %v1653, %v1655
    %v1658 = vadd.f32 %v1654, %v1656
    %v1659 = vtanh.pop %v1657
    %v1660 = vtanh.pop %v1658
    %v1661 = vmul.f32 %v1650, %v1659
    %v1662 = vmul.f32 %v1652, %v1660
    %v1663 = vpack.c.bf16 %v1662, %v1661
    %v1664 = vpack.c.bf16 %v1509, %v1508
    %1665 = vmatprep.subr.bf16.mxu0 %v1059
    %1666 = vmatpush1.bf16.msra.mxu0 %v1058
    %1667 = vmatprep.subr.bf16.mxu0 %v1063
    %1668 = vmatpush1.bf16.msra.mxu0 %v1062
    %1669 = vmatprep.subr.bf16.mxu0 %v1067
    %1670 = vmatpush1.bf16.msra.mxu0 %v1066
    %1671 = vmatprep.subr.bf16.mxu0 %v1071
    %1672 = vmatpush1.bf16.msra.mxu0 %v1070
    %1673 = vmatprep.subr.bf16.mxu0 %v1075
    %1674 = vmatpush1.bf16.msra.mxu0 %v1074
    %1675 = vmatprep.subr.bf16.mxu0 %v1079
    %1676 = vmatpush1.bf16.msra.mxu0 %v1078
    %1677 = vmatprep.subr.bf16.mxu0 %v1083
    %1678 = vmatpush1.bf16.msra.mxu0 %v1082
    %1679 = vmatprep.subr.bf16.mxu0 %v1087
    %1680 = vmatpush1.bf16.msra.mxu0 %v1086
    %1681 = vmatprep.subr.bf16.mxu0 0
    %1682 = vmatpush1.bf16.msra.mxu0 0
    %1683 = vmatprep.subr.bf16.mxu0 0
    %1684 = vmatpush1.bf16.msra.mxu0 0
    %1685 = vmatprep.subr.bf16.mxu0 0
    %1686 = vmatpush1.bf16.msra.mxu0 0
    %1687 = vmatprep.subr.bf16.mxu0 0
    %1688 = vmatpush1.bf16.msra.mxu0 0
    %1689 = vmatprep.subr.bf16.mxu0 0
    %1690 = vmatpush1.bf16.msra.mxu0 0
    %1691 = vmatprep.subr.bf16.mxu0 0
    %1692 = vmatpush1.bf16.msra.mxu0 0
    %1693 = vmatprep.subr.bf16.mxu0 0
    %1694 = vmatpush1.bf16.msra.mxu0 0
    %1695 = vmatprep.subr.bf16.mxu0 0
    %1696 = vmatpush1.bf16.msra.mxu0 0
    %1697 = vmatprep.mubr.bf16.mxu0 0
    %1698 = vmatmul.mubr.bf16.gmra.mrb[0].mxu0 %v1664
    %v1699 = vpop.f32.mrb[0].mxu0
    %v1700 = vadd.f32 0.0, %v1699
    %v1701 = vpop.f32.mrb[0].mxu0
    %v1702 = vadd.f32 0.0, %v1701
    %v1703 = vpop.f32.mrb[0].mxu0
    %v1704 = vadd.f32 0.0, %v1703
    %v1705 = vpop.f32.mrb[0].mxu0
    %v1706 = vadd.f32 0.0, %v1705
    %1707 = vdwg.mxu0
    %1708 = vmatprep.subr.bf16.mxu0 %v1061
    %1709 = vmatpush1.bf16.msra.mxu0 %v1060
    %1710 = vmatprep.subr.bf16.mxu0 %v1065
    %1711 = vmatpush1.bf16.msra.mxu0 %v1064
    %1712 = vmatprep.subr.bf16.mxu0 %v1069
    %1713 = vmatpush1.bf16.msra.mxu0 %v1068
    %1714 = vmatprep.subr.bf16.mxu0 %v1073
    %1715 = vmatpush1.bf16.msra.mxu0 %v1072
    %1716 = vmatprep.subr.bf16.mxu0 %v1077
    %1717 = vmatpush1.bf16.msra.mxu0 %v1076
    %1718 = vmatprep.subr.bf16.mxu0 %v1081
    %1719 = vmatpush1.bf16.msra.mxu0 %v1080
    %1720 = vmatprep.subr.bf16.mxu0 %v1085
    %1721 = vmatpush1.bf16.msra.mxu0 %v1084
    %1722 = vmatprep.subr.bf16.mxu0 %v1089
    %1723 = vmatpush1.bf16.msra.mxu0 %v1088
    %1724 = vmatprep.subr.bf16.mxu0 0
    %1725 = vmatpush1.bf16.msra.mxu0 0
    %1726 = vmatprep.subr.bf16.mxu0 0
    %1727 = vmatpush1.bf16.msra.mxu0 0
    %1728 = vmatprep.subr.bf16.mxu0 0
    %1729 = vmatpush1.bf16.msra.mxu0 0
    %1730 = vmatprep.subr.bf16.mxu0 0
    %1731 = vmatpush1.bf16.msra.mxu0 0
    %1732 = vmatprep.subr.bf16.mxu0 0
    %1733 = vmatpush1.bf16.msra.mxu0 0
    %1734 = vmatprep.subr.bf16.mxu0 0
    %1735 = vmatpush1.bf16.msra.mxu0 0
    %1736 = vmatprep.subr.bf16.mxu0 0
    %1737 = vmatpush1.bf16.msra.mxu0 0
    %1738 = vmatprep.subr.bf16.mxu0 0
    %1739 = vmatpush1.bf16.msra.mxu0 0
    %1740 = vmatprep.mubr.bf16.mxu0 0
    %1741 = vmatmul.mubr.bf16.gmra.mrb[0].mxu0 %v1664
    %v1742 = vpop.f32.mrb[0].mxu0
    %v1743 = vadd.f32 0.0, %v1742
    %v1744 = vpop.f32.mrb[0].mxu0
    %v1745 = vadd.f32 0.0, %v1744
    %v1746 = vpop.f32.mrb[0].mxu0
    %v1747 = vadd.f32 0.0, %v1746
    %v1748 = vpop.f32.mrb[0].mxu0
    %v1749 = vadd.f32 0.0, %v1748
    %1750 = vdwg.mxu0
    %1751 = vmatprep.subr.bf16.mxu0 %v1305
    %1752 = vmatpush1.bf16.msra.mxu0 %v1304
    %1753 = vmatprep.subr.bf16.mxu0 %v1309
    %1754 = vmatpush1.bf16.msra.mxu0 %v1308
    %1755 = vmatprep.subr.bf16.mxu0 %v1313
    %1756 = vmatpush1.bf16.msra.mxu0 %v1312
    %1757 = vmatprep.subr.bf16.mxu0 %v1317
    %1758 = vmatpush1.bf16.msra.mxu0 %v1316
    %1759 = vmatprep.subr.bf16.mxu0 %v1321
    %1760 = vmatpush1.bf16.msra.mxu0 %v1320
    %1761 = vmatprep.subr.bf16.mxu0 %v1325
    %1762 = vmatpush1.bf16.msra.mxu0 %v1324
    %1763 = vmatprep.subr.bf16.mxu0 %v1329
    %1764 = vmatpush1.bf16.msra.mxu0 %v1328
    %1765 = vmatprep.subr.bf16.mxu0 %v1333
    %1766 = vmatpush1.bf16.msra.mxu0 %v1332
    %1767 = vmatprep.subr.bf16.mxu0 0
    %1768 = vmatpush1.bf16.msra.mxu0 0
    %1769 = vmatprep.subr.bf16.mxu0 0
    %1770 = vmatpush1.bf16.msra.mxu0 0
    %1771 = vmatprep.subr.bf16.mxu0 0
    %1772 = vmatpush1.bf16.msra.mxu0 0
    %1773 = vmatprep.subr.bf16.mxu0 0
    %1774 = vmatpush1.bf16.msra.mxu0 0
    %1775 = vmatprep.subr.bf16.mxu0 0
    %1776 = vmatpush1.bf16.msra.mxu0 0
    %1777 = vmatprep.subr.bf16.mxu0 0
    %1778 = vmatpush1.bf16.msra.mxu0 0
    %1779 = vmatprep.subr.bf16.mxu0 0
    %1780 = vmatpush1.bf16.msra.mxu0 0
    %1781 = vmatprep.subr.bf16.mxu0 0
    %1782 = vmatpush1.bf16.msra.mxu0 0
    %1783 = vmatprep.mubr.bf16.mxu0 0
    %1784 = vmatmul.mubr.bf16.gmra.mrb[0].mxu0 %v1663
    %v1785 = vpop.f32.mrb[0].mxu0
    %v1786 = vadd.f32 %v1700, %v1785
    %v1787 = vpop.f32.mrb[0].mxu0
    %v1788 = vadd.f32 %v1702, %v1787
    %v1789 = vpop.f32.mrb[0].mxu0
    %v1790 = vadd.f32 %v1704, %v1789
    %v1791 = vpop.f32.mrb[0].mxu0
    %v1792 = vadd.f32 %v1706, %v1791
    %1793 = vdwg.mxu0
    %1794 = vmatprep.subr.bf16.mxu0 %v1307
    %1795 = vmatpush1.bf16.msra.mxu0 %v1306
    %1796 = vmatprep.subr.bf16.mxu0 %v1311
    %1797 = vmatpush1.bf16.msra.mxu0 %v1310
    %1798 = vmatprep.subr.bf16.mxu0 %v1315
    %1799 = vmatpush1.bf16.msra.mxu0 %v1314
    %1800 = vmatprep.subr.bf16.mxu0 %v1319
    %1801 = vmatpush1.bf16.msra.mxu0 %v1318
    %1802 = vmatprep.subr.bf16.mxu0 %v1323
    %1803 = vmatpush1.bf16.msra.mxu0 %v1322
    %1804 = vmatprep.subr.bf16.mxu0 %v1327
    %1805 = vmatpush1.bf16.msra.mxu0 %v1326
    %1806 = vmatprep.subr.bf16.mxu0 %v1331
    %1807 = vmatpush1.bf16.msra.mxu0 %v1330
    %1808 = vmatprep.subr.bf16.mxu0 %v1335
    %1809 = vmatpush1.bf16.msra.mxu0 %v1334
    %1810 = vmatprep.subr.bf16.mxu0 0
    %1811 = vmatpush1.bf16.msra.mxu0 0
    %1812 = vmatprep.subr.bf16.mxu0 0
    %1813 = vmatpush1.bf16.msra.mxu0 0
    %1814 = vmatprep.subr.bf16.mxu0 0
    %1815 = vmatpush1.bf16.msra.mxu0 0
    %1816 = vmatprep.subr.bf16.mxu0 0
    %1817 = vmatpush1.bf16.msra.mxu0 0
    %1818 = vmatprep.subr.bf16.mxu0 0
    %1819 = vmatpush1.bf16.msra.mxu0 0
    %1820 = vmatprep.subr.bf16.mxu0 0
    %1821 = vmatpush1.bf16.msra.mxu0 0
    %1822 = vmatprep.subr.bf16.mxu0 0
    %1823 = vmatpush1.bf16.msra.mxu0 0
    %1824 = vmatprep.subr.bf16.mxu0 0
    %1825 = vmatpush1.bf16.msra.mxu0 0
    %1826 = vmatprep.mubr.bf16.mxu0 0
    %1827 = vmatmul.mubr.bf16.gmra.mrb[0].mxu0 %v1663
    %v1828 = vpop.f32.mrb[0].mxu0
    %v1829 = vadd.f32 %v1743, %v1828
    %v1830 = vpop.f32.mrb[0].mxu0
    %v1831 = vadd.f32 %v1745, %v1830
    %v1832 = vpop.f32.mrb[0].mxu0
    %v1833 = vadd.f32 %v1747, %v1832
    %v1834 = vpop.f32.mrb[0].mxu0
    %v1835 = vadd.f32 %v1749, %v1834
    %1836 = vdwg.mxu0
    %v1837 = vadd.f32 %v1786, %v535
    %v1838 = vadd.f32 %v1788, %v539
    %v1839 = vadd.f32 %v1829, %v543
    %v1840 = vadd.f32 %v1831, %v547
    %v1841 = vadd.f32 %v1790, %v535
    %v1842 = vadd.f32 %v1792, %v539
    %v1843 = vadd.f32 %v1833, %v543
    %v1844 = vadd.f32 %v1835, %v547
    %v1845 = vxor.u32 %v1837, 2147483648
    %v1846 = vxor.u32 %v1841, 2147483648
    %v1847 = vmul.f32 %v1845, 1.442695
    %v1848 = vpow.pop %v1847
    %v1849 = vmul.f32 %v1846, 1.442695
    %v1850 = vpow.pop %v1849
    %v1851 = vadd.f32 %v1848, 1.0
    %v1852 = vadd.f32 %v1850, 1.0
    %v1853 = vrcp.pop %v1851
    %v1854 = vmul.f32 1.0, %v1853
    %v1855 = vrcp.pop %v1852
    %v1856 = vmul.f32 1.0, %v1855
    %v1857 = vxor.u32 %v1838, 2147483648
    %v1858 = vxor.u32 %v1842, 2147483648
    %v1859 = vmul.f32 %v1857, 1.442695
    %v1860 = vpow.pop %v1859
    %v1861 = vmul.f32 %v1858, 1.442695
    %v1862 = vpow.pop %v1861
    %v1863 = vadd.f32 %v1860, 1.0
    %v1864 = vadd.f32 %v1862, 1.0
    %v1865 = vrcp.pop %v1863
    %v1866 = vmul.f32 1.0, %v1865
    %v1867 = vrcp.pop %v1864
    %v1868 = vmul.f32 1.0, %v1867
    %v1869 = vtanh.pop %v1839
    %v1870 = vtanh.pop %v1843
    %v1871 = vxor.u32 %v1840, 2147483648
    %v1872 = vxor.u32 %v1844, 2147483648
    %v1873 = vmul.f32 %v1871, 1.442695
    %v1874 = vpow.pop %v1873
    %v1875 = vmul.f32 %v1872, 1.442695
    %v1876 = vpow.pop %v1875
    %v1877 = vadd.f32 %v1874, 1.0
    %v1878 = vadd.f32 %v1876, 1.0
    %v1879 = vrcp.pop %v1877
    %v1880 = vmul.f32 1.0, %v1879
    %v1881 = vrcp.pop %v1878
    %v1882 = vmul.f32 1.0, %v1881
    %v1883 = vmul.f32 %v1866, %v1504
    %v1884 = vmul.f32 %v1868, %v1505
    %v1885 = vmul.f32 %v1854, %v1869
    %v1886 = vmul.f32 %v1856, %v1870
    %v1887 = vadd.f32 %v1883, %v1885
    %v1888 = vadd.f32 %v1884, %v1886
    %v1889 = vtanh.pop %v1887
    %v1890 = vtanh.pop %v1888
    %v1891 = vmul.f32 %v1880, %v1889
    %v1892 = vmul.f32 %v1882, %v1890
    %s1893 = smul.u32 4, 4
    %s1894 = smul.addr %s1893, 8
    %s1895 = scalar_lea.vmem [#allocation2], %s1894
    %v1896 = vld [vmem:[%s1895] sm:$0xff]
    %v1897 = vld [vmem:[%s1895 + $0x8] sm:$0xff]
    %v1898 = vld [vmem:[%s1895 + $0x10] sm:$0xff]
    %v1899 = vld [vmem:[%s1895 + $0x18] sm:$0xff]
    %v1900 = vld [vmem:[%s1895 + $0x20] sm:$0xff]
    %v1901 = vld [vmem:[%s1895 + $0x28] sm:$0xff]
    %v1902 = vld [vmem:[%s1895 + $0x30] sm:$0xff]
    %v1903 = vld [vmem:[%s1895 + $0x38] sm:$0xff]
    %1904 = vmatprep.subr.bf16.mxu0 %v692
    %1905 = vmatpush1.bf16.msra.mxu0 %v691
    %1906 = vmatprep.subr.bf16.mxu0 %v696
    %1907 = vmatpush1.bf16.msra.mxu0 %v695
    %1908 = vmatprep.subr.bf16.mxu0 %v700
    %1909 = vmatpush1.bf16.msra.mxu0 %v699
    %1910 = vmatprep.subr.bf16.mxu0 %v704
    %1911 = vmatpush1.bf16.msra.mxu0 %v703
    %1912 = vmatprep.subr.bf16.mxu0 %v708
    %1913 = vmatpush1.bf16.msra.mxu0 %v707
    %1914 = vmatprep.subr.bf16.mxu0 %v712
    %1915 = vmatpush1.bf16.msra.mxu0 %v711
    %1916 = vmatprep.subr.bf16.mxu0 %v716
    %1917 = vmatpush1.bf16.msra.mxu0 %v715
    %1918 = vmatprep.subr.bf16.mxu0 %v720
    %1919 = vmatpush1.bf16.msra.mxu0 %v719
    %1920 = vmatprep.subr.bf16.mxu0 0
    %1921 = vmatpush1.bf16.msra.mxu0 0
    %1922 = vmatprep.subr.bf16.mxu0 0
    %1923 = vmatpush1.bf16.msra.mxu0 0
    %1924 = vmatprep.subr.bf16.mxu0 0
    %1925 = vmatpush1.bf16.msra.mxu0 0
    %1926 = vmatprep.subr.bf16.mxu0 0
    %1927 = vmatpush1.bf16.msra.mxu0 0
    %1928 = vmatprep.subr.bf16.mxu0 0
    %1929 = vmatpush1.bf16.msra.mxu0 0
    %1930 = vmatprep.subr.bf16.mxu0 0
    %1931 = vmatpush1.bf16.msra.mxu0 0
    %1932 = vmatprep.subr.bf16.mxu0 0
    %1933 = vmatpush1.bf16.msra.mxu0 0
    %1934 = vmatprep.subr.bf16.mxu0 0
    %1935 = vmatpush1.bf16.msra.mxu0 0
    %1936 = vmatprep.mubr.bf16.mxu0 0
    %1937 = vmatmul.mubr.bf16.gmra.mrb[0].mxu0 %v1663
    %v1938 = vpop.f32.mrb[0].mxu0
    %v1939 = vadd.f32 0.0, %v1938
    %v1940 = vpop.f32.mrb[0].mxu0
    %v1941 = vadd.f32 0.0, %v1940
    %v1942 = vpop.f32.mrb[0].mxu0
    %v1943 = vadd.f32 0.0, %v1942
    %v1944 = vpop.f32.mrb[0].mxu0
    %v1945 = vadd.f32 0.0, %v1944
    %1946 = vdwg.mxu0
    %1947 = vmatprep.subr.bf16.mxu0 %v694
    %1948 = vmatpush1.bf16.msra.mxu0 %v693
    %1949 = vmatprep.subr.bf16.mxu0 %v698
    %1950 = vmatpush1.bf16.msra.mxu0 %v697
    %1951 = vmatprep.subr.bf16.mxu0 %v702
    %1952 = vmatpush1.bf16.msra.mxu0 %v701
    %1953 = vmatprep.subr.bf16.mxu0 %v706
    %1954 = vmatpush1.bf16.msra.mxu0 %v705
    %1955 = vmatprep.subr.bf16.mxu0 %v710
    %1956 = vmatpush1.bf16.msra.mxu0 %v709
    %1957 = vmatprep.subr.bf16.mxu0 %v714
    %1958 = vmatpush1.bf16.msra.mxu0 %v713
    %1959 = vmatprep.subr.bf16.mxu0 %v718
    %1960 = vmatpush1.bf16.msra.mxu0 %v717
    %1961 = vmatprep.subr.bf16.mxu0 %v722
    %1962 = vmatpush1.bf16.msra.mxu0 %v721
    %1963 = vmatprep.subr.bf16.mxu0 0
    %1964 = vmatpush1.bf16.msra.mxu0 0
    %1965 = vmatprep.subr.bf16.mxu0 0
    %1966 = vmatpush1.bf16.msra.mxu0 0
    %1967 = vmatprep.subr.bf16.mxu0 0
    %1968 = vmatpush1.bf16.msra.mxu0 0
    %1969 = vmatprep.subr.bf16.mxu0 0
    %1970 = vmatpush1.bf16.msra.mxu0 0
    %1971 = vmatprep.subr.bf16.mxu0 0
    %1972 = vmatpush1.bf16.msra.mxu0 0
    %1973 = vmatprep.subr.bf16.mxu0 0
    %1974 = vmatpush1.bf16.msra.mxu0 0
    %1975 = vmatprep.subr.bf16.mxu0 0
    %1976 = vmatpush1.bf16.msra.mxu0 0
    %1977 = vmatprep.subr.bf16.mxu0 0
    %1978 = vmatpush1.bf16.msra.mxu0 0
    %1979 = vmatprep.mubr.bf16.mxu0 0
    %1980 = vmatmul.mubr.bf16.gmra.mrb[0].mxu0 %v1663
    %v1981 = vpop.f32.mrb[0].mxu0
    %v1982 = vadd.f32 0.0, %v1981
    %v1983 = vpop.f32.mrb[0].mxu0
    %v1984 = vadd.f32 0.0, %v1983
    %v1985 = vpop.f32.mrb[0].mxu0
    %v1986 = vadd.f32 0.0, %v1985
    %v1987 = vpop.f32.mrb[0].mxu0
    %v1988 = vadd.f32 0.0, %v1987
    %1989 = vdwg.mxu0
    %v1990 = vadd.f32 %v1896, %v1939
    %v1991 = vadd.f32 %v1897, %v1941
    %v1992 = vadd.f32 %v1898, %v1982
    %v1993 = vadd.f32 %v1899, %v1984
    %v1994 = vadd.f32 %v1900, %v1943
    %v1995 = vadd.f32 %v1901, %v1945
    %v1996 = vadd.f32 %v1902, %v1986
    %v1997 = vadd.f32 %v1903, %v1988
    %v1998 = vxor.u32 %v1990, 2147483648
    %v1999 = vxor.u32 %v1994, 2147483648
    %v2000 = vmul.f32 %v1998, 1.442695
    %v2001 = vpow.pop %v2000
    %v2002 = vmul.f32 %v1999, 1.442695
    %v2003 = vpow.pop %v2002
    %v2004 = vadd.f32 %v2001, 1.0
    %v2005 = vadd.f32 %v2003, 1.0
    %v2006 = vrcp.pop %v2004
    %v2007 = vmul.f32 1.0, %v2006
    %v2008 = vrcp.pop %v2005
    %v2009 = vmul.f32 1.0, %v2008
    %v2010 = vxor.u32 %v1991, 2147483648
    %v2011 = vxor.u32 %v1995, 2147483648
    %v2012 = vmul.f32 %v2010, 1.442695
    %v2013 = vpow.pop %v2012
    %v2014 = vmul.f32 %v2011, 1.442695
    %v2015 = vpow.pop %v2014
    %v2016 = vadd.f32 %v2013, 1.0
    %v2017 = vadd.f32 %v2015, 1.0
    %v2018 = vrcp.pop %v2016
    %v2019 = vmul.f32 1.0, %v2018
    %v2020 = vrcp.pop %v2017
    %v2021 = vmul.f32 1.0, %v2020
    %v2022 = vtanh.pop %v1992
    %v2023 = vtanh.pop %v1996
    %v2024 = vxor.u32 %v1993, 2147483648
    %v2025 = vxor.u32 %v1997, 2147483648
    %v2026 = vmul.f32 %v2024, 1.442695
    %v2027 = vpow.pop %v2026
    %v2028 = vmul.f32 %v2025, 1.442695
    %v2029 = vpow.pop %v2028
    %v2030 = vadd.f32 %v2027, 1.0
    %v2031 = vadd.f32 %v2029, 1.0
    %v2032 = vrcp.pop %v2030
    %v2033 = vmul.f32 1.0, %v2032
    %v2034 = vrcp.pop %v2031
    %v2035 = vmul.f32 1.0, %v2034
    %v2036 = vmul.f32 %v2019, %v1657
    %v2037 = vmul.f32 %v2021, %v1658
    %v2038 = vmul.f32 %v2007, %v2022
    %v2039 = vmul.f32 %v2009, %v2023
    %v2040 = vadd.f32 %v2036, %v2038
    %v2041 = vadd.f32 %v2037, %v2039
    %v2042 = vtanh.pop %v2040
    %v2043 = vtanh.pop %v2041
    %v2044 = vmul.f32 %v2033, %v2042
    %v2045 = vmul.f32 %v2035, %v2043
    %v2046 = vpack.c.bf16 %v2045, %v2044
    %v2047 = vpack.c.bf16 %v1892, %v1891
    %2048 = vmatprep.subr.bf16.mxu0 %v1059
    %2049 = vmatpush1.bf16.msra.mxu0 %v1058
    %2050 = vmatprep.subr.bf16.mxu0 %v1063
    %2051 = vmatpush1.bf16.msra.mxu0 %v1062
    %2052 = vmatprep.subr.bf16.mxu0 %v1067
    %2053 = vmatpush1.bf16.msra.mxu0 %v1066
    %2054 = vmatprep.subr.bf16.mxu0 %v1071
    %2055 = vmatpush1.bf16.msra.mxu0 %v1070
    %2056 = vmatprep.subr.bf16.mxu0 %v1075
    %2057 = vmatpush1.bf16.msra.mxu0 %v1074
    %2058 = vmatprep.subr.bf16.mxu0 %v1079
    %2059 = vmatpush1.bf16.msra.mxu0 %v1078
    %2060 = vmatprep.subr.bf16.mxu0 %v1083
    %2061 = vmatpush1.bf16.msra.mxu0 %v1082
    %2062 = vmatprep.subr.bf16.mxu0 %v1087
    %2063 = vmatpush1.bf16.msra.mxu0 %v1086
    %2064 = vmatprep.subr.bf16.mxu0 0
    %2065 = vmatpush1.bf16.msra.mxu0 0
    %2066 = vmatprep.subr.bf16.mxu0 0
    %2067 = vmatpush1.bf16.msra.mxu0 0
    %2068 = vmatprep.subr.bf16.mxu0 0
    %2069 = vmatpush1.bf16.msra.mxu0 0
    %2070 = vmatprep.subr.bf16.mxu0 0
    %2071 = vmatpush1.bf16.msra.mxu0 0
    %2072 = vmatprep.subr.bf16.mxu0 0
    %2073 = vmatpush1.bf16.msra.mxu0 0
    %2074 = vmatprep.subr.bf16.mxu0 0
    %2075 = vmatpush1.bf16.msra.mxu0 0
    %2076 = vmatprep.subr.bf16.mxu0 0
    %2077 = vmatpush1.bf16.msra.mxu0 0
    %2078 = vmatprep.subr.bf16.mxu0 0
    %2079 = vmatpush1.bf16.msra.mxu0 0
    %2080 = vmatprep.mubr.bf16.mxu0 0
    %2081 = vmatmul.mubr.bf16.gmra.mrb[0].mxu0 %v2047
    %v2082 = vpop.f32.mrb[0].mxu0
    %v2083 = vadd.f32 0.0, %v2082
    %v2084 = vpop.f32.mrb[0].mxu0
    %v2085 = vadd.f32 0.0, %v2084
    %v2086 = vpop.f32.mrb[0].mxu0
    %v2087 = vadd.f32 0.0, %v2086
    %v2088 = vpop.f32.mrb[0].mxu0
    %v2089 = vadd.f32 0.0, %v2088
    %2090 = vdwg.mxu0
    %2091 = vmatprep.subr.bf16.mxu0 %v1061
    %2092 = vmatpush1.bf16.msra.mxu0 %v1060
    %2093 = vmatprep.subr.bf16.mxu0 %v1065
    %2094 = vmatpush1.bf16.msra.mxu0 %v1064
    %2095 = vmatprep.subr.bf16.mxu0 %v1069
    %2096 = vmatpush1.bf16.msra.mxu0 %v1068
    %2097 = vmatprep.subr.bf16.mxu0 %v1073
    %2098 = vmatpush1.bf16.msra.mxu0 %v1072
    %2099 = vmatprep.subr.bf16.mxu0 %v1077
    %2100 = vmatpush1.bf16.msra.mxu0 %v1076
    %2101 = vmatprep.subr.bf16.mxu0 %v1081
    %2102 = vmatpush1.bf16.msra.mxu0 %v1080
    %2103 = vmatprep.subr.bf16.mxu0 %v1085
    %2104 = vmatpush1.bf16.msra.mxu0 %v1084
    %2105 = vmatprep.subr.bf16.mxu0 %v1089
    %2106 = vmatpush1.bf16.msra.mxu0 %v1088
    %2107 = vmatprep.subr.bf16.mxu0 0
    %2108 = vmatpush1.bf16.msra.mxu0 0
    %2109 = vmatprep.subr.bf16.mxu0 0
    %2110 = vmatpush1.bf16.msra.mxu0 0
    %2111 = vmatprep.subr.bf16.mxu0 0
    %2112 = vmatpush1.bf16.msra.mxu0 0
    %2113 = vmatprep.subr.bf16.mxu0 0
    %2114 = vmatpush1.bf16.msra.mxu0 0
    %2115 = vmatprep.subr.bf16.mxu0 0
    %2116 = vmatpush1.bf16.msra.mxu0 0
    %2117 = vmatprep.subr.bf16.mxu0 0
    %2118 = vmatpush1.bf16.msra.mxu0 0
    %2119 = vmatprep.subr.bf16.mxu0 0
    %2120 = vmatpush1.bf16.msra.mxu0 0
    %2121 = vmatprep.subr.bf16.mxu0 0
    %2122 = vmatpush1.bf16.msra.mxu0 0
    %2123 = vmatprep.mubr.bf16.mxu0 0
    %2124 = vmatmul.mubr.bf16.gmra.mrb[0].mxu0 %v2047
    %v2125 = vpop.f32.mrb[0].mxu0
    %v2126 = vadd.f32 0.0, %v2125
    %v2127 = vpop.f32.mrb[0].mxu0
    %v2128 = vadd.f32 0.0, %v2127
    %v2129 = vpop.f32.mrb[0].mxu0
    %v2130 = vadd.f32 0.0, %v2129
    %v2131 = vpop.f32.mrb[0].mxu0
    %v2132 = vadd.f32 0.0, %v2131
    %2133 = vdwg.mxu0
    %2134 = vmatprep.subr.bf16.mxu0 %v1305
    %2135 = vmatpush1.bf16.msra.mxu0 %v1304
    %2136 = vmatprep.subr.bf16.mxu0 %v1309
    %2137 = vmatpush1.bf16.msra.mxu0 %v1308
    %2138 = vmatprep.subr.bf16.mxu0 %v1313
    %2139 = vmatpush1.bf16.msra.mxu0 %v1312
    %2140 = vmatprep.subr.bf16.mxu0 %v1317
    %2141 = vmatpush1.bf16.msra.mxu0 %v1316
    %2142 = vmatprep.subr.bf16.mxu0 %v1321
    %2143 = vmatpush1.bf16.msra.mxu0 %v1320
    %2144 = vmatprep.subr.bf16.mxu0 %v1325
    %2145 = vmatpush1.bf16.msra.mxu0 %v1324
    %2146 = vmatprep.subr.bf16.mxu0 %v1329
    %2147 = vmatpush1.bf16.msra.mxu0 %v1328
    %2148 = vmatprep.subr.bf16.mxu0 %v1333
    %2149 = vmatpush1.bf16.msra.mxu0 %v1332
    %2150 = vmatprep.subr.bf16.mxu0 0
    %2151 = vmatpush1.bf16.msra.mxu0 0
    %2152 = vmatprep.subr.bf16.mxu0 0
    %2153 = vmatpush1.bf16.msra.mxu0 0
    %2154 = vmatprep.subr.bf16.mxu0 0
    %2155 = vmatpush1.bf16.msra.mxu0 0
    %2156 = vmatprep.subr.bf16.mxu0 0
    %2157 = vmatpush1.bf16.msra.mxu0 0
    %2158 = vmatprep.subr.bf16.mxu0 0
    %2159 = vmatpush1.bf16.msra.mxu0 0
    %2160 = vmatprep.subr.bf16.mxu0 0
    %2161 = vmatpush1.bf16.msra.mxu0 0
    %2162 = vmatprep.subr.bf16.mxu0 0
    %2163 = vmatpush1.bf16.msra.mxu0 0
    %2164 = vmatprep.subr.bf16.mxu0 0
    %2165 = vmatpush1.bf16.msra.mxu0 0
    %2166 = vmatprep.mubr.bf16.mxu0 0
    %2167 = vmatmul.mubr.bf16.gmra.mrb[0].mxu0 %v2046
    %v2168 = vpop.f32.mrb[0].mxu0
    %v2169 = vadd.f32 %v2083, %v2168
    %v2170 = vpop.f32.mrb[0].mxu0
    %v2171 = vadd.f32 %v2085, %v2170
    %v2172 = vpop.f32.mrb[0].mxu0
    %v2173 = vadd.f32 %v2087, %v2172
    %v2174 = vpop.f32.mrb[0].mxu0
    %v2175 = vadd.f32 %v2089, %v2174
    %2176 = vdwg.mxu0
    %2177 = vmatprep.subr.bf16.mxu0 %v1307
    %2178 = vmatpush1.bf16.msra.mxu0 %v1306
    %2179 = vmatprep.subr.bf16.mxu0 %v1311
    %2180 = vmatpush1.bf16.msra.mxu0 %v1310
    %2181 = vmatprep.subr.bf16.mxu0 %v1315
    %2182 = vmatpush1.bf16.msra.mxu0 %v1314
    %2183 = vmatprep.subr.bf16.mxu0 %v1319
    %2184 = vmatpush1.bf16.msra.mxu0 %v1318
    %2185 = vmatprep.subr.bf16.mxu0 %v1323
    %2186 = vmatpush1.bf16.msra.mxu0 %v1322
    %2187 = vmatprep.subr.bf16.mxu0 %v1327
    %2188 = vmatpush1.bf16.msra.mxu0 %v1326
    %2189 = vmatprep.subr.bf16.mxu0 %v1331
    %2190 = vmatpush1.bf16.msra.mxu0 %v1330
    %2191 = vmatprep.subr.bf16.mxu0 %v1335
    %2192 = vmatpush1.bf16.msra.mxu0 %v1334
    %2193 = vmatprep.subr.bf16.mxu0 0
    %2194 = vmatpush1.bf16.msra.mxu0 0
    %2195 = vmatprep.subr.bf16.mxu0 0
    %2196 = vmatpush1.bf16.msra.mxu0 0
    %2197 = vmatprep.subr.bf16.mxu0 0
    %2198 = vmatpush1.bf16.msra.mxu0 0
    %2199 = vmatprep.subr.bf16.mxu0 0
    %2200 = vmatpush1.bf16.msra.mxu0 0
    %2201 = vmatprep.subr.bf16.mxu0 0
    %2202 = vmatpush1.bf16.msra.mxu0 0
    %2203 = vmatprep.subr.bf16.mxu0 0
    %2204 = vmatpush1.bf16.msra.mxu0 0
    %2205 = vmatprep.subr.bf16.mxu0 0
    %2206 = vmatpush1.bf16.msra.mxu0 0
    %2207 = vmatprep.subr.bf16.mxu0 0
    %2208 = vmatpush1.bf16.msra.mxu0 0
    %2209 = vmatprep.mubr.bf16.mxu0 0
    %2210 = vmatmul.mubr.bf16.gmra.mrb[0].mxu0 %v2046
    %v2211 = vpop.f32.mrb[0].mxu0
    %v2212 = vadd.f32 %v2126, %v2211
    %v2213 = vpop.f32.mrb[0].mxu0
    %v2214 = vadd.f32 %v2128, %v2213
    %v2215 = vpop.f32.mrb[0].mxu0
    %v2216 = vadd.f32 %v2130, %v2215
    %v2217 = vpop.f32.mrb[0].mxu0
    %v2218 = vadd.f32 %v2132, %v2217
    %2219 = vdwg.mxu0
    %v2220 = vadd.f32 %v2169, %v535
    %v2221 = vadd.f32 %v2171, %v539
    %v2222 = vadd.f32 %v2212, %v543
    %v2223 = vadd.f32 %v2214, %v547
    %v2224 = vadd.f32 %v2173, %v535
    %v2225 = vadd.f32 %v2175, %v539
    %v2226 = vadd.f32 %v2216, %v543
    %v2227 = vadd.f32 %v2218, %v547
    %v2228 = vxor.u32 %v2220, 2147483648
    %v2229 = vxor.u32 %v2224, 2147483648
    %v2230 = vmul.f32 %v2228, 1.442695
    %v2231 = vpow.pop %v2230
    %v2232 = vmul.f32 %v2229, 1.442695
    %v2233 = vpow.pop %v2232
    %v2234 = vadd.f32 %v2231, 1.0
    %v2235 = vadd.f32 %v2233, 1.0
    %v2236 = vrcp.pop %v2234
    %v2237 = vmul.f32 1.0, %v2236
    %v2238 = vrcp.pop %v2235
    %v2239 = vmul.f32 1.0, %v2238
    %v2240 = vxor.u32 %v2221, 2147483648
    %v2241 = vxor.u32 %v2225, 2147483648
    %v2242 = vmul.f32 %v2240, 1.442695
    %v2243 = vpow.pop %v2242
    %v2244 = vmul.f32 %v2241, 1.442695
    %v2245 = vpow.pop %v2244
    %v2246 = vadd.f32 %v2243, 1.0
    %v2247 = vadd.f32 %v2245, 1.0
    %v2248 = vrcp.pop %v2246
    %v2249 = vmul.f32 1.0, %v2248
    %v2250 = vrcp.pop %v2247
    %v2251 = vmul.f32 1.0, %v2250
    %v2252 = vtanh.pop %v2222
    %v2253 = vtanh.pop %v2226
    %v2254 = vxor.u32 %v2223, 2147483648
    %v2255 = vxor.u32 %v2227, 2147483648
    %v2256 = vmul.f32 %v2254, 1.442695
    %v2257 = vpow.pop %v2256
    %v2258 = vmul.f32 %v2255, 1.442695
    %v2259 = vpow.pop %v2258
    %v2260 = vadd.f32 %v2257, 1.0
    %v2261 = vadd.f32 %v2259, 1.0
    %v2262 = vrcp.pop %v2260
    %v2263 = vmul.f32 1.0, %v2262
    %v2264 = vrcp.pop %v2261
    %v2265 = vmul.f32 1.0, %v2264
    %v2266 = vmul.f32 %v2249, %v1887
    %v2267 = vmul.f32 %v2251, %v1888
    %v2268 = vmul.f32 %v2237, %v2252
    %v2269 = vmul.f32 %v2239, %v2253
    %v2270 = vadd.f32 %v2266, %v2268
    %v2271 = vadd.f32 %v2267, %v2269
    %v2272 = vtanh.pop %v2270
    %v2273 = vtanh.pop %v2271
    %v2274 = vmul.f32 %v2263, %v2272
    %v2275 = vmul.f32 %v2265, %v2273
    %s2276 = smul.u32 6, 4
    %s2277 = smul.addr %s2276, 8
    %s2278 = scalar_lea.vmem [#allocation2], %s2277
    %v2279 = vld [vmem:[%s2278] sm:$0xff]
    %v2280 = vld [vmem:[%s2278 + $0x8] sm:$0xff]
    %v2281 = vld [vmem:[%s2278 + $0x10] sm:$0xff]
    %v2282 = vld [vmem:[%s2278 + $0x18] sm:$0xff]
    %v2283 = vld [vmem:[%s2278 + $0x20] sm:$0xff]
    %v2284 = vld [vmem:[%s2278 + $0x28] sm:$0xff]
    %v2285 = vld [vmem:[%s2278 + $0x30] sm:$0xff]
    %v2286 = vld [vmem:[%s2278 + $0x38] sm:$0xff]
    %2287 = vmatprep.subr.bf16.mxu0 %v692
    %2288 = vmatpush1.bf16.msra.mxu0 %v691
    %2289 = vmatprep.subr.bf16.mxu0 %v696
    %2290 = vmatpush1.bf16.msra.mxu0 %v695
    %2291 = vmatprep.subr.bf16.mxu0 %v700
    %2292 = vmatpush1.bf16.msra.mxu0 %v699
    %2293 = vmatprep.subr.bf16.mxu0 %v704
    %2294 = vmatpush1.bf16.msra.mxu0 %v703
    %2295 = vmatprep.subr.bf16.mxu0 %v708
    %2296 = vmatpush1.bf16.msra.mxu0 %v707
    %2297 = vmatprep.subr.bf16.mxu0 %v712
    %2298 = vmatpush1.bf16.msra.mxu0 %v711
    %2299 = vmatprep.subr.bf16.mxu0 %v716
    %2300 = vmatpush1.bf16.msra.mxu0 %v715
    %2301 = vmatprep.subr.bf16.mxu0 %v720
    %2302 = vmatpush1.bf16.msra.mxu0 %v719
    %2303 = vmatprep.subr.bf16.mxu0 0
    %2304 = vmatpush1.bf16.msra.mxu0 0
    %2305 = vmatprep.subr.bf16.mxu0 0
    %2306 = vmatpush1.bf16.msra.mxu0 0
    %2307 = vmatprep.subr.bf16.mxu0 0
    %2308 = vmatpush1.bf16.msra.mxu0 0
    %2309 = vmatprep.subr.bf16.mxu0 0
    %2310 = vmatpush1.bf16.msra.mxu0 0
    %2311 = vmatprep.subr.bf16.mxu0 0
    %2312 = vmatpush1.bf16.msra.mxu0 0
    %2313 = vmatprep.subr.bf16.mxu0 0
    %2314 = vmatpush1.bf16.msra.mxu0 0
    %2315 = vmatprep.subr.bf16.mxu0 0
    %2316 = vmatpush1.bf16.msra.mxu0 0
    %2317 = vmatprep.subr.bf16.mxu0 0
    %2318 = vmatpush1.bf16.msra.mxu0 0
    %2319 = vmatprep.mubr.bf16.mxu0 0
    %2320 = vmatmul.mubr.bf16.gmra.mrb[0].mxu0 %v2046
    %v2321 = vpop.f32.mrb[0].mxu0
    %v2322 = vadd.f32 0.0, %v2321
    %v2323 = vpop.f32.mrb[0].mxu0
    %v2324 = vadd.f32 0.0, %v2323
    %v2325 = vpop.f32.mrb[0].mxu0
    %v2326 = vadd.f32 0.0, %v2325
    %v2327 = vpop.f32.mrb[0].mxu0
    %v2328 = vadd.f32 0.0, %v2327
    %2329 = vdwg.mxu0
    %2330 = vmatprep.subr.bf16.mxu0 %v694
    %2331 = vmatpush1.bf16.msra.mxu0 %v693
    %2332 = vmatprep.subr.bf16.mxu0 %v698
    %2333 = vmatpush1.bf16.msra.mxu0 %v697
    %2334 = vmatprep.subr.bf16.mxu0 %v702
    %2335 = vmatpush1.bf16.msra.mxu0 %v701
    %2336 = vmatprep.subr.bf16.mxu0 %v706
    %2337 = vmatpush1.bf16.msra.mxu0 %v705
    %2338 = vmatprep.subr.bf16.mxu0 %v710
    %2339 = vmatpush1.bf16.msra.mxu0 %v709
    %2340 = vmatprep.subr.bf16.mxu0 %v714
    %2341 = vmatpush1.bf16.msra.mxu0 %v713
    %2342 = vmatprep.subr.bf16.mxu0 %v718
    %2343 = vmatpush1.bf16.msra.mxu0 %v717
    %2344 = vmatprep.subr.bf16.mxu0 %v722
    %2345 = vmatpush1.bf16.msra.mxu0 %v721
    %2346 = vmatprep.subr.bf16.mxu0 0
    %2347 = vmatpush1.bf16.msra.mxu0 0
    %2348 = vmatprep.subr.bf16.mxu0 0
    %2349 = vmatpush1.bf16.msra.mxu0 0
    %2350 = vmatprep.subr.bf16.mxu0 0
    %2351 = vmatpush1.bf16.msra.mxu0 0
    %2352 = vmatprep.subr.bf16.mxu0 0
    %2353 = vmatpush1.bf16.msra.mxu0 0
    %2354 = vmatprep.subr.bf16.mxu0 0
    %2355 = vmatpush1.bf16.msra.mxu0 0
    %2356 = vmatprep.subr.bf16.mxu0 0
    %2357 = vmatpush1.bf16.msra.mxu0 0
    %2358 = vmatprep.subr.bf16.mxu0 0
    %2359 = vmatpush1.bf16.msra.mxu0 0
    %2360 = vmatprep.subr.bf16.mxu0 0
    %2361 = vmatpush1.bf16.msra.mxu0 0
    %2362 = vmatprep.mubr.bf16.mxu0 0
    %2363 = vmatmul.mubr.bf16.gmra.mrb[0].mxu0 %v2046
    %v2364 = vpop.f32.mrb[0].mxu0
    %v2365 = vadd.f32 0.0, %v2364
    %v2366 = vpop.f32.mrb[0].mxu0
    %v2367 = vadd.f32 0.0, %v2366
    %v2368 = vpop.f32.mrb[0].mxu0
    %v2369 = vadd.f32 0.0, %v2368
    %v2370 = vpop.f32.mrb[0].mxu0
    %v2371 = vadd.f32 0.0, %v2370
    %2372 = vdwg.mxu0
    %v2373 = vadd.f32 %v2279, %v2322
    %v2374 = vadd.f32 %v2280, %v2324
    %v2375 = vadd.f32 %v2281, %v2365
    %v2376 = vadd.f32 %v2282, %v2367
    %v2377 = vadd.f32 %v2283, %v2326
    %v2378 = vadd.f32 %v2284, %v2328
    %v2379 = vadd.f32 %v2285, %v2369
    %v2380 = vadd.f32 %v2286, %v2371
    %v2381 = vxor.u32 %v2373, 2147483648
    %v2382 = vxor.u32 %v2377, 2147483648
    %v2383 = vmul.f32 %v2381, 1.442695
    %v2384 = vpow.pop %v2383
    %v2385 = vmul.f32 %v2382, 1.442695
    %v2386 = vpow.pop %v2385
    %v2387 = vadd.f32 %v2384, 1.0
    %v2388 = vadd.f32 %v2386, 1.0
    %v2389 = vrcp.pop %v2387
    %v2390 = vmul.f32 1.0, %v2389
    %v2391 = vrcp.pop %v2388
    %v2392 = vmul.f32 1.0, %v2391
    %v2393 = vxor.u32 %v2374, 2147483648
    %v2394 = vxor.u32 %v2378, 2147483648
    %v2395 = vmul.f32 %v2393, 1.442695
    %v2396 = vpow.pop %v2395
    %v2397 = vmul.f32 %v2394, 1.442695
    %v2398 = vpow.pop %v2397
    %v2399 = vadd.f32 %v2396, 1.0
    %v2400 = vadd.f32 %v2398, 1.0
    %v2401 = vrcp.pop %v2399
    %v2402 = vmul.f32 1.0, %v2401
    %v2403 = vrcp.pop %v2400
    %v2404 = vmul.f32 1.0, %v2403
    %v2405 = vtanh.pop %v2375
    %v2406 = vtanh.pop %v2379
    %v2407 = vxor.u32 %v2376, 2147483648
    %v2408 = vxor.u32 %v2380, 2147483648
    %v2409 = vmul.f32 %v2407, 1.442695
    %v2410 = vpow.pop %v2409
    %v2411 = vmul.f32 %v2408, 1.442695
    %v2412 = vpow.pop %v2411
    %v2413 = vadd.f32 %v2410, 1.0
    %v2414 = vadd.f32 %v2412, 1.0
    %v2415 = vrcp.pop %v2413
    %v2416 = vmul.f32 1.0, %v2415
    %v2417 = vrcp.pop %v2414
    %v2418 = vmul.f32 1.0, %v2417
    %v2419 = vmul.f32 %v2402, %v2040
    %v2420 = vmul.f32 %v2404, %v2041
    %v2421 = vmul.f32 %v2390, %v2405
    %v2422 = vmul.f32 %v2392, %v2406
    %v2423 = vadd.f32 %v2419, %v2421
    %v2424 = vadd.f32 %v2420, %v2422
    %v2425 = vtanh.pop %v2423
    %v2426 = vtanh.pop %v2424
    %v2427 = vmul.f32 %v2416, %v2425
    %v2428 = vmul.f32 %v2418, %v2426
    %v2429 = vpack.c.bf16 %v2428, %v2427
    %v2430 = vpack.c.bf16 %v2275, %v2274
    %2431 = vmatprep.subr.bf16.mxu0 %v1059
    %2432 = vmatpush1.bf16.msra.mxu0 %v1058
    %2433 = vmatprep.subr.bf16.mxu0 %v1063
    %2434 = vmatpush1.bf16.msra.mxu0 %v1062
    %2435 = vmatprep.subr.bf16.mxu0 %v1067
    %2436 = vmatpush1.bf16.msra.mxu0 %v1066
    %2437 = vmatprep.subr.bf16.mxu0 %v1071
    %2438 = vmatpush1.bf16.msra.mxu0 %v1070
    %2439 = vmatprep.subr.bf16.mxu0 %v1075
    %2440 = vmatpush1.bf16.msra.mxu0 %v1074
    %2441 = vmatprep.subr.bf16.mxu0 %v1079
    %2442 = vmatpush1.bf16.msra.mxu0 %v1078
    %2443 = vmatprep.subr.bf16.mxu0 %v1083
    %2444 = vmatpush1.bf16.msra.mxu0 %v1082
    %2445 = vmatprep.subr.bf16.mxu0 %v1087
    %2446 = vmatpush1.bf16.msra.mxu0 %v1086
    %2447 = vmatprep.subr.bf16.mxu0 0
    %2448 = vmatpush1.bf16.msra.mxu0 0
    %2449 = vmatprep.subr.bf16.mxu0 0
    %2450 = vmatpush1.bf16.msra.mxu0 0
    %2451 = vmatprep.subr.bf16.mxu0 0
    %2452 = vmatpush1.bf16.msra.mxu0 0
    %2453 = vmatprep.subr.bf16.mxu0 0
    %2454 = vmatpush1.bf16.msra.mxu0 0
    %2455 = vmatprep.subr.bf16.mxu0 0
    %2456 = vmatpush1.bf16.msra.mxu0 0
    %2457 = vmatprep.subr.bf16.mxu0 0
    %2458 = vmatpush1.bf16.msra.mxu0 0
    %2459 = vmatprep.subr.bf16.mxu0 0
    %2460 = vmatpush1.bf16.msra.mxu0 0
    %2461 = vmatprep.subr.bf16.mxu0 0
    %2462 = vmatpush1.bf16.msra.mxu0 0
    %2463 = vmatprep.mubr.bf16.mxu0 0
    %2464 = vmatmul.mubr.bf16.gmra.mrb[0].mxu0 %v2430
    %v2465 = vpop.f32.mrb[0].mxu0
    %v2466 = vadd.f32 0.0, %v2465
    %v2467 = vpop.f32.mrb[0].mxu0
    %v2468 = vadd.f32 0.0, %v2467
    %v2469 = vpop.f32.mrb[0].mxu0
    %v2470 = vadd.f32 0.0, %v2469
    %v2471 = vpop.f32.mrb[0].mxu0
    %v2472 = vadd.f32 0.0, %v2471
    %2473 = vdwg.mxu0
    %2474 = vmatprep.subr.bf16.mxu0 %v1061
    %2475 = vmatpush1.bf16.msra.mxu0 %v1060
    %2476 = vmatprep.subr.bf16.mxu0 %v1065
    %2477 = vmatpush1.bf16.msra.mxu0 %v1064
    %2478 = vmatprep.subr.bf16.mxu0 %v1069
    %2479 = vmatpush1.bf16.msra.mxu0 %v1068
    %2480 = vmatprep.subr.bf16.mxu0 %v1073
    %2481 = vmatpush1.bf16.msra.mxu0 %v1072
    %2482 = vmatprep.subr.bf16.mxu0 %v1077
    %2483 = vmatpush1.bf16.msra.mxu0 %v1076
    %2484 = vmatprep.subr.bf16.mxu0 %v1081
    %2485 = vmatpush1.bf16.msra.mxu0 %v1080
    %2486 = vmatprep.subr.bf16.mxu0 %v1085
    %2487 = vmatpush1.bf16.msra.mxu0 %v1084
    %2488 = vmatprep.subr.bf16.mxu0 %v1089
    %2489 = vmatpush1.bf16.msra.mxu0 %v1088
    %2490 = vmatprep.subr.bf16.mxu0 0
    %2491 = vmatpush1.bf16.msra.mxu0 0
    %2492 = vmatprep.subr.bf16.mxu0 0
    %2493 = vmatpush1.bf16.msra.mxu0 0
    %2494 = vmatprep.subr.bf16.mxu0 0
    %2495 = vmatpush1.bf16.msra.mxu0 0
    %2496 = vmatprep.subr.bf16.mxu0 0
    %2497 = vmatpush1.bf16.msra.mxu0 0
    %2498 = vmatprep.subr.bf16.mxu0 0
    %2499 = vmatpush1.bf16.msra.mxu0 0
    %2500 = vmatprep.subr.bf16.mxu0 0
    %2501 = vmatpush1.bf16.msra.mxu0 0
    %2502 = vmatprep.subr.bf16.mxu0 0
    %2503 = vmatpush1.bf16.msra.mxu0 0
    %2504 = vmatprep.subr.bf16.mxu0 0
    %2505 = vmatpush1.bf16.msra.mxu0 0
    %2506 = vmatprep.mubr.bf16.mxu0 0
    %2507 = vmatmul.mubr.bf16.gmra.mrb[0].mxu0 %v2430
    %v2508 = vpop.f32.mrb[0].mxu0
    %v2509 = vadd.f32 0.0, %v2508
    %v2510 = vpop.f32.mrb[0].mxu0
    %v2511 = vadd.f32 0.0, %v2510
    %v2512 = vpop.f32.mrb[0].mxu0
    %v2513 = vadd.f32 0.0, %v2512
    %v2514 = vpop.f32.mrb[0].mxu0
    %v2515 = vadd.f32 0.0, %v2514
    %2516 = vdwg.mxu0
    %2517 = vmatprep.subr.bf16.mxu0 %v1305
    %2518 = vmatpush1.bf16.msra.mxu0 %v1304
    %2519 = vmatprep.subr.bf16.mxu0 %v1309
    %2520 = vmatpush1.bf16.msra.mxu0 %v1308
    %2521 = vmatprep.subr.bf16.mxu0 %v1313
    %2522 = vmatpush1.bf16.msra.mxu0 %v1312
    %2523 = vmatprep.subr.bf16.mxu0 %v1317
    %2524 = vmatpush1.bf16.msra.mxu0 %v1316
    %2525 = vmatprep.subr.bf16.mxu0 %v1321
    %2526 = vmatpush1.bf16.msra.mxu0 %v1320
    %2527 = vmatprep.subr.bf16.mxu0 %v1325
    %2528 = vmatpush1.bf16.msra.mxu0 %v1324
    %2529 = vmatprep.subr.bf16.mxu0 %v1329
    %2530 = vmatpush1.bf16.msra.mxu0 %v1328
    %2531 = vmatprep.subr.bf16.mxu0 %v1333
    %2532 = vmatpush1.bf16.msra.mxu0 %v1332
    %2533 = vmatprep.subr.bf16.mxu0 0
    %2534 = vmatpush1.bf16.msra.mxu0 0
    %2535 = vmatprep.subr.bf16.mxu0 0
    %2536 = vmatpush1.bf16.msra.mxu0 0
    %2537 = vmatprep.subr.bf16.mxu0 0
    %2538 = vmatpush1.bf16.msra.mxu0 0
    %2539 = vmatprep.subr.bf16.mxu0 0
    %2540 = vmatpush1.bf16.msra.mxu0 0
    %2541 = vmatprep.subr.bf16.mxu0 0
    %2542 = vmatpush1.bf16.msra.mxu0 0
    %2543 = vmatprep.subr.bf16.mxu0 0
    %2544 = vmatpush1.bf16.msra.mxu0 0
    %2545 = vmatprep.subr.bf16.mxu0 0
    %2546 = vmatpush1.bf16.msra.mxu0 0
    %2547 = vmatprep.subr.bf16.mxu0 0
    %2548 = vmatpush1.bf16.msra.mxu0 0
    %2549 = vmatprep.mubr.bf16.mxu0 0
    %2550 = vmatmul.mubr.bf16.gmra.mrb[0].mxu0 %v2429
    %v2551 = vpop.f32.mrb[0].mxu0
    %v2552 = vadd.f32 %v2466, %v2551
    %v2553 = vpop.f32.mrb[0].mxu0
    %v2554 = vadd.f32 %v2468, %v2553
    %v2555 = vpop.f32.mrb[0].mxu0
    %v2556 = vadd.f32 %v2470, %v2555
    %v2557 = vpop.f32.mrb[0].mxu0
    %v2558 = vadd.f32 %v2472, %v2557
    %2559 = vdwg.mxu0
    %2560 = vmatprep.subr.bf16.mxu0 %v1307
    %2561 = vmatpush1.bf16.msra.mxu0 %v1306
    %2562 = vmatprep.subr.bf16.mxu0 %v1311
    %2563 = vmatpush1.bf16.msra.mxu0 %v1310
    %2564 = vmatprep.subr.bf16.mxu0 %v1315
    %2565 = vmatpush1.bf16.msra.mxu0 %v1314
    %2566 = vmatprep.subr.bf16.mxu0 %v1319
    %2567 = vmatpush1.bf16.msra.mxu0 %v1318
    %2568 = vmatprep.subr.bf16.mxu0 %v1323
    %2569 = vmatpush1.bf16.msra.mxu0 %v1322
    %2570 = vmatprep.subr.bf16.mxu0 %v1327
    %2571 = vmatpush1.bf16.msra.mxu0 %v1326
    %2572 = vmatprep.subr.bf16.mxu0 %v1331
    %2573 = vmatpush1.bf16.msra.mxu0 %v1330
    %2574 = vmatprep.subr.bf16.mxu0 %v1335
    %2575 = vmatpush1.bf16.msra.mxu0 %v1334
    %2576 = vmatprep.subr.bf16.mxu0 0
    %2577 = vmatpush1.bf16.msra.mxu0 0
    %2578 = vmatprep.subr.bf16.mxu0 0
    %2579 = vmatpush1.bf16.msra.mxu0 0
    %2580 = vmatprep.subr.bf16.mxu0 0
    %2581 = vmatpush1.bf16.msra.mxu0 0
    %2582 = vmatprep.subr.bf16.mxu0 0
    %2583 = vmatpush1.bf16.msra.mxu0 0
    %2584 = vmatprep.subr.bf16.mxu0 0
    %2585 = vmatpush1.bf16.msra.mxu0 0
    %2586 = vmatprep.subr.bf16.mxu0 0
    %2587 = vmatpush1.bf16.msra.mxu0 0
    %2588 = vmatprep.subr.bf16.mxu0 0
    %2589 = vmatpush1.bf16.msra.mxu0 0
    %2590 = vmatprep.subr.bf16.mxu0 0
    %2591 = vmatpush1.bf16.msra.mxu0 0
    %2592 = vmatprep.mubr.bf16.mxu0 0
    %2593 = vmatmul.mubr.bf16.gmra.mrb[0].mxu0 %v2429
    %v2594 = vpop.f32.mrb[0].mxu0
    %v2595 = vadd.f32 %v2509, %v2594
    %v2596 = vpop.f32.mrb[0].mxu0
    %v2597 = vadd.f32 %v2511, %v2596
    %v2598 = vpop.f32.mrb[0].mxu0
    %v2599 = vadd.f32 %v2513, %v2598
    %v2600 = vpop.f32.mrb[0].mxu0
    %v2601 = vadd.f32 %v2515, %v2600
    %2602 = vdwg.mxu0
    %v2603 = vadd.f32 %v2552, %v535
    %v2604 = vadd.f32 %v2554, %v539
    %v2605 = vadd.f32 %v2595, %v543
    %v2606 = vadd.f32 %v2597, %v547
    %v2607 = vadd.f32 %v2556, %v535
    %v2608 = vadd.f32 %v2558, %v539
    %v2609 = vadd.f32 %v2599, %v543
    %v2610 = vadd.f32 %v2601, %v547
    %v2611 = vxor.u32 %v2603, 2147483648
    %v2612 = vxor.u32 %v2607, 2147483648
    %v2613 = vmul.f32 %v2611, 1.442695
    %v2614 = vpow.pop %v2613
    %v2615 = vmul.f32 %v2612, 1.442695
    %v2616 = vpow.pop %v2615
    %v2617 = vadd.f32 %v2614, 1.0
    %v2618 = vadd.f32 %v2616, 1.0
    %v2619 = vrcp.pop %v2617
    %v2620 = vmul.f32 1.0, %v2619
    %v2621 = vrcp.pop %v2618
    %v2622 = vmul.f32 1.0, %v2621
    %v2623 = vxor.u32 %v2604, 2147483648
    %v2624 = vxor.u32 %v2608, 2147483648
    %v2625 = vmul.f32 %v2623, 1.442695
    %v2626 = vpow.pop %v2625
    %v2627 = vmul.f32 %v2624, 1.442695
    %v2628 = vpow.pop %v2627
    %v2629 = vadd.f32 %v2626, 1.0
    %v2630 = vadd.f32 %v2628, 1.0
    %v2631 = vrcp.pop %v2629
    %v2632 = vmul.f32 1.0, %v2631
    %v2633 = vrcp.pop %v2630
    %v2634 = vmul.f32 1.0, %v2633
    %v2635 = vtanh.pop %v2605
    %v2636 = vtanh.pop %v2609
    %v2637 = vxor.u32 %v2606, 2147483648
    %v2638 = vxor.u32 %v2610, 2147483648
    %v2639 = vmul.f32 %v2637, 1.442695
    %v2640 = vpow.pop %v2639
    %v2641 = vmul.f32 %v2638, 1.442695
    %v2642 = vpow.pop %v2641
    %v2643 = vadd.f32 %v2640, 1.0
    %v2644 = vadd.f32 %v2642, 1.0
    %v2645 = vrcp.pop %v2643
    %v2646 = vmul.f32 1.0, %v2645
    %v2647 = vrcp.pop %v2644
    %v2648 = vmul.f32 1.0, %v2647
    %v2649 = vmul.f32 %v2632, %v2270
    %v2650 = vmul.f32 %v2634, %v2271
    %v2651 = vmul.f32 %v2620, %v2635
    %v2652 = vmul.f32 %v2622, %v2636
    %v2653 = vadd.f32 %v2649, %v2651
    %v2654 = vadd.f32 %v2650, %v2652
    %v2655 = vtanh.pop %v2653
    %v2656 = vtanh.pop %v2654
    %v2657 = vmul.f32 %v2646, %v2655
    %v2658 = vmul.f32 %v2648, %v2656
    %s2659 = smul.u32 8, 4
    %s2660 = smul.addr %s2659, 8
    %s2661 = scalar_lea.vmem [#allocation2], %s2660
    %v2662 = vld [vmem:[%s2661] sm:$0xff]
    %v2663 = vld [vmem:[%s2661 + $0x8] sm:$0xff]
    %v2664 = vld [vmem:[%s2661 + $0x10] sm:$0xff]
    %v2665 = vld [vmem:[%s2661 + $0x18] sm:$0xff]
    %v2666 = vld [vmem:[%s2661 + $0x20] sm:$0xff]
    %v2667 = vld [vmem:[%s2661 + $0x28] sm:$0xff]
    %v2668 = vld [vmem:[%s2661 + $0x30] sm:$0xff]
    %v2669 = vld [vmem:[%s2661 + $0x38] sm:$0xff]
    %2670 = vmatprep.subr.bf16.mxu0 %v692
    %2671 = vmatpush1.bf16.msra.mxu0 %v691
    %2672 = vmatprep.subr.bf16.mxu0 %v696
    %2673 = vmatpush1.bf16.msra.mxu0 %v695
    %2674 = vmatprep.subr.bf16.mxu0 %v700
    %2675 = vmatpush1.bf16.msra.mxu0 %v699
    %2676 = vmatprep.subr.bf16.mxu0 %v704
    %2677 = vmatpush1.bf16.msra.mxu0 %v703
    %2678 = vmatprep.subr.bf16.mxu0 %v708
    %2679 = vmatpush1.bf16.msra.mxu0 %v707
    %2680 = vmatprep.subr.bf16.mxu0 %v712
    %2681 = vmatpush1.bf16.msra.mxu0 %v711
    %2682 = vmatprep.subr.bf16.mxu0 %v716
    %2683 = vmatpush1.bf16.msra.mxu0 %v715
    %2684 = vmatprep.subr.bf16.mxu0 %v720
    %2685 = vmatpush1.bf16.msra.mxu0 %v719
    %2686 = vmatprep.subr.bf16.mxu0 0
    %2687 = vmatpush1.bf16.msra.mxu0 0
    %2688 = vmatprep.subr.bf16.mxu0 0
    %2689 = vmatpush1.bf16.msra.mxu0 0
    %2690 = vmatprep.subr.bf16.mxu0 0
    %2691 = vmatpush1.bf16.msra.mxu0 0
    %2692 = vmatprep.subr.bf16.mxu0 0
    %2693 = vmatpush1.bf16.msra.mxu0 0
    %2694 = vmatprep.subr.bf16.mxu0 0
    %2695 = vmatpush1.bf16.msra.mxu0 0
    %2696 = vmatprep.subr.bf16.mxu0 0
    %2697 = vmatpush1.bf16.msra.mxu0 0
    %2698 = vmatprep.subr.bf16.mxu0 0
    %2699 = vmatpush1.bf16.msra.mxu0 0
    %2700 = vmatprep.subr.bf16.mxu0 0
    %2701 = vmatpush1.bf16.msra.mxu0 0
    %2702 = vmatprep.mubr.bf16.mxu0 0
    %2703 = vmatmul.mubr.bf16.gmra.mrb[0].mxu0 %v2429
    %v2704 = vpop.f32.mrb[0].mxu0
    %v2705 = vadd.f32 0.0, %v2704
    %v2706 = vpop.f32.mrb[0].mxu0
    %v2707 = vadd.f32 0.0, %v2706
    %v2708 = vpop.f32.mrb[0].mxu0
    %v2709 = vadd.f32 0.0, %v2708
    %v2710 = vpop.f32.mrb[0].mxu0
    %v2711 = vadd.f32 0.0, %v2710
    %2712 = vdwg.mxu0
    %2713 = vmatprep.subr.bf16.mxu0 %v694
    %2714 = vmatpush1.bf16.msra.mxu0 %v693
    %2715 = vmatprep.subr.bf16.mxu0 %v698
    %2716 = vmatpush1.bf16.msra.mxu0 %v697
    %2717 = vmatprep.subr.bf16.mxu0 %v702
    %2718 = vmatpush1.bf16.msra.mxu0 %v701
    %2719 = vmatprep.subr.bf16.mxu0 %v706
    %2720 = vmatpush1.bf16.msra.mxu0 %v705
    %2721 = vmatprep.subr.bf16.mxu0 %v710
    %2722 = vmatpush1.bf16.msra.mxu0 %v709
    %2723 = vmatprep.subr.bf16.mxu0 %v714
    %2724 = vmatpush1.bf16.msra.mxu0 %v713
    %2725 = vmatprep.subr.bf16.mxu0 %v718
    %2726 = vmatpush1.bf16.msra.mxu0 %v717
    %2727 = vmatprep.subr.bf16.mxu0 %v722
    %2728 = vmatpush1.bf16.msra.mxu0 %v721
    %2729 = vmatprep.subr.bf16.mxu0 0
    %2730 = vmatpush1.bf16.msra.mxu0 0
    %2731 = vmatprep.subr.bf16.mxu0 0
    %2732 = vmatpush1.bf16.msra.mxu0 0
    %2733 = vmatprep.subr.bf16.mxu0 0
    %2734 = vmatpush1.bf16.msra.mxu0 0
    %2735 = vmatprep.subr.bf16.mxu0 0
    %2736 = vmatpush1.bf16.msra.mxu0 0
    %2737 = vmatprep.subr.bf16.mxu0 0
    %2738 = vmatpush1.bf16.msra.mxu0 0
    %2739 = vmatprep.subr.bf16.mxu0 0
    %2740 = vmatpush1.bf16.msra.mxu0 0
    %2741 = vmatprep.subr.bf16.mxu0 0
    %2742 = vmatpush1.bf16.msra.mxu0 0
    %2743 = vmatprep.subr.bf16.mxu0 0
    %2744 = vmatpush1.bf16.msra.mxu0 0
    %2745 = vmatprep.mubr.bf16.mxu0 0
    %2746 = vmatmul.mubr.bf16.gmra.mrb[0].mxu0 %v2429
    %v2747 = vpop.f32.mrb[0].mxu0
    %v2748 = vadd.f32 0.0, %v2747
    %v2749 = vpop.f32.mrb[0].mxu0
    %v2750 = vadd.f32 0.0, %v2749
    %v2751 = vpop.f32.mrb[0].mxu0
    %v2752 = vadd.f32 0.0, %v2751
    %v2753 = vpop.f32.mrb[0].mxu0
    %v2754 = vadd.f32 0.0, %v2753
    %2755 = vdwg.mxu0
    %v2756 = vadd.f32 %v2662, %v2705
    %v2757 = vadd.f32 %v2663, %v2707
    %v2758 = vadd.f32 %v2664, %v2748
    %v2759 = vadd.f32 %v2665, %v2750
    %v2760 = vadd.f32 %v2666, %v2709
    %v2761 = vadd.f32 %v2667, %v2711
    %v2762 = vadd.f32 %v2668, %v2752
    %v2763 = vadd.f32 %v2669, %v2754
    %v2764 = vxor.u32 %v2756, 2147483648
    %v2765 = vxor.u32 %v2760, 2147483648
    %v2766 = vmul.f32 %v2764, 1.442695
    %v2767 = vpow.pop %v2766
    %v2768 = vmul.f32 %v2765, 1.442695
    %v2769 = vpow.pop %v2768
    %v2770 = vadd.f32 %v2767, 1.0
    %v2771 = vadd.f32 %v2769, 1.0
    %v2772 = vrcp.pop %v2770
    %v2773 = vmul.f32 1.0, %v2772
    %v2774 = vrcp.pop %v2771
    %v2775 = vmul.f32 1.0, %v2774
    %v2776 = vxor.u32 %v2757, 2147483648
    %v2777 = vxor.u32 %v2761, 2147483648
    %v2778 = vmul.f32 %v2776, 1.442695
    %v2779 = vpow.pop %v2778
    %v2780 = vmul.f32 %v2777, 1.442695
    %v2781 = vpow.pop %v2780
    %v2782 = vadd.f32 %v2779, 1.0
    %v2783 = vadd.f32 %v2781, 1.0
    %v2784 = vrcp.pop %v2782
    %v2785 = vmul.f32 1.0, %v2784
    %v2786 = vrcp.pop %v2783
    %v2787 = vmul.f32 1.0, %v2786
    %v2788 = vtanh.pop %v2758
    %v2789 = vtanh.pop %v2762
    %v2790 = vxor.u32 %v2759, 2147483648
    %v2791 = vxor.u32 %v2763, 2147483648
    %v2792 = vmul.f32 %v2790, 1.442695
    %v2793 = vpow.pop %v2792
    %v2794 = vmul.f32 %v2791, 1.442695
    %v2795 = vpow.pop %v2794
    %v2796 = vadd.f32 %v2793, 1.0
    %v2797 = vadd.f32 %v2795, 1.0
    %v2798 = vrcp.pop %v2796
    %v2799 = vmul.f32 1.0, %v2798
    %v2800 = vrcp.pop %v2797
    %v2801 = vmul.f32 1.0, %v2800
    %v2802 = vmul.f32 %v2785, %v2423
    %v2803 = vmul.f32 %v2787, %v2424
    %v2804 = vmul.f32 %v2773, %v2788
    %v2805 = vmul.f32 %v2775, %v2789
    %v2806 = vadd.f32 %v2802, %v2804
    %v2807 = vadd.f32 %v2803, %v2805
    %v2808 = vtanh.pop %v2806
    %v2809 = vtanh.pop %v2807
    %v2810 = vmul.f32 %v2799, %v2808
    %v2811 = vmul.f32 %v2801, %v2809
    %v2812 = vpack.c.bf16 %v2811, %v2810
    %v2813 = vpack.c.bf16 %v2658, %v2657
    %2814 = vmatprep.subr.bf16.mxu0 %v1059
    %2815 = vmatpush1.bf16.msra.mxu0 %v1058
    %2816 = vmatprep.subr.bf16.mxu0 %v1063
    %2817 = vmatpush1.bf16.msra.mxu0 %v1062
    %2818 = vmatprep.subr.bf16.mxu0 %v1067
    %2819 = vmatpush1.bf16.msra.mxu0 %v1066
    %2820 = vmatprep.subr.bf16.mxu0 %v1071
    %2821 = vmatpush1.bf16.msra.mxu0 %v1070
    %2822 = vmatprep.subr.bf16.mxu0 %v1075
    %2823 = vmatpush1.bf16.msra.mxu0 %v1074
    %2824 = vmatprep.subr.bf16.mxu0 %v1079
    %2825 = vmatpush1.bf16.msra.mxu0 %v1078
    %2826 = vmatprep.subr.bf16.mxu0 %v1083
    %2827 = vmatpush1.bf16.msra.mxu0 %v1082
    %2828 = vmatprep.subr.bf16.mxu0 %v1087
    %2829 = vmatpush1.bf16.msra.mxu0 %v1086
    %2830 = vmatprep.subr.bf16.mxu0 0
    %2831 = vmatpush1.bf16.msra.mxu0 0
    %2832 = vmatprep.subr.bf16.mxu0 0
    %2833 = vmatpush1.bf16.msra.mxu0 0
    %2834 = vmatprep.subr.bf16.mxu0 0
    %2835 = vmatpush1.bf16.msra.mxu0 0
    %2836 = vmatprep.subr.bf16.mxu0 0
    %2837 = vmatpush1.bf16.msra.mxu0 0
    %2838 = vmatprep.subr.bf16.mxu0 0
    %2839 = vmatpush1.bf16.msra.mxu0 0
    %2840 = vmatprep.subr.bf16.mxu0 0
    %2841 = vmatpush1.bf16.msra.mxu0 0
    %2842 = vmatprep.subr.bf16.mxu0 0
    %2843 = vmatpush1.bf16.msra.mxu0 0
    %2844 = vmatprep.subr.bf16.mxu0 0
    %2845 = vmatpush1.bf16.msra.mxu0 0
    %2846 = vmatprep.mubr.bf16.mxu0 0
    %2847 = vmatmul.mubr.bf16.gmra.mrb[0].mxu0 %v2813
    %v2848 = vpop.f32.mrb[0].mxu0
    %v2849 = vadd.f32 0.0, %v2848
    %v2850 = vpop.f32.mrb[0].mxu0
    %v2851 = vadd.f32 0.0, %v2850
    %v2852 = vpop.f32.mrb[0].mxu0
    %v2853 = vadd.f32 0.0, %v2852
    %v2854 = vpop.f32.mrb[0].mxu0
    %v2855 = vadd.f32 0.0, %v2854
    %2856 = vdwg.mxu0
    %2857 = vmatprep.subr.bf16.mxu0 %v1061
    %2858 = vmatpush1.bf16.msra.mxu0 %v1060
    %2859 = vmatprep.subr.bf16.mxu0 %v1065
    %2860 = vmatpush1.bf16.msra.mxu0 %v1064
    %2861 = vmatprep.subr.bf16.mxu0 %v1069
    %2862 = vmatpush1.bf16.msra.mxu0 %v1068
    %2863 = vmatprep.subr.bf16.mxu0 %v1073
    %2864 = vmatpush1.bf16.msra.mxu0 %v1072
    %2865 = vmatprep.subr.bf16.mxu0 %v1077
    %2866 = vmatpush1.bf16.msra.mxu0 %v1076
    %2867 = vmatprep.subr.bf16.mxu0 %v1081
    %2868 = vmatpush1.bf16.msra.mxu0 %v1080
    %2869 = vmatprep.subr.bf16.mxu0 %v1085
    %2870 = vmatpush1.bf16.msra.mxu0 %v1084
    %2871 = vmatprep.subr.bf16.mxu0 %v1089
    %2872 = vmatpush1.bf16.msra.mxu0 %v1088
    %2873 = vmatprep.subr.bf16.mxu0 0
    %2874 = vmatpush1.bf16.msra.mxu0 0
    %2875 = vmatprep.subr.bf16.mxu0 0
    %2876 = vmatpush1.bf16.msra.mxu0 0
    %2877 = vmatprep.subr.bf16.mxu0 0
    %2878 = vmatpush1.bf16.msra.mxu0 0
    %2879 = vmatprep.subr.bf16.mxu0 0
    %2880 = vmatpush1.bf16.msra.mxu0 0
    %2881 = vmatprep.subr.bf16.mxu0 0
    %2882 = vmatpush1.bf16.msra.mxu0 0
    %2883 = vmatprep.subr.bf16.mxu0 0
    %2884 = vmatpush1.bf16.msra.mxu0 0
    %2885 = vmatprep.subr.bf16.mxu0 0
    %2886 = vmatpush1.bf16.msra.mxu0 0
    %2887 = vmatprep.subr.bf16.mxu0 0
    %2888 = vmatpush1.bf16.msra.mxu0 0
    %2889 = vmatprep.mubr.bf16.mxu0 0
    %2890 = vmatmul.mubr.bf16.gmra.mrb[0].mxu0 %v2813
    %v2891 = vpop.f32.mrb[0].mxu0
    %v2892 = vadd.f32 0.0, %v2891
    %v2893 = vpop.f32.mrb[0].mxu0
    %v2894 = vadd.f32 0.0, %v2893
    %v2895 = vpop.f32.mrb[0].mxu0
    %v2896 = vadd.f32 0.0, %v2895
    %v2897 = vpop.f32.mrb[0].mxu0
    %v2898 = vadd.f32 0.0, %v2897
    %2899 = vdwg.mxu0
    %2900 = vmatprep.subr.bf16.mxu0 %v1305
    %2901 = vmatpush1.bf16.msra.mxu0 %v1304
    %2902 = vmatprep.subr.bf16.mxu0 %v1309
    %2903 = vmatpush1.bf16.msra.mxu0 %v1308
    %2904 = vmatprep.subr.bf16.mxu0 %v1313
    %2905 = vmatpush1.bf16.msra.mxu0 %v1312
    %2906 = vmatprep.subr.bf16.mxu0 %v1317
    %2907 = vmatpush1.bf16.msra.mxu0 %v1316
    %2908 = vmatprep.subr.bf16.mxu0 %v1321
    %2909 = vmatpush1.bf16.msra.mxu0 %v1320
    %2910 = vmatprep.subr.bf16.mxu0 %v1325
    %2911 = vmatpush1.bf16.msra.mxu0 %v1324
    %2912 = vmatprep.subr.bf16.mxu0 %v1329
    %2913 = vmatpush1.bf16.msra.mxu0 %v1328
    %2914 = vmatprep.subr.bf16.mxu0 %v1333
    %2915 = vmatpush1.bf16.msra.mxu0 %v1332
    %2916 = vmatprep.subr.bf16.mxu0 0
    %2917 = vmatpush1.bf16.msra.mxu0 0
    %2918 = vmatprep.subr.bf16.mxu0 0
    %2919 = vmatpush1.bf16.msra.mxu0 0
    %2920 = vmatprep.subr.bf16.mxu0 0
    %2921 = vmatpush1.bf16.msra.mxu0 0
    %2922 = vmatprep.subr.bf16.mxu0 0
    %2923 = vmatpush1.bf16.msra.mxu0 0
    %2924 = vmatprep.subr.bf16.mxu0 0
    %2925 = vmatpush1.bf16.msra.mxu0 0
    %2926 = vmatprep.subr.bf16.mxu0 0
    %2927 = vmatpush1.bf16.msra.mxu0 0
    %2928 = vmatprep.subr.bf16.mxu0 0
    %2929 = vmatpush1.bf16.msra.mxu0 0
    %2930 = vmatprep.subr.bf16.mxu0 0
    %2931 = vmatpush1.bf16.msra.mxu0 0
    %2932 = vmatprep.mubr.bf16.mxu0 0
    %2933 = vmatmul.mubr.bf16.gmra.mrb[0].mxu0 %v2812
    %v2934 = vpop.f32.mrb[0].mxu0
    %v2935 = vadd.f32 %v2849, %v2934
    %v2936 = vpop.f32.mrb[0].mxu0
    %v2937 = vadd.f32 %v2851, %v2936
    %v2938 = vpop.f32.mrb[0].mxu0
    %v2939 = vadd.f32 %v2853, %v2938
    %v2940 = vpop.f32.mrb[0].mxu0
    %v2941 = vadd.f32 %v2855, %v2940
    %2942 = vdwg.mxu0
    %2943 = vmatprep.subr.bf16.mxu0 %v1307
    %2944 = vmatpush1.bf16.msra.mxu0 %v1306
    %2945 = vmatprep.subr.bf16.mxu0 %v1311
    %2946 = vmatpush1.bf16.msra.mxu0 %v1310
    %2947 = vmatprep.subr.bf16.mxu0 %v1315
    %2948 = vmatpush1.bf16.msra.mxu0 %v1314
    %2949 = vmatprep.subr.bf16.mxu0 %v1319
    %2950 = vmatpush1.bf16.msra.mxu0 %v1318
    %2951 = vmatprep.subr.bf16.mxu0 %v1323
    %2952 = vmatpush1.bf16.msra.mxu0 %v1322
    %2953 = vmatprep.subr.bf16.mxu0 %v1327
    %2954 = vmatpush1.bf16.msra.mxu0 %v1326
    %2955 = vmatprep.subr.bf16.mxu0 %v1331
    %2956 = vmatpush1.bf16.msra.mxu0 %v1330
    %2957 = vmatprep.subr.bf16.mxu0 %v1335
    %2958 = vmatpush1.bf16.msra.mxu0 %v1334
    %2959 = vmatprep.subr.bf16.mxu0 0
    %2960 = vmatpush1.bf16.msra.mxu0 0
    %2961 = vmatprep.subr.bf16.mxu0 0
    %2962 = vmatpush1.bf16.msra.mxu0 0
    %2963 = vmatprep.subr.bf16.mxu0 0
    %2964 = vmatpush1.bf16.msra.mxu0 0
    %2965 = vmatprep.subr.bf16.mxu0 0
    %2966 = vmatpush1.bf16.msra.mxu0 0
    %2967 = vmatprep.subr.bf16.mxu0 0
    %2968 = vmatpush1.bf16.msra.mxu0 0
    %2969 = vmatprep.subr.bf16.mxu0 0
    %2970 = vmatpush1.bf16.msra.mxu0 0
    %2971 = vmatprep.subr.bf16.mxu0 0
    %2972 = vmatpush1.bf16.msra.mxu0 0
    %2973 = vmatprep.subr.bf16.mxu0 0
    %2974 = vmatpush1.bf16.msra.mxu0 0
    %2975 = vmatprep.mubr.bf16.mxu0 0
    %2976 = vmatmul.mubr.bf16.gmra.mrb[0].mxu0 %v2812
    %v2977 = vpop.f32.mrb[0].mxu0
    %v2978 = vadd.f32 %v2892, %v2977
    %v2979 = vpop.f32.mrb[0].mxu0
    %v2980 = vadd.f32 %v2894, %v2979
    %v2981 = vpop.f32.mrb[0].mxu0
    %v2982 = vadd.f32 %v2896, %v2981
    %v2983 = vpop.f32.mrb[0].mxu0
    %v2984 = vadd.f32 %v2898, %v2983
    %2985 = vdwg.mxu0
    %v2986 = vadd.f32 %v2935, %v535
    %v2987 = vadd.f32 %v2937, %v539
    %v2988 = vadd.f32 %v2978, %v543
    %v2989 = vadd.f32 %v2980, %v547
    %v2990 = vadd.f32 %v2939, %v535
    %v2991 = vadd.f32 %v2941, %v539
    %v2992 = vadd.f32 %v2982, %v543
    %v2993 = vadd.f32 %v2984, %v547
    %v2994 = vxor.u32 %v2986, 2147483648
    %v2995 = vxor.u32 %v2990, 2147483648
    %v2996 = vmul.f32 %v2994, 1.442695
    %v2997 = vpow.pop %v2996
    %v2998 = vmul.f32 %v2995, 1.442695
    %v2999 = vpow.pop %v2998
    %v3000 = vadd.f32 %v2997, 1.0
    %v3001 = vadd.f32 %v2999, 1.0
    %v3002 = vrcp.pop %v3000
    %v3003 = vmul.f32 1.0, %v3002
    %v3004 = vrcp.pop %v3001
    %v3005 = vmul.f32 1.0, %v3004
    %v3006 = vxor.u32 %v2987, 2147483648
    %v3007 = vxor.u32 %v2991, 2147483648
    %v3008 = vmul.f32 %v3006, 1.442695
    %v3009 = vpow.pop %v3008
    %v3010 = vmul.f32 %v3007, 1.442695
    %v3011 = vpow.pop %v3010
    %v3012 = vadd.f32 %v3009, 1.0
    %v3013 = vadd.f32 %v3011, 1.0
    %v3014 = vrcp.pop %v3012
    %v3015 = vmul.f32 1.0, %v3014
    %v3016 = vrcp.pop %v3013
    %v3017 = vmul.f32 1.0, %v3016
    %v3018 = vtanh.pop %v2988
    %v3019 = vtanh.pop %v2992
    %v3020 = vxor.u32 %v2989, 2147483648
    %v3021 = vxor.u32 %v2993, 2147483648
    %v3022 = vmul.f32 %v3020, 1.442695
    %v3023 = vpow.pop %v3022
    %v3024 = vmul.f32 %v3021, 1.442695
    %v3025 = vpow.pop %v3024
    %v3026 = vadd.f32 %v3023, 1.0
    %v3027 = vadd.f32 %v3025, 1.0
    %v3028 = vrcp.pop %v3026
    %v3029 = vmul.f32 1.0, %v3028
    %v3030 = vrcp.pop %v3027
    %v3031 = vmul.f32 1.0, %v3030
    %v3032 = vmul.f32 %v3015, %v2653
    %v3033 = vmul.f32 %v3017, %v2654
    %v3034 = vmul.f32 %v3003, %v3018
    %v3035 = vmul.f32 %v3005, %v3019
    %v3036 = vadd.f32 %v3032, %v3034
    %v3037 = vadd.f32 %v3033, %v3035
    %v3038 = vtanh.pop %v3036
    %v3039 = vtanh.pop %v3037
    %v3040 = vmul.f32 %v3029, %v3038
    %v3041 = vmul.f32 %v3031, %v3039
    %s3042 = smul.u32 10, 4
    %s3043 = smul.addr %s3042, 8
    %s3044 = scalar_lea.vmem [#allocation2], %s3043
    %v3045 = vld [vmem:[%s3044] sm:$0xff]
    %v3046 = vld [vmem:[%s3044 + $0x8] sm:$0xff]
    %v3047 = vld [vmem:[%s3044 + $0x10] sm:$0xff]
    %v3048 = vld [vmem:[%s3044 + $0x18] sm:$0xff]
    %v3049 = vld [vmem:[%s3044 + $0x20] sm:$0xff]
    %v3050 = vld [vmem:[%s3044 + $0x28] sm:$0xff]
    %v3051 = vld [vmem:[%s3044 + $0x30] sm:$0xff]
    %v3052 = vld [vmem:[%s3044 + $0x38] sm:$0xff]
    %3053 = vmatprep.subr.bf16.mxu0 %v692
    %3054 = vmatpush1.bf16.msra.mxu0 %v691
    %3055 = vmatprep.subr.bf16.mxu0 %v696
    %3056 = vmatpush1.bf16.msra.mxu0 %v695
    %3057 = vmatprep.subr.bf16.mxu0 %v700
    %3058 = vmatpush1.bf16.msra.mxu0 %v699
    %3059 = vmatprep.subr.bf16.mxu0 %v704
    %3060 = vmatpush1.bf16.msra.mxu0 %v703
    %3061 = vmatprep.subr.bf16.mxu0 %v708
    %3062 = vmatpush1.bf16.msra.mxu0 %v707
    %3063 = vmatprep.subr.bf16.mxu0 %v712
    %3064 = vmatpush1.bf16.msra.mxu0 %v711
    %3065 = vmatprep.subr.bf16.mxu0 %v716
    %3066 = vmatpush1.bf16.msra.mxu0 %v715
    %3067 = vmatprep.subr.bf16.mxu0 %v720
    %3068 = vmatpush1.bf16.msra.mxu0 %v719
    %3069 = vmatprep.subr.bf16.mxu0 0
    %3070 = vmatpush1.bf16.msra.mxu0 0
    %3071 = vmatprep.subr.bf16.mxu0 0
    %3072 = vmatpush1.bf16.msra.mxu0 0
    %3073 = vmatprep.subr.bf16.mxu0 0
    %3074 = vmatpush1.bf16.msra.mxu0 0
    %3075 = vmatprep.subr.bf16.mxu0 0
    %3076 = vmatpush1.bf16.msra.mxu0 0
    %3077 = vmatprep.subr.bf16.mxu0 0
    %3078 = vmatpush1.bf16.msra.mxu0 0
    %3079 = vmatprep.subr.bf16.mxu0 0
    %3080 = vmatpush1.bf16.msra.mxu0 0
    %3081 = vmatprep.subr.bf16.mxu0 0
    %3082 = vmatpush1.bf16.msra.mxu0 0
    %3083 = vmatprep.subr.bf16.mxu0 0
    %3084 = vmatpush1.bf16.msra.mxu0 0
    %3085 = vmatprep.mubr.bf16.mxu0 0
    %3086 = vmatmul.mubr.bf16.gmra.mrb[0].mxu0 %v2812
    %v3087 = vpop.f32.mrb[0].mxu0
    %v3088 = vadd.f32 0.0, %v3087
    %v3089 = vpop.f32.mrb[0].mxu0
    %v3090 = vadd.f32 0.0, %v3089
    %v3091 = vpop.f32.mrb[0].mxu0
    %v3092 = vadd.f32 0.0, %v3091
    %v3093 = vpop.f32.mrb[0].mxu0
    %v3094 = vadd.f32 0.0, %v3093
    %3095 = vdwg.mxu0
    %3096 = vmatprep.subr.bf16.mxu0 %v694
    %3097 = vmatpush1.bf16.msra.mxu0 %v693
    %3098 = vmatprep.subr.bf16.mxu0 %v698
    %3099 = vmatpush1.bf16.msra.mxu0 %v697
    %3100 = vmatprep.subr.bf16.mxu0 %v702
    %3101 = vmatpush1.bf16.msra.mxu0 %v701
    %3102 = vmatprep.subr.bf16.mxu0 %v706
    %3103 = vmatpush1.bf16.msra.mxu0 %v705
    %3104 = vmatprep.subr.bf16.mxu0 %v710
    %3105 = vmatpush1.bf16.msra.mxu0 %v709
    %3106 = vmatprep.subr.bf16.mxu0 %v714
    %3107 = vmatpush1.bf16.msra.mxu0 %v713
    %3108 = vmatprep.subr.bf16.mxu0 %v718
    %3109 = vmatpush1.bf16.msra.mxu0 %v717
    %3110 = vmatprep.subr.bf16.mxu0 %v722
    %3111 = vmatpush1.bf16.msra.mxu0 %v721
    %3112 = vmatprep.subr.bf16.mxu0 0
    %3113 = vmatpush1.bf16.msra.mxu0 0
    %3114 = vmatprep.subr.bf16.mxu0 0
    %3115 = vmatpush1.bf16.msra.mxu0 0
    %3116 = vmatprep.subr.bf16.mxu0 0
    %3117 = vmatpush1.bf16.msra.mxu0 0
    %3118 = vmatprep.subr.bf16.mxu0 0
    %3119 = vmatpush1.bf16.msra.mxu0 0
    %3120 = vmatprep.subr.bf16.mxu0 0
    %3121 = vmatpush1.bf16.msra.mxu0 0
    %3122 = vmatprep.subr.bf16.mxu0 0
    %3123 = vmatpush1.bf16.msra.mxu0 0
    %3124 = vmatprep.subr.bf16.mxu0 0
    %3125 = vmatpush1.bf16.msra.mxu0 0
    %3126 = vmatprep.subr.bf16.mxu0 0
    %3127 = vmatpush1.bf16.msra.mxu0 0
    %3128 = vmatprep.mubr.bf16.mxu0 0
    %3129 = vmatmul.mubr.bf16.gmra.mrb[0].mxu0 %v2812
    %v3130 = vpop.f32.mrb[0].mxu0
    %v3131 = vadd.f32 0.0, %v3130
    %v3132 = vpop.f32.mrb[0].mxu0
    %v3133 = vadd.f32 0.0, %v3132
    %v3134 = vpop.f32.mrb[0].mxu0
    %v3135 = vadd.f32 0.0, %v3134
    %v3136 = vpop.f32.mrb[0].mxu0
    %v3137 = vadd.f32 0.0, %v3136
    %3138 = vdwg.mxu0
    %v3139 = vadd.f32 %v3045, %v3088
    %v3140 = vadd.f32 %v3046, %v3090
    %v3141 = vadd.f32 %v3047, %v3131
    %v3142 = vadd.f32 %v3048, %v3133
    %v3143 = vadd.f32 %v3049, %v3092
    %v3144 = vadd.f32 %v3050, %v3094
    %v3145 = vadd.f32 %v3051, %v3135
    %v3146 = vadd.f32 %v3052, %v3137
    %v3147 = vxor.u32 %v3139, 2147483648
    %v3148 = vxor.u32 %v3143, 2147483648
    %v3149 = vmul.f32 %v3147, 1.442695
    %v3150 = vpow.pop %v3149
    %v3151 = vmul.f32 %v3148, 1.442695
    %v3152 = vpow.pop %v3151
    %v3153 = vadd.f32 %v3150, 1.0
    %v3154 = vadd.f32 %v3152, 1.0
    %v3155 = vrcp.pop %v3153
    %v3156 = vmul.f32 1.0, %v3155
    %v3157 = vrcp.pop %v3154
    %v3158 = vmul.f32 1.0, %v3157
    %v3159 = vxor.u32 %v3140, 2147483648
    %v3160 = vxor.u32 %v3144, 2147483648
    %v3161 = vmul.f32 %v3159, 1.442695
    %v3162 = vpow.pop %v3161
    %v3163 = vmul.f32 %v3160, 1.442695
    %v3164 = vpow.pop %v3163
    %v3165 = vadd.f32 %v3162, 1.0
    %v3166 = vadd.f32 %v3164, 1.0
    %v3167 = vrcp.pop %v3165
    %v3168 = vmul.f32 1.0, %v3167
    %v3169 = vrcp.pop %v3166
    %v3170 = vmul.f32 1.0, %v3169
    %v3171 = vtanh.pop %v3141
    %v3172 = vtanh.pop %v3145
    %v3173 = vxor.u32 %v3142, 2147483648
    %v3174 = vxor.u32 %v3146, 2147483648
    %v3175 = vmul.f32 %v3173, 1.442695
    %v3176 = vpow.pop %v3175
    %v3177 = vmul.f32 %v3174, 1.442695
    %v3178 = vpow.pop %v3177
    %v3179 = vadd.f32 %v3176, 1.0
    %v3180 = vadd.f32 %v3178, 1.0
    %v3181 = vrcp.pop %v3179
    %v3182 = vmul.f32 1.0, %v3181
    %v3183 = vrcp.pop %v3180
    %v3184 = vmul.f32 1.0, %v3183
    %v3185 = vmul.f32 %v3168, %v2806
    %v3186 = vmul.f32 %v3170, %v2807
    %v3187 = vmul.f32 %v3156, %v3171
    %v3188 = vmul.f32 %v3158, %v3172
    %v3189 = vadd.f32 %v3185, %v3187
    %v3190 = vadd.f32 %v3186, %v3188
    %v3191 = vtanh.pop %v3189
    %v3192 = vtanh.pop %v3190
    %v3193 = vmul.f32 %v3182, %v3191
    %v3194 = vmul.f32 %v3184, %v3192
    %v3195 = vpack.c.bf16 %v3194, %v3193
    %v3196 = vpack.c.bf16 %v3041, %v3040
    %3197 = vmatprep.subr.bf16.mxu0 %v1059
    %3198 = vmatpush1.bf16.msra.mxu0 %v1058
    %3199 = vmatprep.subr.bf16.mxu0 %v1063
    %3200 = vmatpush1.bf16.msra.mxu0 %v1062
    %3201 = vmatprep.subr.bf16.mxu0 %v1067
    %3202 = vmatpush1.bf16.msra.mxu0 %v1066
    %3203 = vmatprep.subr.bf16.mxu0 %v1071
    %3204 = vmatpush1.bf16.msra.mxu0 %v1070
    %3205 = vmatprep.subr.bf16.mxu0 %v1075
    %3206 = vmatpush1.bf16.msra.mxu0 %v1074
    %3207 = vmatprep.subr.bf16.mxu0 %v1079
    %3208 = vmatpush1.bf16.msra.mxu0 %v1078
    %3209 = vmatprep.subr.bf16.mxu0 %v1083
    %3210 = vmatpush1.bf16.msra.mxu0 %v1082
    %3211 = vmatprep.subr.bf16.mxu0 %v1087
    %3212 = vmatpush1.bf16.msra.mxu0 %v1086
    %3213 = vmatprep.subr.bf16.mxu0 0
    %3214 = vmatpush1.bf16.msra.mxu0 0
    %3215 = vmatprep.subr.bf16.mxu0 0
    %3216 = vmatpush1.bf16.msra.mxu0 0
    %3217 = vmatprep.subr.bf16.mxu0 0
    %3218 = vmatpush1.bf16.msra.mxu0 0
    %3219 = vmatprep.subr.bf16.mxu0 0
    %3220 = vmatpush1.bf16.msra.mxu0 0
    %3221 = vmatprep.subr.bf16.mxu0 0
    %3222 = vmatpush1.bf16.msra.mxu0 0
    %3223 = vmatprep.subr.bf16.mxu0 0
    %3224 = vmatpush1.bf16.msra.mxu0 0
    %3225 = vmatprep.subr.bf16.mxu0 0
    %3226 = vmatpush1.bf16.msra.mxu0 0
    %3227 = vmatprep.subr.bf16.mxu0 0
    %3228 = vmatpush1.bf16.msra.mxu0 0
    %3229 = vmatprep.mubr.bf16.mxu0 0
    %3230 = vmatmul.mubr.bf16.gmra.mrb[0].mxu0 %v3196
    %v3231 = vpop.f32.mrb[0].mxu0
    %v3232 = vadd.f32 0.0, %v3231
    %v3233 = vpop.f32.mrb[0].mxu0
    %v3234 = vadd.f32 0.0, %v3233
    %v3235 = vpop.f32.mrb[0].mxu0
    %v3236 = vadd.f32 0.0, %v3235
    %v3237 = vpop.f32.mrb[0].mxu0
    %v3238 = vadd.f32 0.0, %v3237
    %3239 = vdwg.mxu0
    %3240 = vmatprep.subr.bf16.mxu0 %v1061
    %3241 = vmatpush1.bf16.msra.mxu0 %v1060
    %3242 = vmatprep.subr.bf16.mxu0 %v1065
    %3243 = vmatpush1.bf16.msra.mxu0 %v1064
    %3244 = vmatprep.subr.bf16.mxu0 %v1069
    %3245 = vmatpush1.bf16.msra.mxu0 %v1068
    %3246 = vmatprep.subr.bf16.mxu0 %v1073
    %3247 = vmatpush1.bf16.msra.mxu0 %v1072
    %3248 = vmatprep.subr.bf16.mxu0 %v1077
    %3249 = vmatpush1.bf16.msra.mxu0 %v1076
    %3250 = vmatprep.subr.bf16.mxu0 %v1081
    %3251 = vmatpush1.bf16.msra.mxu0 %v1080
    %3252 = vmatprep.subr.bf16.mxu0 %v1085
    %3253 = vmatpush1.bf16.msra.mxu0 %v1084
    %3254 = vmatprep.subr.bf16.mxu0 %v1089
    %3255 = vmatpush1.bf16.msra.mxu0 %v1088
    %3256 = vmatprep.subr.bf16.mxu0 0
    %3257 = vmatpush1.bf16.msra.mxu0 0
    %3258 = vmatprep.subr.bf16.mxu0 0
    %3259 = vmatpush1.bf16.msra.mxu0 0
    %3260 = vmatprep.subr.bf16.mxu0 0
    %3261 = vmatpush1.bf16.msra.mxu0 0
    %3262 = vmatprep.subr.bf16.mxu0 0
    %3263 = vmatpush1.bf16.msra.mxu0 0
    %3264 = vmatprep.subr.bf16.mxu0 0
    %3265 = vmatpush1.bf16.msra.mxu0 0
    %3266 = vmatprep.subr.bf16.mxu0 0
    %3267 = vmatpush1.bf16.msra.mxu0 0
    %3268 = vmatprep.subr.bf16.mxu0 0
    %3269 = vmatpush1.bf16.msra.mxu0 0
    %3270 = vmatprep.subr.bf16.mxu0 0
    %3271 = vmatpush1.bf16.msra.mxu0 0
    %3272 = vmatprep.mubr.bf16.mxu0 0
    %3273 = vmatmul.mubr.bf16.gmra.mrb[0].mxu0 %v3196
    %v3274 = vpop.f32.mrb[0].mxu0
    %v3275 = vadd.f32 0.0, %v3274
    %v3276 = vpop.f32.mrb[0].mxu0
    %v3277 = vadd.f32 0.0, %v3276
    %v3278 = vpop.f32.mrb[0].mxu0
    %v3279 = vadd.f32 0.0, %v3278
    %v3280 = vpop.f32.mrb[0].mxu0
    %v3281 = vadd.f32 0.0, %v3280
    %3282 = vdwg.mxu0
    %3283 = vmatprep.subr.bf16.mxu0 %v1305
    %3284 = vmatpush1.bf16.msra.mxu0 %v1304
    %3285 = vmatprep.subr.bf16.mxu0 %v1309
    %3286 = vmatpush1.bf16.msra.mxu0 %v1308
    %3287 = vmatprep.subr.bf16.mxu0 %v1313
    %3288 = vmatpush1.bf16.msra.mxu0 %v1312
    %3289 = vmatprep.subr.bf16.mxu0 %v1317
    %3290 = vmatpush1.bf16.msra.mxu0 %v1316
    %3291 = vmatprep.subr.bf16.mxu0 %v1321
    %3292 = vmatpush1.bf16.msra.mxu0 %v1320
    %3293 = vmatprep.subr.bf16.mxu0 %v1325
    %3294 = vmatpush1.bf16.msra.mxu0 %v1324
    %3295 = vmatprep.subr.bf16.mxu0 %v1329
    %3296 = vmatpush1.bf16.msra.mxu0 %v1328
    %3297 = vmatprep.subr.bf16.mxu0 %v1333
    %3298 = vmatpush1.bf16.msra.mxu0 %v1332
    %3299 = vmatprep.subr.bf16.mxu0 0
    %3300 = vmatpush1.bf16.msra.mxu0 0
    %3301 = vmatprep.subr.bf16.mxu0 0
    %3302 = vmatpush1.bf16.msra.mxu0 0
    %3303 = vmatprep.subr.bf16.mxu0 0
    %3304 = vmatpush1.bf16.msra.mxu0 0
    %3305 = vmatprep.subr.bf16.mxu0 0
    %3306 = vmatpush1.bf16.msra.mxu0 0
    %3307 = vmatprep.subr.bf16.mxu0 0
    %3308 = vmatpush1.bf16.msra.mxu0 0
    %3309 = vmatprep.subr.bf16.mxu0 0
    %3310 = vmatpush1.bf16.msra.mxu0 0
    %3311 = vmatprep.subr.bf16.mxu0 0
    %3312 = vmatpush1.bf16.msra.mxu0 0
    %3313 = vmatprep.subr.bf16.mxu0 0
    %3314 = vmatpush1.bf16.msra.mxu0 0
    %3315 = vmatprep.mubr.bf16.mxu0 0
    %3316 = vmatmul.mubr.bf16.gmra.mrb[0].mxu0 %v3195
    %v3317 = vpop.f32.mrb[0].mxu0
    %v3318 = vadd.f32 %v3232, %v3317
    %v3319 = vpop.f32.mrb[0].mxu0
    %v3320 = vadd.f32 %v3234, %v3319
    %v3321 = vpop.f32.mrb[0].mxu0
    %v3322 = vadd.f32 %v3236, %v3321
    %v3323 = vpop.f32.mrb[0].mxu0
    %v3324 = vadd.f32 %v3238, %v3323
    %3325 = vdwg.mxu0
    %3326 = vmatprep.subr.bf16.mxu0 %v1307
    %3327 = vmatpush1.bf16.msra.mxu0 %v1306
    %3328 = vmatprep.subr.bf16.mxu0 %v1311
    %3329 = vmatpush1.bf16.msra.mxu0 %v1310
    %3330 = vmatprep.subr.bf16.mxu0 %v1315
    %3331 = vmatpush1.bf16.msra.mxu0 %v1314
    %3332 = vmatprep.subr.bf16.mxu0 %v1319
    %3333 = vmatpush1.bf16.msra.mxu0 %v1318
    %3334 = vmatprep.subr.bf16.mxu0 %v1323
    %3335 = vmatpush1.bf16.msra.mxu0 %v1322
    %3336 = vmatprep.subr.bf16.mxu0 %v1327
    %3337 = vmatpush1.bf16.msra.mxu0 %v1326
    %3338 = vmatprep.subr.bf16.mxu0 %v1331
    %3339 = vmatpush1.bf16.msra.mxu0 %v1330
    %3340 = vmatprep.subr.bf16.mxu0 %v1335
    %3341 = vmatpush1.bf16.msra.mxu0 %v1334
    %3342 = vmatprep.subr.bf16.mxu0 0
    %3343 = vmatpush1.bf16.msra.mxu0 0
    %3344 = vmatprep.subr.bf16.mxu0 0
    %3345 = vmatpush1.bf16.msra.mxu0 0
    %3346 = vmatprep.subr.bf16.mxu0 0
    %3347 = vmatpush1.bf16.msra.mxu0 0
    %3348 = vmatprep.subr.bf16.mxu0 0
    %3349 = vmatpush1.bf16.msra.mxu0 0
    %3350 = vmatprep.subr.bf16.mxu0 0
    %3351 = vmatpush1.bf16.msra.mxu0 0
    %3352 = vmatprep.subr.bf16.mxu0 0
    %3353 = vmatpush1.bf16.msra.mxu0 0
    %3354 = vmatprep.subr.bf16.mxu0 0
    %3355 = vmatpush1.bf16.msra.mxu0 0
    %3356 = vmatprep.subr.bf16.mxu0 0
    %3357 = vmatpush1.bf16.msra.mxu0 0
    %3358 = vmatprep.mubr.bf16.mxu0 0
    %3359 = vmatmul.mubr.bf16.gmra.mrb[0].mxu0 %v3195
    %v3360 = vpop.f32.mrb[0].mxu0
    %v3361 = vadd.f32 %v3275, %v3360
    %v3362 = vpop.f32.mrb[0].mxu0
    %v3363 = vadd.f32 %v3277, %v3362
    %v3364 = vpop.f32.mrb[0].mxu0
    %v3365 = vadd.f32 %v3279, %v3364
    %v3366 = vpop.f32.mrb[0].mxu0
    %v3367 = vadd.f32 %v3281, %v3366
    %3368 = vdwg.mxu0
    %v3369 = vadd.f32 %v3318, %v535
    %v3370 = vadd.f32 %v3320, %v539
    %v3371 = vadd.f32 %v3361, %v543
    %v3372 = vadd.f32 %v3363, %v547
    %v3373 = vadd.f32 %v3322, %v535
    %v3374 = vadd.f32 %v3324, %v539
    %v3375 = vadd.f32 %v3365, %v543
    %v3376 = vadd.f32 %v3367, %v547
    %v3377 = vxor.u32 %v3369, 2147483648
    %v3378 = vxor.u32 %v3373, 2147483648
    %v3379 = vmul.f32 %v3377, 1.442695
    %v3380 = vpow.pop %v3379
    %v3381 = vmul.f32 %v3378, 1.442695
    %v3382 = vpow.pop %v3381
    %v3383 = vadd.f32 %v3380, 1.0
    %v3384 = vadd.f32 %v3382, 1.0
    %v3385 = vrcp.pop %v3383
    %v3386 = vmul.f32 1.0, %v3385
    %v3387 = vrcp.pop %v3384
    %v3388 = vmul.f32 1.0, %v3387
    %v3389 = vxor.u32 %v3370, 2147483648
    %v3390 = vxor.u32 %v3374, 2147483648
    %v3391 = vmul.f32 %v3389, 1.442695
    %v3392 = vpow.pop %v3391
    %v3393 = vmul.f32 %v3390, 1.442695
    %v3394 = vpow.pop %v3393
    %v3395 = vadd.f32 %v3392, 1.0
    %v3396 = vadd.f32 %v3394, 1.0
    %v3397 = vrcp.pop %v3395
    %v3398 = vmul.f32 1.0, %v3397
    %v3399 = vrcp.pop %v3396
    %v3400 = vmul.f32 1.0, %v3399
    %v3401 = vtanh.pop %v3371
    %v3402 = vtanh.pop %v3375
    %v3403 = vxor.u32 %v3372, 2147483648
    %v3404 = vxor.u32 %v3376, 2147483648
    %v3405 = vmul.f32 %v3403, 1.442695
    %v3406 = vpow.pop %v3405
    %v3407 = vmul.f32 %v3404, 1.442695
    %v3408 = vpow.pop %v3407
    %v3409 = vadd.f32 %v3406, 1.0
    %v3410 = vadd.f32 %v3408, 1.0
    %v3411 = vrcp.pop %v3409
    %v3412 = vmul.f32 1.0, %v3411
    %v3413 = vrcp.pop %v3410
    %v3414 = vmul.f32 1.0, %v3413
    %v3415 = vmul.f32 %v3398, %v3036
    %v3416 = vmul.f32 %v3400, %v3037
    %v3417 = vmul.f32 %v3386, %v3401
    %v3418 = vmul.f32 %v3388, %v3402
    %v3419 = vadd.f32 %v3415, %v3417
    %v3420 = vadd.f32 %v3416, %v3418
    %v3421 = vtanh.pop %v3419
    %v3422 = vtanh.pop %v3420
    %v3423 = vmul.f32 %v3412, %v3421
    %v3424 = vmul.f32 %v3414, %v3422
    %s3425 = smul.u32 12, 4
    %s3426 = smul.addr %s3425, 8
    %s3427 = scalar_lea.vmem [#allocation2], %s3426
    %v3428 = vld [vmem:[%s3427] sm:$0xff]
    %v3429 = vld [vmem:[%s3427 + $0x8] sm:$0xff]
    %v3430 = vld [vmem:[%s3427 + $0x10] sm:$0xff]
    %v3431 = vld [vmem:[%s3427 + $0x18] sm:$0xff]
    %v3432 = vld [vmem:[%s3427 + $0x20] sm:$0xff]
    %v3433 = vld [vmem:[%s3427 + $0x28] sm:$0xff]
    %v3434 = vld [vmem:[%s3427 + $0x30] sm:$0xff]
    %v3435 = vld [vmem:[%s3427 + $0x38] sm:$0xff]
    %3436 = vmatprep.subr.bf16.mxu0 %v692
    %3437 = vmatpush1.bf16.msra.mxu0 %v691
    %3438 = vmatprep.subr.bf16.mxu0 %v696
    %3439 = vmatpush1.bf16.msra.mxu0 %v695
    %3440 = vmatprep.subr.bf16.mxu0 %v700
    %3441 = vmatpush1.bf16.msra.mxu0 %v699
    %3442 = vmatprep.subr.bf16.mxu0 %v704
    %3443 = vmatpush1.bf16.msra.mxu0 %v703
    %3444 = vmatprep.subr.bf16.mxu0 %v708
    %3445 = vmatpush1.bf16.msra.mxu0 %v707
    %3446 = vmatprep.subr.bf16.mxu0 %v712
    %3447 = vmatpush1.bf16.msra.mxu0 %v711
    %3448 = vmatprep.subr.bf16.mxu0 %v716
    %3449 = vmatpush1.bf16.msra.mxu0 %v715
    %3450 = vmatprep.subr.bf16.mxu0 %v720
    %3451 = vmatpush1.bf16.msra.mxu0 %v719
    %3452 = vmatprep.subr.bf16.mxu0 0
    %3453 = vmatpush1.bf16.msra.mxu0 0
    %3454 = vmatprep.subr.bf16.mxu0 0
    %3455 = vmatpush1.bf16.msra.mxu0 0
    %3456 = vmatprep.subr.bf16.mxu0 0
    %3457 = vmatpush1.bf16.msra.mxu0 0
    %3458 = vmatprep.subr.bf16.mxu0 0
    %3459 = vmatpush1.bf16.msra.mxu0 0
    %3460 = vmatprep.subr.bf16.mxu0 0
    %3461 = vmatpush1.bf16.msra.mxu0 0
    %3462 = vmatprep.subr.bf16.mxu0 0
    %3463 = vmatpush1.bf16.msra.mxu0 0
    %3464 = vmatprep.subr.bf16.mxu0 0
    %3465 = vmatpush1.bf16.msra.mxu0 0
    %3466 = vmatprep.subr.bf16.mxu0 0
    %3467 = vmatpush1.bf16.msra.mxu0 0
    %3468 = vmatprep.mubr.bf16.mxu0 0
    %3469 = vmatmul.mubr.bf16.gmra.mrb[0].mxu0 %v3195
    %v3470 = vpop.f32.mrb[0].mxu0
    %v3471 = vadd.f32 0.0, %v3470
    %v3472 = vpop.f32.mrb[0].mxu0
    %v3473 = vadd.f32 0.0, %v3472
    %v3474 = vpop.f32.mrb[0].mxu0
    %v3475 = vadd.f32 0.0, %v3474
    %v3476 = vpop.f32.mrb[0].mxu0
    %v3477 = vadd.f32 0.0, %v3476
    %3478 = vdwg.mxu0
    %3479 = vmatprep.subr.bf16.mxu0 %v694
    %3480 = vmatpush1.bf16.msra.mxu0 %v693
    %3481 = vmatprep.subr.bf16.mxu0 %v698
    %3482 = vmatpush1.bf16.msra.mxu0 %v697
    %3483 = vmatprep.subr.bf16.mxu0 %v702
    %3484 = vmatpush1.bf16.msra.mxu0 %v701
    %3485 = vmatprep.subr.bf16.mxu0 %v706
    %3486 = vmatpush1.bf16.msra.mxu0 %v705
    %3487 = vmatprep.subr.bf16.mxu0 %v710
    %3488 = vmatpush1.bf16.msra.mxu0 %v709
    %3489 = vmatprep.subr.bf16.mxu0 %v714
    %3490 = vmatpush1.bf16.msra.mxu0 %v713
    %3491 = vmatprep.subr.bf16.mxu0 %v718
    %3492 = vmatpush1.bf16.msra.mxu0 %v717
    %3493 = vmatprep.subr.bf16.mxu0 %v722
    %3494 = vmatpush1.bf16.msra.mxu0 %v721
    %3495 = vmatprep.subr.bf16.mxu0 0
    %3496 = vmatpush1.bf16.msra.mxu0 0
    %3497 = vmatprep.subr.bf16.mxu0 0
    %3498 = vmatpush1.bf16.msra.mxu0 0
    %3499 = vmatprep.subr.bf16.mxu0 0
    %3500 = vmatpush1.bf16.msra.mxu0 0
    %3501 = vmatprep.subr.bf16.mxu0 0
    %3502 = vmatpush1.bf16.msra.mxu0 0
    %3503 = vmatprep.subr.bf16.mxu0 0
    %3504 = vmatpush1.bf16.msra.mxu0 0
    %3505 = vmatprep.subr.bf16.mxu0 0
    %3506 = vmatpush1.bf16.msra.mxu0 0
    %3507 = vmatprep.subr.bf16.mxu0 0
    %3508 = vmatpush1.bf16.msra.mxu0 0
    %3509 = vmatprep.subr.bf16.mxu0 0
    %3510 = vmatpush1.bf16.msra.mxu0 0
    %3511 = vmatprep.mubr.bf16.mxu0 0
    %3512 = vmatmul.mubr.bf16.gmra.mrb[0].mxu0 %v3195
    %v3513 = vpop.f32.mrb[0].mxu0
    %v3514 = vadd.f32 0.0, %v3513
    %v3515 = vpop.f32.mrb[0].mxu0
    %v3516 = vadd.f32 0.0, %v3515
    %v3517 = vpop.f32.mrb[0].mxu0
    %v3518 = vadd.f32 0.0, %v3517
    %v3519 = vpop.f32.mrb[0].mxu0
    %v3520 = vadd.f32 0.0, %v3519
    %3521 = vdwg.mxu0
    %v3522 = vadd.f32 %v3428, %v3471
    %v3523 = vadd.f32 %v3429, %v3473
    %v3524 = vadd.f32 %v3430, %v3514
    %v3525 = vadd.f32 %v3431, %v3516
    %v3526 = vadd.f32 %v3432, %v3475
    %v3527 = vadd.f32 %v3433, %v3477
    %v3528 = vadd.f32 %v3434, %v3518
    %v3529 = vadd.f32 %v3435, %v3520
    %v3530 = vxor.u32 %v3522, 2147483648
    %v3531 = vxor.u32 %v3526, 2147483648
    %v3532 = vmul.f32 %v3530, 1.442695
    %v3533 = vpow.pop %v3532
    %v3534 = vmul.f32 %v3531, 1.442695
    %v3535 = vpow.pop %v3534
    %v3536 = vadd.f32 %v3533, 1.0
    %v3537 = vadd.f32 %v3535, 1.0
    %v3538 = vrcp.pop %v3536
    %v3539 = vmul.f32 1.0, %v3538
    %v3540 = vrcp.pop %v3537
    %v3541 = vmul.f32 1.0, %v3540
    %v3542 = vxor.u32 %v3523, 2147483648
    %v3543 = vxor.u32 %v3527, 2147483648
    %v3544 = vmul.f32 %v3542, 1.442695
    %v3545 = vpow.pop %v3544
    %v3546 = vmul.f32 %v3543, 1.442695
    %v3547 = vpow.pop %v3546
    %v3548 = vadd.f32 %v3545, 1.0
    %v3549 = vadd.f32 %v3547, 1.0
    %v3550 = vrcp.pop %v3548
    %v3551 = vmul.f32 1.0, %v3550
    %v3552 = vrcp.pop %v3549
    %v3553 = vmul.f32 1.0, %v3552
    %v3554 = vtanh.pop %v3524
    %v3555 = vtanh.pop %v3528
    %v3556 = vxor.u32 %v3525, 2147483648
    %v3557 = vxor.u32 %v3529, 2147483648
    %v3558 = vmul.f32 %v3556, 1.442695
    %v3559 = vpow.pop %v3558
    %v3560 = vmul.f32 %v3557, 1.442695
    %v3561 = vpow.pop %v3560
    %v3562 = vadd.f32 %v3559, 1.0
    %v3563 = vadd.f32 %v3561, 1.0
    %v3564 = vrcp.pop %v3562
    %v3565 = vmul.f32 1.0, %v3564
    %v3566 = vrcp.pop %v3563
    %v3567 = vmul.f32 1.0, %v3566
    %v3568 = vmul.f32 %v3551, %v3189
    %v3569 = vmul.f32 %v3553, %v3190
    %v3570 = vmul.f32 %v3539, %v3554
    %v3571 = vmul.f32 %v3541, %v3555
    %v3572 = vadd.f32 %v3568, %v3570
    %v3573 = vadd.f32 %v3569, %v3571
    %v3574 = vtanh.pop %v3572
    %v3575 = vtanh.pop %v3573
    %v3576 = vmul.f32 %v3565, %v3574
    %v3577 = vmul.f32 %v3567, %v3575
    %v3578 = vpack.c.bf16 %v3577, %v3576
    %v3579 = vpack.c.bf16 %v3424, %v3423
    %3580 = vmatprep.subr.bf16.mxu0 %v1059
    %3581 = vmatpush1.bf16.msra.mxu0 %v1058
    %3582 = vmatprep.subr.bf16.mxu0 %v1063
    %3583 = vmatpush1.bf16.msra.mxu0 %v1062
    %3584 = vmatprep.subr.bf16.mxu0 %v1067
    %3585 = vmatpush1.bf16.msra.mxu0 %v1066
    %3586 = vmatprep.subr.bf16.mxu0 %v1071
    %3587 = vmatpush1.bf16.msra.mxu0 %v1070
    %3588 = vmatprep.subr.bf16.mxu0 %v1075
    %3589 = vmatpush1.bf16.msra.mxu0 %v1074
    %3590 = vmatprep.subr.bf16.mxu0 %v1079
    %3591 = vmatpush1.bf16.msra.mxu0 %v1078
    %3592 = vmatprep.subr.bf16.mxu0 %v1083
    %3593 = vmatpush1.bf16.msra.mxu0 %v1082
    %3594 = vmatprep.subr.bf16.mxu0 %v1087
    %3595 = vmatpush1.bf16.msra.mxu0 %v1086
    %3596 = vmatprep.subr.bf16.mxu0 0
    %3597 = vmatpush1.bf16.msra.mxu0 0
    %3598 = vmatprep.subr.bf16.mxu0 0
    %3599 = vmatpush1.bf16.msra.mxu0 0
    %3600 = vmatprep.subr.bf16.mxu0 0
    %3601 = vmatpush1.bf16.msra.mxu0 0
    %3602 = vmatprep.subr.bf16.mxu0 0
    %3603 = vmatpush1.bf16.msra.mxu0 0
    %3604 = vmatprep.subr.bf16.mxu0 0
    %3605 = vmatpush1.bf16.msra.mxu0 0
    %3606 = vmatprep.subr.bf16.mxu0 0
    %3607 = vmatpush1.bf16.msra.mxu0 0
    %3608 = vmatprep.subr.bf16.mxu0 0
    %3609 = vmatpush1.bf16.msra.mxu0 0
    %3610 = vmatprep.subr.bf16.mxu0 0
    %3611 = vmatpush1.bf16.msra.mxu0 0
    %3612 = vmatprep.mubr.bf16.mxu0 0
    %3613 = vmatmul.mubr.bf16.gmra.mrb[0].mxu0 %v3579
    %v3614 = vpop.f32.mrb[0].mxu0
    %v3615 = vadd.f32 0.0, %v3614
    %v3616 = vpop.f32.mrb[0].mxu0
    %v3617 = vadd.f32 0.0, %v3616
    %v3618 = vpop.f32.mrb[0].mxu0
    %v3619 = vadd.f32 0.0, %v3618
    %v3620 = vpop.f32.mrb[0].mxu0
    %v3621 = vadd.f32 0.0, %v3620
    %3622 = vdwg.mxu0
    %3623 = vmatprep.subr.bf16.mxu0 %v1061
    %3624 = vmatpush1.bf16.msra.mxu0 %v1060
    %3625 = vmatprep.subr.bf16.mxu0 %v1065
    %3626 = vmatpush1.bf16.msra.mxu0 %v1064
    %3627 = vmatprep.subr.bf16.mxu0 %v1069
    %3628 = vmatpush1.bf16.msra.mxu0 %v1068
    %3629 = vmatprep.subr.bf16.mxu0 %v1073
    %3630 = vmatpush1.bf16.msra.mxu0 %v1072
    %3631 = vmatprep.subr.bf16.mxu0 %v1077
    %3632 = vmatpush1.bf16.msra.mxu0 %v1076
    %3633 = vmatprep.subr.bf16.mxu0 %v1081
    %3634 = vmatpush1.bf16.msra.mxu0 %v1080
    %3635 = vmatprep.subr.bf16.mxu0 %v1085
    %3636 = vmatpush1.bf16.msra.mxu0 %v1084
    %3637 = vmatprep.subr.bf16.mxu0 %v1089
    %3638 = vmatpush1.bf16.msra.mxu0 %v1088
    %3639 = vmatprep.subr.bf16.mxu0 0
    %3640 = vmatpush1.bf16.msra.mxu0 0
    %3641 = vmatprep.subr.bf16.mxu0 0
    %3642 = vmatpush1.bf16.msra.mxu0 0
    %3643 = vmatprep.subr.bf16.mxu0 0
    %3644 = vmatpush1.bf16.msra.mxu0 0
    %3645 = vmatprep.subr.bf16.mxu0 0
    %3646 = vmatpush1.bf16.msra.mxu0 0
    %3647 = vmatprep.subr.bf16.mxu0 0
    %3648 = vmatpush1.bf16.msra.mxu0 0
    %3649 = vmatprep.subr.bf16.mxu0 0
    %3650 = vmatpush1.bf16.msra.mxu0 0
    %3651 = vmatprep.subr.bf16.mxu0 0
    %3652 = vmatpush1.bf16.msra.mxu0 0
    %3653 = vmatprep.subr.bf16.mxu0 0
    %3654 = vmatpush1.bf16.msra.mxu0 0
    %3655 = vmatprep.mubr.bf16.mxu0 0
    %3656 = vmatmul.mubr.bf16.gmra.mrb[0].mxu0 %v3579
    %v3657 = vpop.f32.mrb[0].mxu0
    %v3658 = vadd.f32 0.0, %v3657
    %v3659 = vpop.f32.mrb[0].mxu0
    %v3660 = vadd.f32 0.0, %v3659
    %v3661 = vpop.f32.mrb[0].mxu0
    %v3662 = vadd.f32 0.0, %v3661
    %v3663 = vpop.f32.mrb[0].mxu0
    %v3664 = vadd.f32 0.0, %v3663
    %3665 = vdwg.mxu0
    %3666 = vmatprep.subr.bf16.mxu0 %v1305
    %3667 = vmatpush1.bf16.msra.mxu0 %v1304
    %3668 = vmatprep.subr.bf16.mxu0 %v1309
    %3669 = vmatpush1.bf16.msra.mxu0 %v1308
    %3670 = vmatprep.subr.bf16.mxu0 %v1313
    %3671 = vmatpush1.bf16.msra.mxu0 %v1312
    %3672 = vmatprep.subr.bf16.mxu0 %v1317
    %3673 = vmatpush1.bf16.msra.mxu0 %v1316
    %3674 = vmatprep.subr.bf16.mxu0 %v1321
    %3675 = vmatpush1.bf16.msra.mxu0 %v1320
    %3676 = vmatprep.subr.bf16.mxu0 %v1325
    %3677 = vmatpush1.bf16.msra.mxu0 %v1324
    %3678 = vmatprep.subr.bf16.mxu0 %v1329
    %3679 = vmatpush1.bf16.msra.mxu0 %v1328
    %3680 = vmatprep.subr.bf16.mxu0 %v1333
    %3681 = vmatpush1.bf16.msra.mxu0 %v1332
    %3682 = vmatprep.subr.bf16.mxu0 0
    %3683 = vmatpush1.bf16.msra.mxu0 0
    %3684 = vmatprep.subr.bf16.mxu0 0
    %3685 = vmatpush1.bf16.msra.mxu0 0
    %3686 = vmatprep.subr.bf16.mxu0 0
    %3687 = vmatpush1.bf16.msra.mxu0 0
    %3688 = vmatprep.subr.bf16.mxu0 0
    %3689 = vmatpush1.bf16.msra.mxu0 0
    %3690 = vmatprep.subr.bf16.mxu0 0
    %3691 = vmatpush1.bf16.msra.mxu0 0
    %3692 = vmatprep.subr.bf16.mxu0 0
    %3693 = vmatpush1.bf16.msra.mxu0 0
    %3694 = vmatprep.subr.bf16.mxu0 0
    %3695 = vmatpush1.bf16.msra.mxu0 0
    %3696 = vmatprep.subr.bf16.mxu0 0
    %3697 = vmatpush1.bf16.msra.mxu0 0
    %3698 = vmatprep.mubr.bf16.mxu0 0
    %3699 = vmatmul.mubr.bf16.gmra.mrb[0].mxu0 %v3578
    %v3700 = vpop.f32.mrb[0].mxu0
    %v3701 = vadd.f32 %v3615, %v3700
    %v3702 = vpop.f32.mrb[0].mxu0
    %v3703 = vadd.f32 %v3617, %v3702
    %v3704 = vpop.f32.mrb[0].mxu0
    %v3705 = vadd.f32 %v3619, %v3704
    %v3706 = vpop.f32.mrb[0].mxu0
    %v3707 = vadd.f32 %v3621, %v3706
    %3708 = vdwg.mxu0
    %3709 = vmatprep.subr.bf16.mxu0 %v1307
    %3710 = vmatpush1.bf16.msra.mxu0 %v1306
    %3711 = vmatprep.subr.bf16.mxu0 %v1311
    %3712 = vmatpush1.bf16.msra.mxu0 %v1310
    %3713 = vmatprep.subr.bf16.mxu0 %v1315
    %3714 = vmatpush1.bf16.msra.mxu0 %v1314
    %3715 = vmatprep.subr.bf16.mxu0 %v1319
    %3716 = vmatpush1.bf16.msra.mxu0 %v1318
    %3717 = vmatprep.subr.bf16.mxu0 %v1323
    %3718 = vmatpush1.bf16.msra.mxu0 %v1322
    %3719 = vmatprep.subr.bf16.mxu0 %v1327
    %3720 = vmatpush1.bf16.msra.mxu0 %v1326
    %3721 = vmatprep.subr.bf16.mxu0 %v1331
    %3722 = vmatpush1.bf16.msra.mxu0 %v1330
    %3723 = vmatprep.subr.bf16.mxu0 %v1335
    %3724 = vmatpush1.bf16.msra.mxu0 %v1334
    %3725 = vmatprep.subr.bf16.mxu0 0
    %3726 = vmatpush1.bf16.msra.mxu0 0
    %3727 = vmatprep.subr.bf16.mxu0 0
    %3728 = vmatpush1.bf16.msra.mxu0 0
    %3729 = vmatprep.subr.bf16.mxu0 0
    %3730 = vmatpush1.bf16.msra.mxu0 0
    %3731 = vmatprep.subr.bf16.mxu0 0
    %3732 = vmatpush1.bf16.msra.mxu0 0
    %3733 = vmatprep.subr.bf16.mxu0 0
    %3734 = vmatpush1.bf16.msra.mxu0 0
    %3735 = vmatprep.subr.bf16.mxu0 0
    %3736 = vmatpush1.bf16.msra.mxu0 0
    %3737 = vmatprep.subr.bf16.mxu0 0
    %3738 = vmatpush1.bf16.msra.mxu0 0
    %3739 = vmatprep.subr.bf16.mxu0 0
    %3740 = vmatpush1.bf16.msra.mxu0 0
    %3741 = vmatprep.mubr.bf16.mxu0 0
    %3742 = vmatmul.mubr.bf16.gmra.mrb[0].mxu0 %v3578
    %v3743 = vpop.f32.mrb[0].mxu0
    %v3744 = vadd.f32 %v3658, %v3743
    %v3745 = vpop.f32.mrb[0].mxu0
    %v3746 = vadd.f32 %v3660, %v3745
    %v3747 = vpop.f32.mrb[0].mxu0
    %v3748 = vadd.f32 %v3662, %v3747
    %v3749 = vpop.f32.mrb[0].mxu0
    %v3750 = vadd.f32 %v3664, %v3749
    %3751 = vdwg.mxu0
    %v3752 = vadd.f32 %v3701, %v535
    %v3753 = vadd.f32 %v3703, %v539
    %v3754 = vadd.f32 %v3744, %v543
    %v3755 = vadd.f32 %v3746, %v547
    %v3756 = vadd.f32 %v3705, %v535
    %v3757 = vadd.f32 %v3707, %v539
    %v3758 = vadd.f32 %v3748, %v543
    %v3759 = vadd.f32 %v3750, %v547
    %v3760 = vxor.u32 %v3752, 2147483648
    %v3761 = vxor.u32 %v3756, 2147483648
    %v3762 = vmul.f32 %v3760, 1.442695
    %v3763 = vpow.pop %v3762
    %v3764 = vmul.f32 %v3761, 1.442695
    %v3765 = vpow.pop %v3764
    %v3766 = vadd.f32 %v3763, 1.0
    %v3767 = vadd.f32 %v3765, 1.0
    %v3768 = vrcp.pop %v3766
    %v3769 = vmul.f32 1.0, %v3768
    %v3770 = vrcp.pop %v3767
    %v3771 = vmul.f32 1.0, %v3770
    %v3772 = vxor.u32 %v3753, 2147483648
    %v3773 = vxor.u32 %v3757, 2147483648
    %v3774 = vmul.f32 %v3772, 1.442695
    %v3775 = vpow.pop %v3774
    %v3776 = vmul.f32 %v3773, 1.442695
    %v3777 = vpow.pop %v3776
    %v3778 = vadd.f32 %v3775, 1.0
    %v3779 = vadd.f32 %v3777, 1.0
    %v3780 = vrcp.pop %v3778
    %v3781 = vmul.f32 1.0, %v3780
    %v3782 = vrcp.pop %v3779
    %v3783 = vmul.f32 1.0, %v3782
    %v3784 = vtanh.pop %v3754
    %v3785 = vtanh.pop %v3758
    %v3786 = vxor.u32 %v3755, 2147483648
    %v3787 = vxor.u32 %v3759, 2147483648
    %v3788 = vmul.f32 %v3786, 1.442695
    %v3789 = vpow.pop %v3788
    %v3790 = vmul.f32 %v3787, 1.442695
    %v3791 = vpow.pop %v3790
    %v3792 = vadd.f32 %v3789, 1.0
    %v3793 = vadd.f32 %v3791, 1.0
    %v3794 = vrcp.pop %v3792
    %v3795 = vmul.f32 1.0, %v3794
    %v3796 = vrcp.pop %v3793
    %v3797 = vmul.f32 1.0, %v3796
    %v3798 = vmul.f32 %v3781, %v3419
    %v3799 = vmul.f32 %v3783, %v3420
    %v3800 = vmul.f32 %v3769, %v3784
    %v3801 = vmul.f32 %v3771, %v3785
    %v3802 = vadd.f32 %v3798, %v3800
    %v3803 = vadd.f32 %v3799, %v3801
    %v3804 = vtanh.pop %v3802
    %v3805 = vtanh.pop %v3803
    %v3806 = vmul.f32 %v3795, %v3804
    %v3807 = vmul.f32 %v3797, %v3805
    %s3808 = smul.u32 14, 4
    %s3809 = smul.addr %s3808, 8
    %s3810 = scalar_lea.vmem [#allocation2], %s3809
    %v3811 = vld [vmem:[%s3810] sm:$0xff]
    %v3812 = vld [vmem:[%s3810 + $0x8] sm:$0xff]
    %v3813 = vld [vmem:[%s3810 + $0x10] sm:$0xff]
    %v3814 = vld [vmem:[%s3810 + $0x18] sm:$0xff]
    %v3815 = vld [vmem:[%s3810 + $0x20] sm:$0xff]
    %v3816 = vld [vmem:[%s3810 + $0x28] sm:$0xff]
    %v3817 = vld [vmem:[%s3810 + $0x30] sm:$0xff]
    %v3818 = vld [vmem:[%s3810 + $0x38] sm:$0xff]
    %3819 = vmatprep.subr.bf16.mxu0 %v692
    %3820 = vmatpush1.bf16.msra.mxu0 %v691
    %3821 = vmatprep.subr.bf16.mxu0 %v696
    %3822 = vmatpush1.bf16.msra.mxu0 %v695
    %3823 = vmatprep.subr.bf16.mxu0 %v700
    %3824 = vmatpush1.bf16.msra.mxu0 %v699
    %3825 = vmatprep.subr.bf16.mxu0 %v704
    %3826 = vmatpush1.bf16.msra.mxu0 %v703
    %3827 = vmatprep.subr.bf16.mxu0 %v708
    %3828 = vmatpush1.bf16.msra.mxu0 %v707
    %3829 = vmatprep.subr.bf16.mxu0 %v712
    %3830 = vmatpush1.bf16.msra.mxu0 %v711
    %3831 = vmatprep.subr.bf16.mxu0 %v716
    %3832 = vmatpush1.bf16.msra.mxu0 %v715
    %3833 = vmatprep.subr.bf16.mxu0 %v720
    %3834 = vmatpush1.bf16.msra.mxu0 %v719
    %3835 = vmatprep.subr.bf16.mxu0 0
    %3836 = vmatpush1.bf16.msra.mxu0 0
    %3837 = vmatprep.subr.bf16.mxu0 0
    %3838 = vmatpush1.bf16.msra.mxu0 0
    %3839 = vmatprep.subr.bf16.mxu0 0
    %3840 = vmatpush1.bf16.msra.mxu0 0
    %3841 = vmatprep.subr.bf16.mxu0 0
    %3842 = vmatpush1.bf16.msra.mxu0 0
    %3843 = vmatprep.subr.bf16.mxu0 0
    %3844 = vmatpush1.bf16.msra.mxu0 0
    %3845 = vmatprep.subr.bf16.mxu0 0
    %3846 = vmatpush1.bf16.msra.mxu0 0
    %3847 = vmatprep.subr.bf16.mxu0 0
    %3848 = vmatpush1.bf16.msra.mxu0 0
    %3849 = vmatprep.subr.bf16.mxu0 0
    %3850 = vmatpush1.bf16.msra.mxu0 0
    %3851 = vmatprep.mubr.bf16.mxu0 0
    %3852 = vmatmul.mubr.bf16.gmra.mrb[0].mxu0 %v3578
    %v3853 = vpop.f32.mrb[0].mxu0
    %v3854 = vadd.f32 0.0, %v3853
    %v3855 = vpop.f32.mrb[0].mxu0
    %v3856 = vadd.f32 0.0, %v3855
    %v3857 = vpop.f32.mrb[0].mxu0
    %v3858 = vadd.f32 0.0, %v3857
    %v3859 = vpop.f32.mrb[0].mxu0
    %v3860 = vadd.f32 0.0, %v3859
    %3861 = vdwg.mxu0
    %3862 = vmatprep.subr.bf16.mxu0 %v694
    %3863 = vmatpush1.bf16.msra.mxu0 %v693
    %3864 = vmatprep.subr.bf16.mxu0 %v698
    %3865 = vmatpush1.bf16.msra.mxu0 %v697
    %3866 = vmatprep.subr.bf16.mxu0 %v702
    %3867 = vmatpush1.bf16.msra.mxu0 %v701
    %3868 = vmatprep.subr.bf16.mxu0 %v706
    %3869 = vmatpush1.bf16.msra.mxu0 %v705
    %3870 = vmatprep.subr.bf16.mxu0 %v710
    %3871 = vmatpush1.bf16.msra.mxu0 %v709
    %3872 = vmatprep.subr.bf16.mxu0 %v714
    %3873 = vmatpush1.bf16.msra.mxu0 %v713
    %3874 = vmatprep.subr.bf16.mxu0 %v718
    %3875 = vmatpush1.bf16.msra.mxu0 %v717
    %3876 = vmatprep.subr.bf16.mxu0 %v722
    %3877 = vmatpush1.bf16.msra.mxu0 %v721
    %3878 = vmatprep.subr.bf16.mxu0 0
    %3879 = vmatpush1.bf16.msra.mxu0 0
    %3880 = vmatprep.subr.bf16.mxu0 0
    %3881 = vmatpush1.bf16.msra.mxu0 0
    %3882 = vmatprep.subr.bf16.mxu0 0
    %3883 = vmatpush1.bf16.msra.mxu0 0
    %3884 = vmatprep.subr.bf16.mxu0 0
    %3885 = vmatpush1.bf16.msra.mxu0 0
    %3886 = vmatprep.subr.bf16.mxu0 0
    %3887 = vmatpush1.bf16.msra.mxu0 0
    %3888 = vmatprep.subr.bf16.mxu0 0
    %3889 = vmatpush1.bf16.msra.mxu0 0
    %3890 = vmatprep.subr.bf16.mxu0 0
    %3891 = vmatpush1.bf16.msra.mxu0 0
    %3892 = vmatprep.subr.bf16.mxu0 0
    %3893 = vmatpush1.bf16.msra.mxu0 0
    %3894 = vmatprep.mubr.bf16.mxu0 0
    %3895 = vmatmul.mubr.bf16.gmra.mrb[0].mxu0 %v3578
    %v3896 = vpop.f32.mrb[0].mxu0
    %v3897 = vadd.f32 0.0, %v3896
    %v3898 = vpop.f32.mrb[0].mxu0
    %v3899 = vadd.f32 0.0, %v3898
    %v3900 = vpop.f32.mrb[0].mxu0
    %v3901 = vadd.f32 0.0, %v3900
    %v3902 = vpop.f32.mrb[0].mxu0
    %v3903 = vadd.f32 0.0, %v3902
    %3904 = vdwg.mxu0
    %v3905 = vadd.f32 %v3811, %v3854
    %v3906 = vadd.f32 %v3812, %v3856
    %v3907 = vadd.f32 %v3813, %v3897
    %v3908 = vadd.f32 %v3814, %v3899
    %v3909 = vadd.f32 %v3815, %v3858
    %v3910 = vadd.f32 %v3816, %v3860
    %v3911 = vadd.f32 %v3817, %v3901
    %v3912 = vadd.f32 %v3818, %v3903
    %v3913 = vxor.u32 %v3905, 2147483648
    %v3914 = vxor.u32 %v3909, 2147483648
    %v3915 = vmul.f32 %v3913, 1.442695
    %v3916 = vpow.pop %v3915
    %v3917 = vmul.f32 %v3914, 1.442695
    %v3918 = vpow.pop %v3917
    %v3919 = vadd.f32 %v3916, 1.0
    %v3920 = vadd.f32 %v3918, 1.0
    %v3921 = vrcp.pop %v3919
    %v3922 = vmul.f32 1.0, %v3921
    %v3923 = vrcp.pop %v3920
    %v3924 = vmul.f32 1.0, %v3923
    %v3925 = vxor.u32 %v3906, 2147483648
    %v3926 = vxor.u32 %v3910, 2147483648
    %v3927 = vmul.f32 %v3925, 1.442695
    %v3928 = vpow.pop %v3927
    %v3929 = vmul.f32 %v3926, 1.442695
    %v3930 = vpow.pop %v3929
    %v3931 = vadd.f32 %v3928, 1.0
    %v3932 = vadd.f32 %v3930, 1.0
    %v3933 = vrcp.pop %v3931
    %v3934 = vmul.f32 1.0, %v3933
    %v3935 = vrcp.pop %v3932
    %v3936 = vmul.f32 1.0, %v3935
    %v3937 = vtanh.pop %v3907
    %v3938 = vtanh.pop %v3911
    %v3939 = vxor.u32 %v3908, 2147483648
    %v3940 = vxor.u32 %v3912, 2147483648
    %v3941 = vmul.f32 %v3939, 1.442695
    %v3942 = vpow.pop %v3941
    %v3943 = vmul.f32 %v3940, 1.442695
    %v3944 = vpow.pop %v3943
    %v3945 = vadd.f32 %v3942, 1.0
    %v3946 = vadd.f32 %v3944, 1.0
    %v3947 = vrcp.pop %v3945
    %v3948 = vmul.f32 1.0, %v3947
    %v3949 = vrcp.pop %v3946
    %v3950 = vmul.f32 1.0, %v3949
    %v3951 = vmul.f32 %v3934, %v3572
    %v3952 = vmul.f32 %v3936, %v3573
    %v3953 = vmul.f32 %v3922, %v3937
    %v3954 = vmul.f32 %v3924, %v3938
    %v3955 = vadd.f32 %v3951, %v3953
    %v3956 = vadd.f32 %v3952, %v3954
    %v3957 = vtanh.pop %v3955
    %v3958 = vtanh.pop %v3956
    %v3959 = vmul.f32 %v3948, %v3957
    %v3960 = vmul.f32 %v3950, %v3958
    %v3961 = vpack.c.bf16 %v3960, %v3959
    %v3962 = vpack.c.bf16 %v3807, %v3806
    %3963 = vmatprep.subr.bf16.mxu0 %v1059
    %3964 = vmatpush1.bf16.msra.mxu0 %v1058
    %3965 = vmatprep.subr.bf16.mxu0 %v1063
    %3966 = vmatpush1.bf16.msra.mxu0 %v1062
    %3967 = vmatprep.subr.bf16.mxu0 %v1067
    %3968 = vmatpush1.bf16.msra.mxu0 %v1066
    %3969 = vmatprep.subr.bf16.mxu0 %v1071
    %3970 = vmatpush1.bf16.msra.mxu0 %v1070
    %3971 = vmatprep.subr.bf16.mxu0 %v1075
    %3972 = vmatpush1.bf16.msra.mxu0 %v1074
    %3973 = vmatprep.subr.bf16.mxu0 %v1079
    %3974 = vmatpush1.bf16.msra.mxu0 %v1078
    %3975 = vmatprep.subr.bf16.mxu0 %v1083
    %3976 = vmatpush1.bf16.msra.mxu0 %v1082
    %3977 = vmatprep.subr.bf16.mxu0 %v1087
    %3978 = vmatpush1.bf16.msra.mxu0 %v1086
    %3979 = vmatprep.subr.bf16.mxu0 0
    %3980 = vmatpush1.bf16.msra.mxu0 0
    %3981 = vmatprep.subr.bf16.mxu0 0
    %3982 = vmatpush1.bf16.msra.mxu0 0
    %3983 = vmatprep.subr.bf16.mxu0 0
    %3984 = vmatpush1.bf16.msra.mxu0 0
    %3985 = vmatprep.subr.bf16.mxu0 0
    %3986 = vmatpush1.bf16.msra.mxu0 0
    %3987 = vmatprep.subr.bf16.mxu0 0
    %3988 = vmatpush1.bf16.msra.mxu0 0
    %3989 = vmatprep.subr.bf16.mxu0 0
    %3990 = vmatpush1.bf16.msra.mxu0 0
    %3991 = vmatprep.subr.bf16.mxu0 0
    %3992 = vmatpush1.bf16.msra.mxu0 0
    %3993 = vmatprep.subr.bf16.mxu0 0
    %3994 = vmatpush1.bf16.msra.mxu0 0
    %3995 = vmatprep.mubr.bf16.mxu0 0
    %3996 = vmatmul.mubr.bf16.gmra.mrb[0].mxu0 %v3962
    %v3997 = vpop.f32.mrb[0].mxu0
    %v3998 = vadd.f32 0.0, %v3997
    %v3999 = vpop.f32.mrb[0].mxu0
    %v4000 = vadd.f32 0.0, %v3999
    %v4001 = vpop.f32.mrb[0].mxu0
    %v4002 = vadd.f32 0.0, %v4001
    %v4003 = vpop.f32.mrb[0].mxu0
    %v4004 = vadd.f32 0.0, %v4003
    %4005 = vdwg.mxu0
    %4006 = vmatprep.subr.bf16.mxu0 %v1061
    %4007 = vmatpush1.bf16.msra.mxu0 %v1060
    %4008 = vmatprep.subr.bf16.mxu0 %v1065
    %4009 = vmatpush1.bf16.msra.mxu0 %v1064
    %4010 = vmatprep.subr.bf16.mxu0 %v1069
    %4011 = vmatpush1.bf16.msra.mxu0 %v1068
    %4012 = vmatprep.subr.bf16.mxu0 %v1073
    %4013 = vmatpush1.bf16.msra.mxu0 %v1072
    %4014 = vmatprep.subr.bf16.mxu0 %v1077
    %4015 = vmatpush1.bf16.msra.mxu0 %v1076
    %4016 = vmatprep.subr.bf16.mxu0 %v1081
    %4017 = vmatpush1.bf16.msra.mxu0 %v1080
    %4018 = vmatprep.subr.bf16.mxu0 %v1085
    %4019 = vmatpush1.bf16.msra.mxu0 %v1084
    %4020 = vmatprep.subr.bf16.mxu0 %v1089
    %4021 = vmatpush1.bf16.msra.mxu0 %v1088
    %4022 = vmatprep.subr.bf16.mxu0 0
    %4023 = vmatpush1.bf16.msra.mxu0 0
    %4024 = vmatprep.subr.bf16.mxu0 0
    %4025 = vmatpush1.bf16.msra.mxu0 0
    %4026 = vmatprep.subr.bf16.mxu0 0
    %4027 = vmatpush1.bf16.msra.mxu0 0
    %4028 = vmatprep.subr.bf16.mxu0 0
    %4029 = vmatpush1.bf16.msra.mxu0 0
    %4030 = vmatprep.subr.bf16.mxu0 0
    %4031 = vmatpush1.bf16.msra.mxu0 0
    %4032 = vmatprep.subr.bf16.mxu0 0
    %4033 = vmatpush1.bf16.msra.mxu0 0
    %4034 = vmatprep.subr.bf16.mxu0 0
    %4035 = vmatpush1.bf16.msra.mxu0 0
    %4036 = vmatprep.subr.bf16.mxu0 0
    %4037 = vmatpush1.bf16.msra.mxu0 0
    %4038 = vmatprep.mubr.bf16.mxu0 0
    %4039 = vmatmul.mubr.bf16.gmra.mrb[0].mxu0 %v3962
    %v4040 = vpop.f32.mrb[0].mxu0
    %v4041 = vadd.f32 0.0, %v4040
    %v4042 = vpop.f32.mrb[0].mxu0
    %v4043 = vadd.f32 0.0, %v4042
    %v4044 = vpop.f32.mrb[0].mxu0
    %v4045 = vadd.f32 0.0, %v4044
    %v4046 = vpop.f32.mrb[0].mxu0
    %v4047 = vadd.f32 0.0, %v4046
    %4048 = vdwg.mxu0
    %4049 = vmatprep.subr.bf16.mxu0 %v1305
    %4050 = vmatpush1.bf16.msra.mxu0 %v1304
    %4051 = vmatprep.subr.bf16.mxu0 %v1309
    %4052 = vmatpush1.bf16.msra.mxu0 %v1308
    %4053 = vmatprep.subr.bf16.mxu0 %v1313
    %4054 = vmatpush1.bf16.msra.mxu0 %v1312
    %4055 = vmatprep.subr.bf16.mxu0 %v1317
    %4056 = vmatpush1.bf16.msra.mxu0 %v1316
    %4057 = vmatprep.subr.bf16.mxu0 %v1321
    %4058 = vmatpush1.bf16.msra.mxu0 %v1320
    %4059 = vmatprep.subr.bf16.mxu0 %v1325
    %4060 = vmatpush1.bf16.msra.mxu0 %v1324
    %4061 = vmatprep.subr.bf16.mxu0 %v1329
    %4062 = vmatpush1.bf16.msra.mxu0 %v1328
    %4063 = vmatprep.subr.bf16.mxu0 %v1333
    %4064 = vmatpush1.bf16.msra.mxu0 %v1332
    %4065 = vmatprep.subr.bf16.mxu0 0
    %4066 = vmatpush1.bf16.msra.mxu0 0
    %4067 = vmatprep.subr.bf16.mxu0 0
    %4068 = vmatpush1.bf16.msra.mxu0 0
    %4069 = vmatprep.subr.bf16.mxu0 0
    %4070 = vmatpush1.bf16.msra.mxu0 0
    %4071 = vmatprep.subr.bf16.mxu0 0
    %4072 = vmatpush1.bf16.msra.mxu0 0
    %4073 = vmatprep.subr.bf16.mxu0 0
    %4074 = vmatpush1.bf16.msra.mxu0 0
    %4075 = vmatprep.subr.bf16.mxu0 0
    %4076 = vmatpush1.bf16.msra.mxu0 0
    %4077 = vmatprep.subr.bf16.mxu0 0
    %4078 = vmatpush1.bf16.msra.mxu0 0
    %4079 = vmatprep.subr.bf16.mxu0 0
    %4080 = vmatpush1.bf16.msra.mxu0 0
    %4081 = vmatprep.mubr.bf16.mxu0 0
    %4082 = vmatmul.mubr.bf16.gmra.mrb[0].mxu0 %v3961
    %v4083 = vpop.f32.mrb[0].mxu0
    %v4084 = vadd.f32 %v3998, %v4083
    %v4085 = vpop.f32.mrb[0].mxu0
    %v4086 = vadd.f32 %v4000, %v4085
    %v4087 = vpop.f32.mrb[0].mxu0
    %v4088 = vadd.f32 %v4002, %v4087
    %v4089 = vpop.f32.mrb[0].mxu0
    %v4090 = vadd.f32 %v4004, %v4089
    %4091 = vdwg.mxu0
    %4092 = vmatprep.subr.bf16.mxu0 %v1307
    %4093 = vmatpush1.bf16.msra.mxu0 %v1306
    %4094 = vmatprep.subr.bf16.mxu0 %v1311
    %4095 = vmatpush1.bf16.msra.mxu0 %v1310
    %4096 = vmatprep.subr.bf16.mxu0 %v1315
    %4097 = vmatpush1.bf16.msra.mxu0 %v1314
    %4098 = vmatprep.subr.bf16.mxu0 %v1319
    %4099 = vmatpush1.bf16.msra.mxu0 %v1318
    %4100 = vmatprep.subr.bf16.mxu0 %v1323
    %4101 = vmatpush1.bf16.msra.mxu0 %v1322
    %4102 = vmatprep.subr.bf16.mxu0 %v1327
    %4103 = vmatpush1.bf16.msra.mxu0 %v1326
    %4104 = vmatprep.subr.bf16.mxu0 %v1331
    %4105 = vmatpush1.bf16.msra.mxu0 %v1330
    %4106 = vmatprep.subr.bf16.mxu0 %v1335
    %4107 = vmatpush1.bf16.msra.mxu0 %v1334
    %4108 = vmatprep.subr.bf16.mxu0 0
    %4109 = vmatpush1.bf16.msra.mxu0 0
    %4110 = vmatprep.subr.bf16.mxu0 0
    %4111 = vmatpush1.bf16.msra.mxu0 0
    %4112 = vmatprep.subr.bf16.mxu0 0
    %4113 = vmatpush1.bf16.msra.mxu0 0
    %4114 = vmatprep.subr.bf16.mxu0 0
    %4115 = vmatpush1.bf16.msra.mxu0 0
    %4116 = vmatprep.subr.bf16.mxu0 0
    %4117 = vmatpush1.bf16.msra.mxu0 0
    %4118 = vmatprep.subr.bf16.mxu0 0
    %4119 = vmatpush1.bf16.msra.mxu0 0
    %4120 = vmatprep.subr.bf16.mxu0 0
    %4121 = vmatpush1.bf16.msra.mxu0 0
    %4122 = vmatprep.subr.bf16.mxu0 0
    %4123 = vmatpush1.bf16.msra.mxu0 0
    %4124 = vmatprep.mubr.bf16.mxu0 0
    %4125 = vmatmul.mubr.bf16.gmra.mrb[0].mxu0 %v3961
    %v4126 = vpop.f32.mrb[0].mxu0
    %v4127 = vadd.f32 %v4041, %v4126
    %v4128 = vpop.f32.mrb[0].mxu0
    %v4129 = vadd.f32 %v4043, %v4128
    %v4130 = vpop.f32.mrb[0].mxu0
    %v4131 = vadd.f32 %v4045, %v4130
    %v4132 = vpop.f32.mrb[0].mxu0
    %v4133 = vadd.f32 %v4047, %v4132
    %4134 = vdwg.mxu0
    %v4135 = vadd.f32 %v4084, %v535
    %v4136 = vadd.f32 %v4086, %v539
    %v4137 = vadd.f32 %v4127, %v543
    %v4138 = vadd.f32 %v4129, %v547
    %v4139 = vadd.f32 %v4088, %v535
    %v4140 = vadd.f32 %v4090, %v539
    %v4141 = vadd.f32 %v4131, %v543
    %v4142 = vadd.f32 %v4133, %v547
    %v4143 = vxor.u32 %v4135, 2147483648
    %v4144 = vxor.u32 %v4139, 2147483648
    %v4145 = vmul.f32 %v4143, 1.442695
    %v4146 = vpow.pop %v4145
    %v4147 = vmul.f32 %v4144, 1.442695
    %v4148 = vpow.pop %v4147
    %v4149 = vadd.f32 %v4146, 1.0
    %v4150 = vadd.f32 %v4148, 1.0
    %v4151 = vrcp.pop %v4149
    %v4152 = vmul.f32 1.0, %v4151
    %v4153 = vrcp.pop %v4150
    %v4154 = vmul.f32 1.0, %v4153
    %v4155 = vxor.u32 %v4136, 2147483648
    %v4156 = vxor.u32 %v4140, 2147483648
    %v4157 = vmul.f32 %v4155, 1.442695
    %v4158 = vpow.pop %v4157
    %v4159 = vmul.f32 %v4156, 1.442695
    %v4160 = vpow.pop %v4159
    %v4161 = vadd.f32 %v4158, 1.0
    %v4162 = vadd.f32 %v4160, 1.0
    %v4163 = vrcp.pop %v4161
    %v4164 = vmul.f32 1.0, %v4163
    %v4165 = vrcp.pop %v4162
    %v4166 = vmul.f32 1.0, %v4165
    %v4167 = vtanh.pop %v4137
    %v4168 = vtanh.pop %v4141
    %v4169 = vxor.u32 %v4138, 2147483648
    %v4170 = vxor.u32 %v4142, 2147483648
    %v4171 = vmul.f32 %v4169, 1.442695
    %v4172 = vpow.pop %v4171
    %v4173 = vmul.f32 %v4170, 1.442695
    %v4174 = vpow.pop %v4173
    %v4175 = vadd.f32 %v4172, 1.0
    %v4176 = vadd.f32 %v4174, 1.0
    %v4177 = vrcp.pop %v4175
    %v4178 = vmul.f32 1.0, %v4177
    %v4179 = vrcp.pop %v4176
    %v4180 = vmul.f32 1.0, %v4179
    %v4181 = vmul.f32 %v4164, %v3802
    %v4182 = vmul.f32 %v4166, %v3803
    %v4183 = vmul.f32 %v4152, %v4167
    %v4184 = vmul.f32 %v4154, %v4168
    %v4185 = vadd.f32 %v4181, %v4183
    %v4186 = vadd.f32 %v4182, %v4184
    %v4187 = vtanh.pop %v4185
    %v4188 = vtanh.pop %v4186
    %v4189 = vmul.f32 %v4178, %v4187
    %v4190 = vmul.f32 %v4180, %v4188
    %v4191 = vpack.c.bf16 %v4190, %v4189
    %v4192 = vld [vmem:[#allocation9] sm:$0xf]
    %v4193 = vld [vmem:[#allocation9 + $0x4] sm:$0xf]
    %v4194 = vld [vmem:[#allocation9 + $0x8] sm:$0xf]
    %v4195 = vld [vmem:[#allocation9 + $0xc] sm:$0xf]
    %v4196 = vld [vmem:[#allocation9 + $0x10] sm:$0xf]
    %v4197 = vld [vmem:[#allocation9 + $0x14] sm:$0xf]
    %v4198 = vld [vmem:[#allocation9 + $0x18] sm:$0xf]
    %v4199 = vld [vmem:[#allocation9 + $0x1c] sm:$0xf]
    %v4200 = vld [vmem:[#allocation9 + $0x20] sm:$0xf]
    %v4201 = vld [vmem:[#allocation9 + $0x24] sm:$0xf]
    %v4202 = vld [vmem:[#allocation9 + $0x28] sm:$0xf]
    %v4203 = vld [vmem:[#allocation9 + $0x2c] sm:$0xf]
    %v4204 = vld [vmem:[#allocation9 + $0x30] sm:$0xf]
    %v4205 = vld [vmem:[#allocation9 + $0x34] sm:$0xf]
    %v4206 = vld [vmem:[#allocation9 + $0x38] sm:$0xf]
    %v4207 = vld [vmem:[#allocation9 + $0x3c] sm:$0xf]
    %v4208 = vld [vmem:[%s8] sm:$0x1]
    %v4210 = vlaneseq
    %v4211 = vshrl.u32 %v4210, 7
    %v4212 = vsub.s32 0, %v4211
    %v4213 = vrot.slane %v4208, %v4212
    %v4231 = vunpack.c.l.b16 %v4192
    %v4232 = vunpack.c.l.b16 %v4193
    %v4233 = vunpack.c.l.b16 %v4194
    %v4234 = vunpack.c.l.b16 %v4195
    %v4235 = vunpack.c.l.b16 %v4196
    %v4236 = vunpack.c.l.b16 %v4197
    %v4237 = vunpack.c.l.b16 %v4198
    %v4238 = vunpack.c.l.b16 %v4199
    %v4239 = vunpack.c.l.b16 %v4200
    %v4240 = vunpack.c.l.b16 %v4201
    %v4241 = vunpack.c.l.b16 %v4202
    %v4242 = vunpack.c.l.b16 %v4203
    %v4243 = vunpack.c.l.b16 %v4204
    %v4244 = vunpack.c.l.b16 %v4205
    %v4245 = vunpack.c.l.b16 %v4206
    %v4246 = vunpack.c.l.b16 %v4207
    %v4247 = vpack.c.b16 %v4232, %v4231
    %v4248 = vpack.c.b16 %v4234, %v4233
    %v4249 = vpack.c.b16 %v4236, %v4235
    %v4250 = vpack.c.b16 %v4238, %v4237
    %v4251 = vpack.c.b16 %v4240, %v4239
    %v4252 = vpack.c.b16 %v4242, %v4241
    %v4253 = vpack.c.b16 %v4244, %v4243
    %v4254 = vpack.c.b16 %v4246, %v4245
    %4263 = vmatprep.subr.bf16.mxu0 0
    %4264 = vmatpush1.bf16.msra.mxu0 %v4247
    %4265 = vmatprep.subr.bf16.mxu0 0
    %4266 = vmatpush1.bf16.msra.mxu0 %v4248
    %4267 = vmatprep.subr.bf16.mxu0 0
    %4268 = vmatpush1.bf16.msra.mxu0 %v4249
    %4269 = vmatprep.subr.bf16.mxu0 0
    %4270 = vmatpush1.bf16.msra.mxu0 %v4250
    %4271 = vmatprep.subr.bf16.mxu0 0
    %4272 = vmatpush1.bf16.msra.mxu0 %v4251
    %4273 = vmatprep.subr.bf16.mxu0 0
    %4274 = vmatpush1.bf16.msra.mxu0 %v4252
    %4275 = vmatprep.subr.bf16.mxu0 0
    %4276 = vmatpush1.bf16.msra.mxu0 %v4253
    %4277 = vmatprep.subr.bf16.mxu0 0
    %4278 = vmatpush1.bf16.msra.mxu0 %v4254
    %4279 = vmatprep.subr.bf16.mxu0 0
    %4280 = vmatpush1.bf16.msra.mxu0 0
    %4281 = vmatprep.subr.bf16.mxu0 0
    %4282 = vmatpush1.bf16.msra.mxu0 0
    %4283 = vmatprep.subr.bf16.mxu0 0
    %4284 = vmatpush1.bf16.msra.mxu0 0
    %4285 = vmatprep.subr.bf16.mxu0 0
    %4286 = vmatpush1.bf16.msra.mxu0 0
    %4287 = vmatprep.subr.bf16.mxu0 0
    %4288 = vmatpush1.bf16.msra.mxu0 0
    %4289 = vmatprep.subr.bf16.mxu0 0
    %4290 = vmatpush1.bf16.msra.mxu0 0
    %4291 = vmatprep.subr.bf16.mxu0 0
    %4292 = vmatpush1.bf16.msra.mxu0 0
    %4293 = vmatprep.subr.bf16.mxu0 0
    %4294 = vmatpush1.bf16.msra.mxu0 0
    %4295 = vmatprep.mubr.bf16.mxu0 0
    %4296 = vmatmul.mubr.bf16.gmra.mrb[0].mxu0 %v4191
    %v4297 = vpop.f32.mrb[0].mxu0
    %v4298 = vadd.f32 %v4213, %v4297
    %v4299 = vpop.f32.mrb[0].mxu0
    %v4300 = vpop.f32.mrb[0].mxu0
    %v4301 = vadd.f32 %v4213, %v4300
    %v4302 = vpop.f32.mrb[0].mxu0
    %4303 = vdwg.mxu0
    %4304 = vst [vmem:[#allocation11] sm:$0xff] %v4298
    %4305 = vst [vmem:[#allocation11 + $0x8] sm:$0xff] %v4301
    // Predicated region
    $region54: #{tpu_custom_call.1} parent=1 // pred_check
      _
    $region55: #{tpu_custom_call.1} parent=1 // pred_check_branch
      %4307 = sbr.rel (0) target = $region57
    $region56: #{tpu_custom_call.1} parent=1 // pred_region
      %s4309 = ssub.s32 256, 256
      %4310 = vsyncadd [#allocation5], %s4309
      %s4311 = sshll.u32 [#allocation11], 4
      %s4312 = int_to_ptr.vmem [resolvable:$true] %s4311
      %4317 = dma.vmem_to_hbm [thread:$0]  %s4312, 256, %s9, [#allocation5], 128, 128, 8
    $region57: #{tpu_custom_call.1} parent=1 // pred_fallthru
      _
    // Predicated region
    $region58: #{tpu_custom_call.1} parent=1 // pred_check
      _
    $region59: #{tpu_custom_call.1} parent=1 // pred_check_branch
      %4319 = sbr.rel (0) target = $region61
    $region60: #{tpu_custom_call.1} parent=1 // pred_region
      %4320 = dma.done [#allocation5], 256
    $region61: #{tpu_custom_call.1} parent=1 // pred_fallthru
      _
    %4321 = vsyncpa [#allocation4], 1
    %4322 = vsyncpa [#allocation7], 1
    %4323 = vsyncpa [#allocation10], 1
    %4324 = vsyncpa [#allocation5], 1

</llo_original>
